<compile_context>
chip_gen: v6e
topology: v6e:2x2x1
jax: 0.10.0
libtpu: 0.0.40
codegen_flags: <defaults>
</compile_context>

<pallas_src>
import functools

import jax
import jax.numpy as jnp
import numpy as np
from jax import lax
from jax.experimental import pallas as pl
from jax.experimental.pallas import tpu as pltpu


def _fused_mha_kernel(xt_full_ref, xt_q_ref, mask_ref,
                      wq_ref, bq_ref, wk_ref, bk_ref, wv_ref, bv_ref,
                      wo_ref, bo_ref, gamma_ref, beta_ref,
                      out_ref,
                      k_sc, v_sc, q_sc, ctx_sc,
                      *, num_heads, dim_out, seq_len, eps,
                      matmul_dtype, approx_recip, unroll_heads):
    qt = pl.program_id(1)

    # ---- once per batch (q-tile 0): K^T / V^T for the whole sequence into
    #      VMEM scratch; one lane-dense matmul each (contraction K = D_in). ----
    @pl.when(qt == 0)
    def _project_kv():
        xt = xt_full_ref[0].astype(matmul_dtype)                    # (D_in, S)
        k_t = jnp.dot(wk_ref[...], xt,
                      preferred_element_type=jnp.float32) + bk_ref[...]
        v_t = jnp.dot(wv_ref[...], xt,
                      preferred_element_type=jnp.float32) + bv_ref[...]
        k_sc[...] = k_t.astype(k_sc.dtype)                          # (HD, S)
        v_sc[...] = v_t.astype(v_sc.dtype)                          # (HD, S)

    # ---- per q tile: Q^T, with the 1/sqrt(seq_len) scale folded in.
    #      (PyTorch uses query.size(1)**0.5 == sqrt of the SEQUENCE length.) ----
    xq = xt_q_ref[0].astype(matmul_dtype)                           # (D_in, TQ)
    q_t = jnp.dot(wq_ref[...], xq,
                  preferred_element_type=jnp.float32) + bq_ref[...]
    q_sc[...] = (q_t * jnp.float32(1.0 / float(seq_len) ** 0.5)
                 ).astype(q_sc.dtype)                               # (HD, TQ)

    # ---- attention, one head at a time (bounded live ranges).  All per-head
    #      slices are sublane-dim slices; the score/ctx dots use TN/NT forms
    #      so no (S, .)-sized transposes are materialized. ----
    def _one_head(off):
        q_ht = q_sc[pl.ds(off, dim_out), :]                         # (D_out, TQ)
        k_ht = k_sc[pl.ds(off, dim_out), :]                         # (D_out, S)
        v_ht = v_sc[pl.ds(off, dim_out), :]                         # (D_out, S)

        # scores = q_h @ k_h^T  ==  q_ht^T @ k_ht  (contract the head dim)
        scores = lax.dot_general(
            q_ht, k_ht, dimension_numbers=(((0,), (0,)), ((), ())),
            preferred_element_type=jnp.float32)                     # (TQ, S)
        masked = mask_ref[0] != 0                                   # (TQ, S)
        scores = jnp.where(masked, jnp.float32(-1e9), scores)

        # softmax in f32
        m = jnp.max(scores, axis=-1, keepdims=True)
        e = jnp.exp(scores - m)
        s = jnp.sum(e, axis=-1, keepdims=True)
        if approx_recip:
            attn = e * pl.reciprocal(s, approx=True)                # EUP slot
        else:
            attn = e / s                                            # exact (f32 path)

        # ctx_h^T = v_h^T @ attn^T   (contract the kv dim; K = S, lane-dense)
        ctx_ht = lax.dot_general(
            v_ht, attn.astype(matmul_dtype),
            dimension_numbers=(((1,), (1,)), ((), ())),
            preferred_element_type=jnp.float32)                     # (D_out, TQ)
        ctx_sc[pl.ds(off, dim_out), :] = ctx_ht.astype(ctx_sc.dtype)

    if unroll_heads:
        # Fallback path only (static offsets; may extend live ranges).
        for h in range(num_heads):
            _one_head(h * dim_out)
    else:
        @pl.loop(0, num_heads)
        def _head(h):
            _one_head(pl.multiple_of(h * dim_out, dim_out))

    # ---- ONE output projection over ALL heads (contraction K = H*D_out),
    #      then bias + LayerNorm (f32 statistics, biased variance, eps=1e-5).
    #      concat_h(ctx_h) @ W_out  ==  ctx_sc^T @ W_out. ----
    y = lax.dot_general(
        ctx_sc[...].astype(matmul_dtype), wo_ref[...],
        dimension_numbers=(((0,), (0,)), ((), ())),
        preferred_element_type=jnp.float32)                         # (TQ, D_in)
    y = y + bo_ref[...]
    mean = jnp.mean(y, axis=-1, keepdims=True)
    var = jnp.mean((y - mean) ** 2, axis=-1, keepdims=True)
    out_ref[0] = ((y - mean) * lax.rsqrt(var + eps)
                  * gamma_ref[...] + beta_ref[...]).astype(out_ref.dtype)


def multi_head_attention(x, attention_mask, params, *,
                         matmul_dtype=jnp.bfloat16, q_tile=None):
    """x: (B,S,D_in) f32; attention_mask: (B,S,S) bool/int (nonzero = masked)."""
    B, S, D_in = x.shape
    H, _, D_out = params["wq"].shape
    HD = H * D_out

    if q_tile is None:
        q_tile = next((t for t in (512, 256, 128) if S % t == 0), S)
    assert S % q_tile == 0, "seq_len must be divisible by q_tile"
    n_qt = S // q_tile

    # Head-packed weights, transposed: row block h of w*_t is W*[h]^T so the
    # packed head axis lands on the SUBLANE dim inside the kernel.
    wq_t = jnp.transpose(params["wq"], (0, 2, 1)).reshape(HD, D_in)
    wk_t = jnp.transpose(params["wk"], (0, 2, 1)).reshape(HD, D_in)
    wv_t = jnp.transpose(params["wv"], (0, 2, 1)).reshape(HD, D_in)
    bq_t = params["bq"].reshape(HD, 1)
    bk_t = params["bk"].reshape(HD, 1)
    bv_t = params["bv"].reshape(HD, 1)
    w_out = params["w_out"]                        # (HD, D_in), head-major rows
    b_out = params["b_out"].reshape(1, D_in)
    gamma = params["gamma"].reshape(1, D_in)
    beta = params["beta"].reshape(1, D_in)

    use_bf16 = jnp.dtype(matmul_dtype) != jnp.dtype(jnp.float32)
    if use_bf16:
        # Weights are reused by every grid step -> cast once in the wrapper.
        wq_t, wk_t, wv_t, w_out = (a.astype(matmul_dtype)
                                   for a in (wq_t, wk_t, wv_t, w_out))
        # x is deliberately NOT cast here (it would add a full extra HBM
        # pass); it is cast after the VMEM load inside the kernel.

    # x^T (B, D_in, S): keeps seq on lanes so per-head slicing stays on
    # sublanes.  One cheap layout pass over x (x is tiny vs. the S^2 mask).
    x_t = jnp.transpose(x, (0, 2, 1))
    mask_i8 = attention_mask.astype(jnp.int8)

    # Explicit VMEM budget (inputs are double-buffered unless Buffered(1)).
    mm = jnp.dtype(matmul_dtype).itemsize
    est = 2 * (4 * HD * D_in * mm + (3 * HD + 3 * D_in) * 4)        # weights
    est += 2 * D_in * (S + q_tile) * 4                              # x^T blocks
    est += 2 * q_tile * S + 2 * q_tile * D_in * 4                   # mask + out
    est += (2 * S + q_tile) * HD * mm + q_tile * HD * 4             # scratch
    est += 6 * q_tile * S * 4 + 4 * HD * max(S, D_in) * 4           # live temps
    vmem_limit = int(min(max(est * 3 // 2, 32 * 2 ** 20), 64 * 2 ** 20))

    def build(single_buffer_weights, unroll_heads):
        kernel = functools.partial(
            _fused_mha_kernel, num_heads=H, dim_out=D_out, seq_len=S, eps=1e-5,
            matmul_dtype=matmul_dtype, approx_recip=use_bf16,
            unroll_heads=unroll_heads)

        def w_spec(shape):
            if single_buffer_weights:
                # Constant-index blocks: a second pipeline buffer is wasted VMEM.
                return pl.BlockSpec(shape, lambda b, t: (0, 0),
                                    pipeline_mode=pl.Buffered(1))
            return pl.BlockSpec(shape, lambda b, t: (0, 0))

        return pl.pallas_call(
            kernel,
            out_shape=jax.ShapeDtypeStruct((B, S, D_in), jnp.float32),
            grid=(B, n_qt),
            in_specs=[
                pl.BlockSpec((1, D_in, S), lambda b, t: (b, 0, 0)),       # x^T full (K/V)
                pl.BlockSpec((1, D_in, q_tile), lambda b, t: (b, 0, t)),  # x^T q tile
                pl.BlockSpec((1, q_tile, S), lambda b, t: (b, t, 0)),     # mask int8
                w_spec((HD, D_in)),   # Wq^T packed
                w_spec((HD, 1)),      # bq
                w_spec((HD, D_in)),   # Wk^T packed
                w_spec((HD, 1)),      # bk
                w_spec((HD, D_in)),   # Wv^T packed
                w_spec((HD, 1)),      # bv
                w_spec((HD, D_in)),   # W_out (head-major rows)
                w_spec((1, D_in)),    # b_out
                w_spec((1, D_in)),    # gamma
                w_spec((1, D_in)),    # beta
            ],
            out_specs=pl.BlockSpec((1, q_tile, D_in), lambda b, t: (b, t, 0)),
            scratch_shapes=[
                pltpu.VMEM((HD, S), matmul_dtype),       # K^T cache (per batch)
                pltpu.VMEM((HD, S), matmul_dtype),       # V^T cache (per batch)
                pltpu.VMEM((HD, q_tile), matmul_dtype),  # Q^T tile
                pltpu.VMEM((HD, q_tile), jnp.float32),   # ctx^T (all heads)
            ],
            compiler_params=pltpu.CompilerParams(
                # batch axis megacore-parallel; q-tile axis sequential
                # ("arbitrary") because the K/V scratch filled at tile 0 is
                # reused by the later tiles of the same batch.
                dimension_semantics=("parallel", "arbitrary"),
                vmem_limit_bytes=vmem_limit),
        )(x_t, x_t, mask_i8, wq_t, bq_t, wk_t, bk_t, wv_t, bv_t,
          w_out, b_out, gamma, beta)

    # Graceful degradation if this JAX/Mosaic build rejects Buffered(1) or the
    # dynamic sublane head slices; the last variant mirrors the previously
    # validated structure (static head offsets, default buffering).
    last_err = None
    for single_buffer_weights, unroll_heads in ((True, False),
                                                (False, False),
                                                (False, True)):
        try:
            return build(single_buffer_weights, unroll_heads)
        except Exception as err:  # fall through to the next, more conservative variant
            last_err = err
    raise last_err


def _reference(x, attention_mask, params):
    """Plain-JAX reference of the PyTorch forward (default path)."""
    B, S, D_in = x.shape
    H, _, D_out = params["wq"].shape
    scale = float(S) ** 0.5
    heads = []
    for h in range(H):
        q = x @ params["wq"][h] + params["bq"][h]
        k = x @ params["wk"][h] + params["bk"][h]
        v = x @ params["wv"][h] + params["bv"][h]
        scores = jnp.einsum("bsd,btd->bst", q, k) / scale
        scores = jnp.where(attention_mask, -1e9, scores)
        attn = jax.nn.softmax(scores, axis=-1)
        heads.append(jnp.einsum("bst,btd->bsd", attn, v))
    cat = jnp.concatenate(heads, axis=-1)
    y = cat @ params["w_out"] + params["b_out"]
    mean = jnp.mean(y, axis=-1, keepdims=True)
    var = jnp.mean((y - mean) ** 2, axis=-1, keepdims=True)
    return (y - mean) / jnp.sqrt(var + 1e-5) * params["gamma"] + params["beta"]


def _init_params(key, num_heads, dim_inp, dim_out):
    ks = jax.random.split(key, 8)

    def lin(k, fan_in, shape):
        bound = 1.0 / float(fan_in) ** 0.5
        return jax.random.uniform(k, shape, jnp.float32, -bound, bound)

    H, Din, Dout = num_heads, dim_inp, dim_out
    return {
        "wq": lin(ks[0], Din, (H, Din, Dout)),
        "bq": lin(ks[1], Din, (H, 1, Dout)),
        "wk": lin(ks[2], Din, (H, Din, Dout)),
        "bk": lin(ks[3], Din, (H, 1, Dout)),
        "wv": lin(ks[4], Din, (H, Din, Dout)),
        "bv": lin(ks[5], Din, (H, 1, Dout)),
        "w_out": lin(ks[6], H * Dout, (H * Dout, Din)),
        "b_out": lin(ks[7], H * Dout, (1, Din)),
        "gamma": jnp.ones((1, Din), jnp.float32),
        "beta": jnp.zeros((1, Din), jnp.float32),
    }


if __name__ == "__main__":
    # Config 1: toy shapes (full-extent blocks, single q tile).
    # Config 2: S=256 with an explicit q_tile=128 -> two q tiles, exercising
    # the per-batch K/V VMEM cache and the tiled mask/out BlockSpecs.
    configs = [
        dict(B=2, S=8, D_IN=32, D_OUT=16, H=4, q_tile=None),
        dict(B=2, S=256, D_IN=32, D_OUT=16, H=4, q_tile=128),
    ]

    key = jax.random.PRNGKey(0)
    for cfg in configs:
        B, S, D_IN, D_OUT, H = cfg["B"], cfg["S"], cfg["D_IN"], cfg["D_OUT"], cfg["H"]
        key, k_x, k_m, k_p = jax.random.split(key, 4)

        x = jax.random.normal(k_x, (B, S, D_IN), jnp.float32)
        # boolean attention mask, True = position is masked out (filled with -1e9)
        attention_mask = jax.random.bernoulli(k_m, 0.25, (B, S, S))
        params = _init_params(k_p, H, D_IN, D_OUT)

        ref = jax.block_until_ready(_reference(x, attention_mask, params))

        # f32 matmul path: tight check against the f32 reference.
        out_f32 = jax.block_until_ready(
            multi_head_attention(x, attention_mask, params,
                                 matmul_dtype=jnp.float32, q_tile=cfg["q_tile"]))
        np.testing.assert_allclose(np.asarray(out_f32), np.asarray(ref),
                                   rtol=2e-4, atol=2e-4)

        # Default path: bf16 matmul inputs (MXU-native), f32 accumulation.
        out_bf16 = jax.block_until_ready(
            multi_head_attention(x, attention_mask, params,
                                 q_tile=cfg["q_tile"]))
        np.testing.assert_allclose(np.asarray(out_bf16), np.asarray(ref),
                                   rtol=5e-2, atol=5e-2)

    print("KERNEL_OK")
</pallas_src>

<mosaic_0001>
module attributes {stable_mosaic.version = 11 : i64} {
  func.func @_fused_mha_kernel(%arg0: i32, %arg1: i32, %arg2: memref<1x32x8xf32, #tpu.memory_space<vmem>>, %arg3: memref<1x32x8xf32, #tpu.memory_space<vmem>>, %arg4: memref<1x8x8xi8, #tpu.memory_space<vmem>>, %arg5: memref<64x32xf32, #tpu.memory_space<vmem>>, %arg6: memref<64x1xf32, #tpu.memory_space<vmem>>, %arg7: memref<64x32xf32, #tpu.memory_space<vmem>>, %arg8: memref<64x1xf32, #tpu.memory_space<vmem>>, %arg9: memref<64x32xf32, #tpu.memory_space<vmem>>, %arg10: memref<64x1xf32, #tpu.memory_space<vmem>>, %arg11: memref<64x32xf32, #tpu.memory_space<vmem>>, %arg12: memref<1x32xf32, #tpu.memory_space<vmem>>, %arg13: memref<1x32xf32, #tpu.memory_space<vmem>>, %arg14: memref<1x32xf32, #tpu.memory_space<vmem>>, %arg15: memref<1x8x32xf32, #tpu.memory_space<vmem>>, %arg16: memref<64x8xf32, #tpu.memory_space<vmem>>, %arg17: memref<64x8xf32, #tpu.memory_space<vmem>>, %arg18: memref<64x8xf32, #tpu.memory_space<vmem>>, %arg19: memref<64x8xf32, #tpu.memory_space<vmem>>) attributes {dimension_semantics = [#tpu.dimension_semantics<parallel>, #tpu.dimension_semantics<arbitrary>], iteration_bounds = array<i64: 2, 1>, scalar_prefetch = 0 : i64, scratch_operands = 4 : i64, tpu.core_type = #tpu.core_type<tc>, window_params = [{transform_indices = @transform_0, window_bounds = array<i64: 1, 32, 8>}, {transform_indices = @transform_1, window_bounds = array<i64: 1, 32, 8>}, {transform_indices = @transform_2, window_bounds = array<i64: 1, 8, 8>}, {pipeline_mode = #tpu.pipeline_mode<synchronous>, transform_indices = @transform_3, window_bounds = array<i64: 64, 32>}, {pipeline_mode = #tpu.pipeline_mode<synchronous>, transform_indices = @transform_4, window_bounds = array<i64: 64, 1>}, {pipeline_mode = #tpu.pipeline_mode<synchronous>, transform_indices = @transform_5, window_bounds = array<i64: 64, 32>}, {pipeline_mode = #tpu.pipeline_mode<synchronous>, transform_indices = @transform_6, window_bounds = array<i64: 64, 1>}, {pipeline_mode = #tpu.pipeline_mode<synchronous>, transform_indices = @transform_7, window_bounds = array<i64: 64, 32>}, {pipeline_mode = #tpu.pipeline_mode<synchronous>, transform_indices = @transform_8, window_bounds = array<i64: 64, 1>}, {pipeline_mode = #tpu.pipeline_mode<synchronous>, transform_indices = @transform_9, window_bounds = array<i64: 64, 32>}, {pipeline_mode = #tpu.pipeline_mode<synchronous>, transform_indices = @transform_10, window_bounds = array<i64: 1, 32>}, {pipeline_mode = #tpu.pipeline_mode<synchronous>, transform_indices = @transform_11, window_bounds = array<i64: 1, 32>}, {pipeline_mode = #tpu.pipeline_mode<synchronous>, transform_indices = @transform_12, window_bounds = array<i64: 1, 32>}, {transform_indices = @transform_13, window_bounds = array<i64: 1, 8, 32>}]} {
    %c0_i32 = arith.constant 0 : i32
    %0 = arith.cmpi eq, %arg1, %c0_i32 : i32
    %1 = arith.extui %0 : i1 to i32
    %c0_i32_0 = arith.constant 0 : i32
    %2 = arith.cmpi ne, %1, %c0_i32_0 : i32
    scf.if %2 {
      %c0_31 = arith.constant 0 : index
      %c0_32 = arith.constant 0 : index
      %c0_33 = arith.constant 0 : index
      %47 = vector.load %arg2[%c0_31, %c0_32, %c0_33] : memref<1x32x8xf32, #tpu.memory_space<vmem>>, vector<1x32x8xf32>
      %48 = vector.shape_cast %47 : vector<1x32x8xf32> to vector<32x8xf32>
      %c0_34 = arith.constant 0 : index
      %c0_35 = arith.constant 0 : index
      %49 = vector.load %arg7[%c0_34, %c0_35] : memref<64x32xf32, #tpu.memory_space<vmem>>, vector<64x32xf32>
      %cst_36 = arith.constant dense<0.000000e+00> : vector<64x8xf32>
      %50 = tpu.matmul %49, %48, %cst_36 {dimension_numbers = #tpu.dot_dimension_numbers<[1], [0], [0], [1], [0, 0, 1, 1], [], []>} : vector<64x32xf32>, vector<32x8xf32>, vector<64x8xf32> -> vector<64x8xf32>
      %c0_37 = arith.constant 0 : index
      %c0_38 = arith.constant 0 : index
      %51 = vector.load %arg8[%c0_37, %c0_38] : memref<64x1xf32, #tpu.memory_space<vmem>>, vector<64x1xf32>
      %52 = vector.broadcast %51 : vector<64x1xf32> to vector<64x8xf32>
      %53 = arith.addf %50, %52 : vector<64x8xf32>
      %c0_39 = arith.constant 0 : index
      %c0_40 = arith.constant 0 : index
      %54 = vector.load %arg9[%c0_39, %c0_40] : memref<64x32xf32, #tpu.memory_space<vmem>>, vector<64x32xf32>
      %cst_41 = arith.constant dense<0.000000e+00> : vector<64x8xf32>
      %55 = tpu.matmul %54, %48, %cst_41 {dimension_numbers = #tpu.dot_dimension_numbers<[1], [0], [0], [1], [0, 0, 1, 1], [], []>} : vector<64x32xf32>, vector<32x8xf32>, vector<64x8xf32> -> vector<64x8xf32>
      %c0_42 = arith.constant 0 : index
      %c0_43 = arith.constant 0 : index
      %56 = vector.load %arg10[%c0_42, %c0_43] : memref<64x1xf32, #tpu.memory_space<vmem>>, vector<64x1xf32>
      %57 = vector.broadcast %56 : vector<64x1xf32> to vector<64x8xf32>
      %58 = arith.addf %55, %57 : vector<64x8xf32>
      %c0_44 = arith.constant 0 : index
      %c0_45 = arith.constant 0 : index
      %59 = vector.load %arg16[%c0_44, %c0_45] : memref<64x8xf32, #tpu.memory_space<vmem>>, vector<64x8xf32>
      tpu.vector_store %arg16[%c0_44, %c0_45], %53 {strides = array<i32>} : memref<64x8xf32, #tpu.memory_space<vmem>>, vector<64x8xf32>,
      %c0_46 = arith.constant 0 : index
      %c0_47 = arith.constant 0 : index
      %60 = vector.load %arg17[%c0_46, %c0_47] : memref<64x8xf32, #tpu.memory_space<vmem>>, vector<64x8xf32>
      tpu.vector_store %arg17[%c0_46, %c0_47], %58 {strides = array<i32>} : memref<64x8xf32, #tpu.memory_space<vmem>>, vector<64x8xf32>,
    } else {
    }
    %c0 = arith.constant 0 : index
    %c0_1 = arith.constant 0 : index
    %c0_2 = arith.constant 0 : index
    %3 = vector.load %arg3[%c0, %c0_1, %c0_2] : memref<1x32x8xf32, #tpu.memory_space<vmem>>, vector<1x32x8xf32>
    %4 = vector.shape_cast %3 : vector<1x32x8xf32> to vector<32x8xf32>
    %c0_3 = arith.constant 0 : index
    %c0_4 = arith.constant 0 : index
    %5 = vector.load %arg5[%c0_3, %c0_4] : memref<64x32xf32, #tpu.memory_space<vmem>>, vector<64x32xf32>
    %cst = arith.constant dense<0.000000e+00> : vector<64x8xf32>
    %6 = tpu.matmul %5, %4, %cst {dimension_numbers = #tpu.dot_dimension_numbers<[1], [0], [0], [1], [0, 0, 1, 1], [], []>} : vector<64x32xf32>, vector<32x8xf32>, vector<64x8xf32> -> vector<64x8xf32>
    %c0_5 = arith.constant 0 : index
    %c0_6 = arith.constant 0 : index
    %7 = vector.load %arg6[%c0_5, %c0_6] : memref<64x1xf32, #tpu.memory_space<vmem>>, vector<64x1xf32>
    %8 = vector.broadcast %7 : vector<64x1xf32> to vector<64x8xf32>
    %9 = arith.addf %6, %8 : vector<64x8xf32>
    %cst_7 = arith.constant 0.353553385 : f32
    %10 = vector.broadcast %cst_7 : f32 to vector<64x8xf32>
    %11 = arith.mulf %9, %10 : vector<64x8xf32>
    %c0_8 = arith.constant 0 : index
    %c0_9 = arith.constant 0 : index
    %12 = vector.load %arg18[%c0_8, %c0_9] : memref<64x8xf32, #tpu.memory_space<vmem>>, vector<64x8xf32>
    tpu.vector_store %arg18[%c0_8, %c0_9], %11 {strides = array<i32>} : memref<64x8xf32, #tpu.memory_space<vmem>>, vector<64x8xf32>,
    %c0_i32_10 = arith.constant 0 : i32
    %c4_i32 = arith.constant 4 : i32
    %13 = arith.addi %c0_i32_10, %c4_i32 : i32
    %c1_i32 = arith.constant 1 : i32
    scf.for %arg20 = %c0_i32_10 to %13 step %c1_i32  : i32 {
      %c1_i32_31 = arith.constant 1 : i32
      %47 = arith.muli %arg20, %c1_i32_31 : i32
      %c0_i32_32 = arith.constant 0 : i32
      %48 = arith.addi %c0_i32_32, %47 : i32
      %c16_i32 = arith.constant 16 : i32
      %49 = arith.muli %48, %c16_i32 : i32
      %50 = tpu.assume_multiple %49, 16 : i32
      %51 = arith.index_cast %50 : i32 to index
      %c0_33 = arith.constant 0 : index
      %52 = vector.load %arg18[%51, %c0_33] : memref<64x8xf32, #tpu.memory_space<vmem>>, vector<16x8xf32>
      %53 = arith.index_cast %50 : i32 to index
      %c0_34 = arith.constant 0 : index
      %54 = vector.load %arg16[%53, %c0_34] : memref<64x8xf32, #tpu.memory_space<vmem>>, vector<16x8xf32>
      %55 = arith.index_cast %50 : i32 to index
      %c0_35 = arith.constant 0 : index
      %56 = vector.load %arg17[%55, %c0_35] : memref<64x8xf32, #tpu.memory_space<vmem>>, vector<16x8xf32>
      %cst_36 = arith.constant dense<0.000000e+00> : vector<8x8xf32>
      %57 = tpu.matmul %52, %54, %cst_36 {dimension_numbers = #tpu.dot_dimension_numbers<[0], [0], [1], [1], [0, 1, 1, 1], [], []>} : vector<16x8xf32>, vector<16x8xf32>, vector<8x8xf32> -> vector<8x8xf32>
      %c0_37 = arith.constant 0 : index
      %c0_38 = arith.constant 0 : index
      %c0_39 = arith.constant 0 : index
      %58 = vector.load %arg4[%c0_37, %c0_38, %c0_39] : memref<1x8x8xi8, #tpu.memory_space<vmem>>, vector<1x8x8xi8>
      %59 = vector.shape_cast %58 : vector<1x8x8xi8> to vector<8x8xi8>
      %c0_i8 = arith.constant 0 : i8
      %60 = vector.broadcast %c0_i8 : i8 to vector<8x8xi8>
      %61 = arith.cmpi ne, %59, %60 : vector<8x8xi8>
      %cst_40 = arith.constant -1.000000e+09 : f32
      %62 = vector.broadcast %cst_40 : f32 to vector<8x8xf32>
      %63 = arith.select %61, %62, %57 : vector<8x8xi1>, vector<8x8xf32>
      %cst_41 = arith.constant dense<0xFF800000> : vector<8xf32>
      %64 = vector.multi_reduction <maximumf>, %63, %cst_41 [1] : vector<8x8xf32> to vector<8xf32>
      %65 = vector.shape_cast %64 : vector<8xf32> to vector<8x1xf32>
      %66 = vector.broadcast %65 : vector<8x1xf32> to vector<8x8xf32>
      %67 = arith.subf %63, %66 : vector<8x8xf32>
      %68 = math.exp %67 : vector<8x8xf32>
      %cst_42 = arith.constant dense<0.000000e+00> : vector<8xf32>
      %69 = vector.multi_reduction <add>, %68, %cst_42 [1] : vector<8x8xf32> to vector<8xf32>
      %70 = vector.shape_cast %69 : vector<8xf32> to vector<8x1xf32>
      %71 = vector.broadcast %70 : vector<8x1xf32> to vector<8x8xf32>
      %72 = arith.divf %68, %71 : vector<8x8xf32>
      %cst_43 = arith.constant dense<0.000000e+00> : vector<16x8xf32>
      %73 = tpu.matmul %56, %72, %cst_43 {dimension_numbers = #tpu.dot_dimension_numbers<[1], [1], [0], [0], [0, 0, 1, 0], [], []>} : vector<16x8xf32>, vector<8x8xf32>, vector<16x8xf32> -> vector<16x8xf32>
      %74 = arith.index_cast %50 : i32 to index
      %c0_44 = arith.constant 0 : index
      %75 = vector.load %arg19[%74, %c0_44] : memref<64x8xf32, #tpu.memory_space<vmem>>, vector<16x8xf32>
      tpu.vector_store %arg19[%74, %c0_44], %73 {strides = array<i32>} : memref<64x8xf32, #tpu.memory_space<vmem>>, vector<16x8xf32>,
    }
    %c4_i32_11 = arith.constant 4 : i32
    %c0_12 = arith.constant 0 : index
    %c0_13 = arith.constant 0 : index
    %14 = vector.load %arg19[%c0_12, %c0_13] : memref<64x8xf32, #tpu.memory_space<vmem>>, vector<64x8xf32>
    %c0_14 = arith.constant 0 : index
    %c0_15 = arith.constant 0 : index
    %15 = vector.load %arg11[%c0_14, %c0_15] : memref<64x32xf32, #tpu.memory_space<vmem>>, vector<64x32xf32>
    %cst_16 = arith.constant dense<0.000000e+00> : vector<8x32xf32>
    %16 = tpu.matmul %14, %15, %cst_16 {dimension_numbers = #tpu.dot_dimension_numbers<[0], [0], [1], [1], [0, 1, 1, 1], [], []>} : vector<64x8xf32>, vector<64x32xf32>, vector<8x32xf32> -> vector<8x32xf32>
    %c0_17 = arith.constant 0 : index
    %c0_18 = arith.constant 0 : index
    %17 = vector.load %arg12[%c0_17, %c0_18] : memref<1x32xf32, #tpu.memory_space<vmem>>, vector<1x32xf32>
    %18 = vector.broadcast %17 : vector<1x32xf32> to vector<8x32xf32>
    %19 = arith.addf %16, %18 : vector<8x32xf32>
    %cst_19 = arith.constant dense<0.000000e+00> : vector<8xf32>
    %20 = vector.multi_reduction <add>, %19, %cst_19 [1] : vector<8x32xf32> to vector<8xf32>
    %21 = vector.shape_cast %20 : vector<8xf32> to vector<8x1xf32>
    %cst_20 = arith.constant 3.200000e+01 : f32
    %22 = vector.broadcast %cst_20 : f32 to vector<8x1xf32>
    %23 = arith.divf %21, %22 : vector<8x1xf32>
    %24 = vector.broadcast %23 : vector<8x1xf32> to vector<8x32xf32>
    %25 = arith.subf %19, %24 : vector<8x32xf32>
    %26 = arith.mulf %25, %25 : vector<8x32xf32>
    %cst_21 = arith.constant dense<0.000000e+00> : vector<8xf32>
    %27 = vector.multi_reduction <add>, %26, %cst_21 [1] : vector<8x32xf32> to vector<8xf32>
    %28 = vector.shape_cast %27 : vector<8xf32> to vector<8x1xf32>
    %cst_22 = arith.constant 3.200000e+01 : f32
    %29 = vector.broadcast %cst_22 : f32 to vector<8x1xf32>
    %30 = arith.divf %28, %29 : vector<8x1xf32>
    %31 = vector.broadcast %23 : vector<8x1xf32> to vector<8x32xf32>
    %32 = arith.subf %19, %31 : vector<8x32xf32>
    %cst_23 = arith.constant 9.99999974E-6 : f32
    %33 = vector.broadcast %cst_23 : f32 to vector<8x1xf32>
    %34 = arith.addf %30, %33 : vector<8x1xf32>
    %35 = math.rsqrt %34 : vector<8x1xf32>
    %36 = vector.broadcast %35 : vector<8x1xf32> to vector<8x32xf32>
    %37 = arith.mulf %32, %36 : vector<8x32xf32>
    %c0_24 = arith.constant 0 : index
    %c0_25 = arith.constant 0 : index
    %38 = vector.load %arg13[%c0_24, %c0_25] : memref<1x32xf32, #tpu.memory_space<vmem>>, vector<1x32xf32>
    %39 = vector.broadcast %38 : vector<1x32xf32> to vector<8x32xf32>
    %40 = arith.mulf %37, %39 : vector<8x32xf32>
    %c0_26 = arith.constant 0 : index
    %c0_27 = arith.constant 0 : index
    %41 = vector.load %arg14[%c0_26, %c0_27] : memref<1x32xf32, #tpu.memory_space<vmem>>, vector<1x32xf32>
    %42 = vector.broadcast %41 : vector<1x32xf32> to vector<8x32xf32>
    %43 = arith.addf %40, %42 : vector<8x32xf32>
    %c0_28 = arith.constant 0 : index
    %c0_29 = arith.constant 0 : index
    %c0_30 = arith.constant 0 : index
    %44 = vector.load %arg15[%c0_28, %c0_29, %c0_30] : memref<1x8x32xf32, #tpu.memory_space<vmem>>, vector<1x8x32xf32>
    %45 = vector.shape_cast %44 : vector<1x8x32xf32> to vector<8x32xf32>
    %46 = vector.shape_cast %43 : vector<8x32xf32> to vector<1x8x32xf32>
    tpu.vector_store %arg15[%c0_28, %c0_29, %c0_30], %46 {strides = array<i32>} : memref<1x8x32xf32, #tpu.memory_space<vmem>>, vector<1x8x32xf32>,
    return
  }
  func.func @transform_0(%arg0: i32, %arg1: i32) -> (i32, i32, i32) {
    %c0_i32 = arith.constant 0 : i32
    %c0_i32_0 = arith.constant 0 : i32
    %c0_i32_1 = arith.constant 0 : i32
    return %arg0, %c0_i32, %c0_i32_0 : i32, i32, i32
  }
  func.func @transform_1(%arg0: i32, %arg1: i32) -> (i32, i32, i32) {
    %c0_i32 = arith.constant 0 : i32
    %c0_i32_0 = arith.constant 0 : i32
    return %arg0, %c0_i32, %arg1 : i32, i32, i32
  }
  func.func @transform_2(%arg0: i32, %arg1: i32) -> (i32, i32, i32) {
    %c0_i32 = arith.constant 0 : i32
    %c0_i32_0 = arith.constant 0 : i32
    return %arg0, %arg1, %c0_i32 : i32, i32, i32
  }
  func.func @transform_3(%arg0: i32, %arg1: i32) -> (i32, i32) {
    %c0_i32 = arith.constant 0 : i32
    %c0_i32_0 = arith.constant 0 : i32
    %c0_i32_1 = arith.constant 0 : i32
    return %c0_i32, %c0_i32_0 : i32, i32
  }
  func.func @transform_4(%arg0: i32, %arg1: i32) -> (i32, i32) {
    %c0_i32 = arith.constant 0 : i32
    %c0_i32_0 = arith.constant 0 : i32
    %c0_i32_1 = arith.constant 0 : i32
    return %c0_i32, %c0_i32_0 : i32, i32
  }
  func.func @transform_5(%arg0: i32, %arg1: i32) -> (i32, i32) {
    %c0_i32 = arith.constant 0 : i32
    %c0_i32_0 = arith.constant 0 : i32
    %c0_i32_1 = arith.constant 0 : i32
    return %c0_i32, %c0_i32_0 : i32, i32
  }
  func.func @transform_6(%arg0: i32, %arg1: i32) -> (i32, i32) {
    %c0_i32 = arith.constant 0 : i32
    %c0_i32_0 = arith.constant 0 : i32
    %c0_i32_1 = arith.constant 0 : i32
    return %c0_i32, %c0_i32_0 : i32, i32
  }
  func.func @transform_7(%arg0: i32, %arg1: i32) -> (i32, i32) {
    %c0_i32 = arith.constant 0 : i32
    %c0_i32_0 = arith.constant 0 : i32
    %c0_i32_1 = arith.constant 0 : i32
    return %c0_i32, %c0_i32_0 : i32, i32
  }
  func.func @transform_8(%arg0: i32, %arg1: i32) -> (i32, i32) {
    %c0_i32 = arith.constant 0 : i32
    %c0_i32_0 = arith.constant 0 : i32
    %c0_i32_1 = arith.constant 0 : i32
    return %c0_i32, %c0_i32_0 : i32, i32
  }
  func.func @transform_9(%arg0: i32, %arg1: i32) -> (i32, i32) {
    %c0_i32 = arith.constant 0 : i32
    %c0_i32_0 = arith.constant 0 : i32
    %c0_i32_1 = arith.constant 0 : i32
    return %c0_i32, %c0_i32_0 : i32, i32
  }
  func.func @transform_10(%arg0: i32, %arg1: i32) -> (i32, i32) {
    %c0_i32 = arith.constant 0 : i32
    %c0_i32_0 = arith.constant 0 : i32
    %c0_i32_1 = arith.constant 0 : i32
    return %c0_i32, %c0_i32_0 : i32, i32
  }
  func.func @transform_11(%arg0: i32, %arg1: i32) -> (i32, i32) {
    %c0_i32 = arith.constant 0 : i32
    %c0_i32_0 = arith.constant 0 : i32
    %c0_i32_1 = arith.constant 0 : i32
    return %c0_i32, %c0_i32_0 : i32, i32
  }
  func.func @transform_12(%arg0: i32, %arg1: i32) -> (i32, i32) {
    %c0_i32 = arith.constant 0 : i32
    %c0_i32_0 = arith.constant 0 : i32
    %c0_i32_1 = arith.constant 0 : i32
    return %c0_i32, %c0_i32_0 : i32, i32
  }
  func.func @transform_13(%arg0: i32, %arg1: i32) -> (i32, i32, i32) {
    %c0_i32 = arith.constant 0 : i32
    %c0_i32_0 = arith.constant 0 : i32
    return %arg0, %arg1, %c0_i32 : i32, i32, i32
  }
}

module attributes {stable_mosaic.version = 11 : i64} {
  func.func @_fused_mha_kernel(%arg0: i32, %arg1: i32, %arg2: memref<1x32x8xf32, #tpu.memory_space<vmem>>, %arg3: memref<1x32x8xf32, #tpu.memory_space<vmem>>, %arg4: memref<1x8x8xi8, #tpu.memory_space<vmem>>, %arg5: memref<64x32xf32, #tpu.memory_space<vmem>>, %arg6: memref<64x1xf32, #tpu.memory_space<vmem>>, %arg7: memref<64x32xf32, #tpu.memory_space<vmem>>, %arg8: memref<64x1xf32, #tpu.memory_space<vmem>>, %arg9: memref<64x32xf32, #tpu.memory_space<vmem>>, %arg10: memref<64x1xf32, #tpu.memory_space<vmem>>, %arg11: memref<64x32xf32, #tpu.memory_space<vmem>>, %arg12: memref<1x32xf32, #tpu.memory_space<vmem>>, %arg13: memref<1x32xf32, #tpu.memory_space<vmem>>, %arg14: memref<1x32xf32, #tpu.memory_space<vmem>>, %arg15: memref<1x8x32xf32, #tpu.memory_space<vmem>>, %arg16: memref<64x8xf32, #tpu.memory_space<vmem>>, %arg17: memref<64x8xf32, #tpu.memory_space<vmem>>, %arg18: memref<64x8xf32, #tpu.memory_space<vmem>>, %arg19: memref<64x8xf32, #tpu.memory_space<vmem>>) attributes {dimension_semantics = [#tpu.dimension_semantics<parallel>, #tpu.dimension_semantics<arbitrary>], iteration_bounds = array<i64: 2, 1>, scalar_prefetch = 0 : i64, scratch_operands = 4 : i64, tpu.core_type = #tpu.core_type<tc>, window_params = [{transform_indices = @transform_0, window_bounds = array<i64: 1, 32, 8>}, {transform_indices = @transform_1, window_bounds = array<i64: 1, 32, 8>}, {transform_indices = @transform_2, window_bounds = array<i64: 1, 8, 8>}, {pipeline_mode = #tpu.pipeline_mode<synchronous>, transform_indices = @transform_3, window_bounds = array<i64: 64, 32>}, {pipeline_mode = #tpu.pipeline_mode<synchronous>, transform_indices = @transform_4, window_bounds = array<i64: 64, 1>}, {pipeline_mode = #tpu.pipeline_mode<synchronous>, transform_indices = @transform_5, window_bounds = array<i64: 64, 32>}, {pipeline_mode = #tpu.pipeline_mode<synchronous>, transform_indices = @transform_6, window_bounds = array<i64: 64, 1>}, {pipeline_mode = #tpu.pipeline_mode<synchronous>, transform_indices = @transform_7, window_bounds = array<i64: 64, 32>}, {pipeline_mode = #tpu.pipeline_mode<synchronous>, transform_indices = @transform_8, window_bounds = array<i64: 64, 1>}, {pipeline_mode = #tpu.pipeline_mode<synchronous>, transform_indices = @transform_9, window_bounds = array<i64: 64, 32>}, {pipeline_mode = #tpu.pipeline_mode<synchronous>, transform_indices = @transform_10, window_bounds = array<i64: 1, 32>}, {pipeline_mode = #tpu.pipeline_mode<synchronous>, transform_indices = @transform_11, window_bounds = array<i64: 1, 32>}, {pipeline_mode = #tpu.pipeline_mode<synchronous>, transform_indices = @transform_12, window_bounds = array<i64: 1, 32>}, {transform_indices = @transform_13, window_bounds = array<i64: 1, 8, 32>}]} {
    %c0_i32 = arith.constant 0 : i32
    %0 = arith.cmpi eq, %arg1, %c0_i32 : i32
    %1 = arith.extui %0 : i1 to i32
    %c0_i32_0 = arith.constant 0 : i32
    %2 = arith.cmpi ne, %1, %c0_i32_0 : i32
    scf.if %2 {
      %c0_31 = arith.constant 0 : index
      %c0_32 = arith.constant 0 : index
      %c0_33 = arith.constant 0 : index
      %47 = vector.load %arg2[%c0_31, %c0_32, %c0_33] : memref<1x32x8xf32, #tpu.memory_space<vmem>>, vector<1x32x8xf32>
      %48 = vector.shape_cast %47 : vector<1x32x8xf32> to vector<32x8xf32>
      %c0_34 = arith.constant 0 : index
      %c0_35 = arith.constant 0 : index
      %49 = vector.load %arg7[%c0_34, %c0_35] : memref<64x32xf32, #tpu.memory_space<vmem>>, vector<64x32xf32>
      %cst_36 = arith.constant dense<0.000000e+00> : vector<64x8xf32>
      %50 = tpu.matmul %49, %48, %cst_36 {dimension_numbers = #tpu.dot_dimension_numbers<[1], [0], [0], [1], [0, 0, 1, 1], [], []>} : vector<64x32xf32>, vector<32x8xf32>, vector<64x8xf32> -> vector<64x8xf32>
      %c0_37 = arith.constant 0 : index
      %c0_38 = arith.constant 0 : index
      %51 = vector.load %arg8[%c0_37, %c0_38] : memref<64x1xf32, #tpu.memory_space<vmem>>, vector<64x1xf32>
      %52 = vector.broadcast %51 : vector<64x1xf32> to vector<64x8xf32>
      %53 = arith.addf %50, %52 : vector<64x8xf32>
      %c0_39 = arith.constant 0 : index
      %c0_40 = arith.constant 0 : index
      %54 = vector.load %arg9[%c0_39, %c0_40] : memref<64x32xf32, #tpu.memory_space<vmem>>, vector<64x32xf32>
      %cst_41 = arith.constant dense<0.000000e+00> : vector<64x8xf32>
      %55 = tpu.matmul %54, %48, %cst_41 {dimension_numbers = #tpu.dot_dimension_numbers<[1], [0], [0], [1], [0, 0, 1, 1], [], []>} : vector<64x32xf32>, vector<32x8xf32>, vector<64x8xf32> -> vector<64x8xf32>
      %c0_42 = arith.constant 0 : index
      %c0_43 = arith.constant 0 : index
      %56 = vector.load %arg10[%c0_42, %c0_43] : memref<64x1xf32, #tpu.memory_space<vmem>>, vector<64x1xf32>
      %57 = vector.broadcast %56 : vector<64x1xf32> to vector<64x8xf32>
      %58 = arith.addf %55, %57 : vector<64x8xf32>
      %c0_44 = arith.constant 0 : index
      %c0_45 = arith.constant 0 : index
      %59 = vector.load %arg16[%c0_44, %c0_45] : memref<64x8xf32, #tpu.memory_space<vmem>>, vector<64x8xf32>
      tpu.vector_store %arg16[%c0_44, %c0_45], %53 {strides = array<i32>} : memref<64x8xf32, #tpu.memory_space<vmem>>, vector<64x8xf32>,
      %c0_46 = arith.constant 0 : index
      %c0_47 = arith.constant 0 : index
      %60 = vector.load %arg17[%c0_46, %c0_47] : memref<64x8xf32, #tpu.memory_space<vmem>>, vector<64x8xf32>
      tpu.vector_store %arg17[%c0_46, %c0_47], %58 {strides = array<i32>} : memref<64x8xf32, #tpu.memory_space<vmem>>, vector<64x8xf32>,
    } else {
    }
    %c0 = arith.constant 0 : index
    %c0_1 = arith.constant 0 : index
    %c0_2 = arith.constant 0 : index
    %3 = vector.load %arg3[%c0, %c0_1, %c0_2] : memref<1x32x8xf32, #tpu.memory_space<vmem>>, vector<1x32x8xf32>
    %4 = vector.shape_cast %3 : vector<1x32x8xf32> to vector<32x8xf32>
    %c0_3 = arith.constant 0 : index
    %c0_4 = arith.constant 0 : index
    %5 = vector.load %arg5[%c0_3, %c0_4] : memref<64x32xf32, #tpu.memory_space<vmem>>, vector<64x32xf32>
    %cst = arith.constant dense<0.000000e+00> : vector<64x8xf32>
    %6 = tpu.matmul %5, %4, %cst {dimension_numbers = #tpu.dot_dimension_numbers<[1], [0], [0], [1], [0, 0, 1, 1], [], []>} : vector<64x32xf32>, vector<32x8xf32>, vector<64x8xf32> -> vector<64x8xf32>
    %c0_5 = arith.constant 0 : index
    %c0_6 = arith.constant 0 : index
    %7 = vector.load %arg6[%c0_5, %c0_6] : memref<64x1xf32, #tpu.memory_space<vmem>>, vector<64x1xf32>
    %8 = vector.broadcast %7 : vector<64x1xf32> to vector<64x8xf32>
    %9 = arith.addf %6, %8 : vector<64x8xf32>
    %cst_7 = arith.constant 0.353553385 : f32
    %10 = vector.broadcast %cst_7 : f32 to vector<64x8xf32>
    %11 = arith.mulf %9, %10 : vector<64x8xf32>
    %c0_8 = arith.constant 0 : index
    %c0_9 = arith.constant 0 : index
    %12 = vector.load %arg18[%c0_8, %c0_9] : memref<64x8xf32, #tpu.memory_space<vmem>>, vector<64x8xf32>
    tpu.vector_store %arg18[%c0_8, %c0_9], %11 {strides = array<i32>} : memref<64x8xf32, #tpu.memory_space<vmem>>, vector<64x8xf32>,
    %c0_i32_10 = arith.constant 0 : i32
    %c4_i32 = arith.constant 4 : i32
    %13 = arith.addi %c0_i32_10, %c4_i32 : i32
    %c1_i32 = arith.constant 1 : i32
    scf.for %arg20 = %c0_i32_10 to %13 step %c1_i32  : i32 {
      %c1_i32_31 = arith.constant 1 : i32
      %47 = arith.muli %arg20, %c1_i32_31 : i32
      %c0_i32_32 = arith.constant 0 : i32
      %48 = arith.addi %c0_i32_32, %47 : i32
      %c16_i32 = arith.constant 16 : i32
      %49 = arith.muli %48, %c16_i32 : i32
      %50 = tpu.assume_multiple %49, 16 : i32
      %51 = arith.index_cast %50 : i32 to index
      %c0_33 = arith.constant 0 : index
      %52 = vector.load %arg18[%51, %c0_33] : memref<64x8xf32, #tpu.memory_space<vmem>>, vector<16x8xf32>
      %53 = arith.index_cast %50 : i32 to index
      %c0_34 = arith.constant 0 : index
      %54 = vector.load %arg16[%53, %c0_34] : memref<64x8xf32, #tpu.memory_space<vmem>>, vector<16x8xf32>
      %55 = arith.index_cast %50 : i32 to index
      %c0_35 = arith.constant 0 : index
      %56 = vector.load %arg17[%55, %c0_35] : memref<64x8xf32, #tpu.memory_space<vmem>>, vector<16x8xf32>
      %cst_36 = arith.constant dense<0.000000e+00> : vector<8x8xf32>
      %57 = tpu.matmul %52, %54, %cst_36 {dimension_numbers = #tpu.dot_dimension_numbers<[0], [0], [1], [1], [0, 1, 1, 1], [], []>} : vector<16x8xf32>, vector<16x8xf32>, vector<8x8xf32> -> vector<8x8xf32>
      %c0_37 = arith.constant 0 : index
      %c0_38 = arith.constant 0 : index
      %c0_39 = arith.constant 0 : index
      %58 = vector.load %arg4[%c0_37, %c0_38, %c0_39] : memref<1x8x8xi8, #tpu.memory_space<vmem>>, vector<1x8x8xi8>
      %59 = vector.shape_cast %58 : vector<1x8x8xi8> to vector<8x8xi8>
      %c0_i8 = arith.constant 0 : i8
      %60 = vector.broadcast %c0_i8 : i8 to vector<8x8xi8>
      %61 = arith.cmpi ne, %59, %60 : vector<8x8xi8>
      %cst_40 = arith.constant -1.000000e+09 : f32
      %62 = vector.broadcast %cst_40 : f32 to vector<8x8xf32>
      %63 = arith.select %61, %62, %57 : vector<8x8xi1>, vector<8x8xf32>
      %cst_41 = arith.constant dense<0xFF800000> : vector<8xf32>
      %64 = vector.multi_reduction <maximumf>, %63, %cst_41 [1] : vector<8x8xf32> to vector<8xf32>
      %65 = vector.shape_cast %64 : vector<8xf32> to vector<8x1xf32>
      %66 = vector.broadcast %65 : vector<8x1xf32> to vector<8x8xf32>
      %67 = arith.subf %63, %66 : vector<8x8xf32>
      %68 = math.exp %67 : vector<8x8xf32>
      %cst_42 = arith.constant dense<0.000000e+00> : vector<8xf32>
      %69 = vector.multi_reduction <add>, %68, %cst_42 [1] : vector<8x8xf32> to vector<8xf32>
      %70 = vector.shape_cast %69 : vector<8xf32> to vector<8x1xf32>
      %71 = vector.broadcast %70 : vector<8x1xf32> to vector<8x8xf32>
      %72 = arith.divf %68, %71 : vector<8x8xf32>
      %cst_43 = arith.constant dense<0.000000e+00> : vector<16x8xf32>
      %73 = tpu.matmul %56, %72, %cst_43 {dimension_numbers = #tpu.dot_dimension_numbers<[1], [1], [0], [0], [0, 0, 1, 0], [], []>} : vector<16x8xf32>, vector<8x8xf32>, vector<16x8xf32> -> vector<16x8xf32>
      %74 = arith.index_cast %50 : i32 to index
      %c0_44 = arith.constant 0 : index
      %75 = vector.load %arg19[%74, %c0_44] : memref<64x8xf32, #tpu.memory_space<vmem>>, vector<16x8xf32>
      tpu.vector_store %arg19[%74, %c0_44], %73 {strides = array<i32>} : memref<64x8xf32, #tpu.memory_space<vmem>>, vector<16x8xf32>,
    }
    %c4_i32_11 = arith.constant 4 : i32
    %c0_12 = arith.constant 0 : index
    %c0_13 = arith.constant 0 : index
    %14 = vector.load %arg19[%c0_12, %c0_13] : memref<64x8xf32, #tpu.memory_space<vmem>>, vector<64x8xf32>
    %c0_14 = arith.constant 0 : index
    %c0_15 = arith.constant 0 : index
    %15 = vector.load %arg11[%c0_14, %c0_15] : memref<64x32xf32, #tpu.memory_space<vmem>>, vector<64x32xf32>
    %cst_16 = arith.constant dense<0.000000e+00> : vector<8x32xf32>
    %16 = tpu.matmul %14, %15, %cst_16 {dimension_numbers = #tpu.dot_dimension_numbers<[0], [0], [1], [1], [0, 1, 1, 1], [], []>} : vector<64x8xf32>, vector<64x32xf32>, vector<8x32xf32> -> vector<8x32xf32>
    %c0_17 = arith.constant 0 : index
    %c0_18 = arith.constant 0 : index
    %17 = vector.load %arg12[%c0_17, %c0_18] : memref<1x32xf32, #tpu.memory_space<vmem>>, vector<1x32xf32>
    %18 = vector.broadcast %17 : vector<1x32xf32> to vector<8x32xf32>
    %19 = arith.addf %16, %18 : vector<8x32xf32>
    %cst_19 = arith.constant dense<0.000000e+00> : vector<8xf32>
    %20 = vector.multi_reduction <add>, %19, %cst_19 [1] : vector<8x32xf32> to vector<8xf32>
    %21 = vector.shape_cast %20 : vector<8xf32> to vector<8x1xf32>
    %cst_20 = arith.constant 3.200000e+01 : f32
    %22 = vector.broadcast %cst_20 : f32 to vector<8x1xf32>
    %23 = arith.divf %21, %22 : vector<8x1xf32>
    %24 = vector.broadcast %23 : vector<8x1xf32> to vector<8x32xf32>
    %25 = arith.subf %19, %24 : vector<8x32xf32>
    %26 = arith.mulf %25, %25 : vector<8x32xf32>
    %cst_21 = arith.constant dense<0.000000e+00> : vector<8xf32>
    %27 = vector.multi_reduction <add>, %26, %cst_21 [1] : vector<8x32xf32> to vector<8xf32>
    %28 = vector.shape_cast %27 : vector<8xf32> to vector<8x1xf32>
    %cst_22 = arith.constant 3.200000e+01 : f32
    %29 = vector.broadcast %cst_22 : f32 to vector<8x1xf32>
    %30 = arith.divf %28, %29 : vector<8x1xf32>
    %31 = vector.broadcast %23 : vector<8x1xf32> to vector<8x32xf32>
    %32 = arith.subf %19, %31 : vector<8x32xf32>
    %cst_23 = arith.constant 9.99999974E-6 : f32
    %33 = vector.broadcast %cst_23 : f32 to vector<8x1xf32>
    %34 = arith.addf %30, %33 : vector<8x1xf32>
    %35 = math.rsqrt %34 : vector<8x1xf32>
    %36 = vector.broadcast %35 : vector<8x1xf32> to vector<8x32xf32>
    %37 = arith.mulf %32, %36 : vector<8x32xf32>
    %c0_24 = arith.constant 0 : index
    %c0_25 = arith.constant 0 : index
    %38 = vector.load %arg13[%c0_24, %c0_25] : memref<1x32xf32, #tpu.memory_space<vmem>>, vector<1x32xf32>
    %39 = vector.broadcast %38 : vector<1x32xf32> to vector<8x32xf32>
    %40 = arith.mulf %37, %39 : vector<8x32xf32>
    %c0_26 = arith.constant 0 : index
    %c0_27 = arith.constant 0 : index
    %41 = vector.load %arg14[%c0_26, %c0_27] : memref<1x32xf32, #tpu.memory_space<vmem>>, vector<1x32xf32>
    %42 = vector.broadcast %41 : vector<1x32xf32> to vector<8x32xf32>
    %43 = arith.addf %40, %42 : vector<8x32xf32>
    %c0_28 = arith.constant 0 : index
    %c0_29 = arith.constant 0 : index
    %c0_30 = arith.constant 0 : index
    %44 = vector.load %arg15[%c0_28, %c0_29, %c0_30] : memref<1x8x32xf32, #tpu.memory_space<vmem>>, vector<1x8x32xf32>
    %45 = vector.shape_cast %44 : vector<1x8x32xf32> to vector<8x32xf32>
    %46 = vector.shape_cast %43 : vector<8x32xf32> to vector<1x8x32xf32>
    tpu.vector_store %arg15[%c0_28, %c0_29, %c0_30], %46 {strides = array<i32>} : memref<1x8x32xf32, #tpu.memory_space<vmem>>, vector<1x8x32xf32>,
    return
  }
  func.func @transform_0(%arg0: i32, %arg1: i32) -> (i32, i32, i32) {
    %c0_i32 = arith.constant 0 : i32
    %c0_i32_0 = arith.constant 0 : i32
    %c0_i32_1 = arith.constant 0 : i32
    return %arg0, %c0_i32, %c0_i32_0 : i32, i32, i32
  }
  func.func @transform_1(%arg0: i32, %arg1: i32) -> (i32, i32, i32) {
    %c0_i32 = arith.constant 0 : i32
    %c0_i32_0 = arith.constant 0 : i32
    return %arg0, %c0_i32, %arg1 : i32, i32, i32
  }
  func.func @transform_2(%arg0: i32, %arg1: i32) -> (i32, i32, i32) {
    %c0_i32 = arith.constant 0 : i32
    %c0_i32_0 = arith.constant 0 : i32
    return %arg0, %arg1, %c0_i32 : i32, i32, i32
  }
  func.func @transform_3(%arg0: i32, %arg1: i32) -> (i32, i32) {
    %c0_i32 = arith.constant 0 : i32
    %c0_i32_0 = arith.constant 0 : i32
    %c0_i32_1 = arith.constant 0 : i32
    return %c0_i32, %c0_i32_0 : i32, i32
  }
  func.func @transform_4(%arg0: i32, %arg1: i32) -> (i32, i32) {
    %c0_i32 = arith.constant 0 : i32
    %c0_i32_0 = arith.constant 0 : i32
    %c0_i32_1 = arith.constant 0 : i32
    return %c0_i32, %c0_i32_0 : i32, i32
  }
  func.func @transform_5(%arg0: i32, %arg1: i32) -> (i32, i32) {
    %c0_i32 = arith.constant 0 : i32
    %c0_i32_0 = arith.constant 0 : i32
    %c0_i32_1 = arith.constant 0 : i32
    return %c0_i32, %c0_i32_0 : i32, i32
  }
  func.func @transform_6(%arg0: i32, %arg1: i32) -> (i32, i32) {
    %c0_i32 = arith.constant 0 : i32
    %c0_i32_0 = arith.constant 0 : i32
    %c0_i32_1 = arith.constant 0 : i32
    return %c0_i32, %c0_i32_0 : i32, i32
  }
  func.func @transform_7(%arg0: i32, %arg1: i32) -> (i32, i32) {
    %c0_i32 = arith.constant 0 : i32
    %c0_i32_0 = arith.constant 0 : i32
    %c0_i32_1 = arith.constant 0 : i32
    return %c0_i32, %c0_i32_0 : i32, i32
  }
  func.func @transform_8(%arg0: i32, %arg1: i32) -> (i32, i32) {
    %c0_i32 = arith.constant 0 : i32
    %c0_i32_0 = arith.constant 0 : i32
    %c0_i32_1 = arith.constant 0 : i32
    return %c0_i32, %c0_i32_0 : i32, i32
  }
  func.func @transform_9(%arg0: i32, %arg1: i32) -> (i32, i32) {
    %c0_i32 = arith.constant 0 : i32
    %c0_i32_0 = arith.constant 0 : i32
    %c0_i32_1 = arith.constant 0 : i32
    return %c0_i32, %c0_i32_0 : i32, i32
  }
  func.func @transform_10(%arg0: i32, %arg1: i32) -> (i32, i32) {
    %c0_i32 = arith.constant 0 : i32
    %c0_i32_0 = arith.constant 0 : i32
    %c0_i32_1 = arith.constant 0 : i32
    return %c0_i32, %c0_i32_0 : i32, i32
  }
  func.func @transform_11(%arg0: i32, %arg1: i32) -> (i32, i32) {
    %c0_i32 = arith.constant 0 : i32
    %c0_i32_0 = arith.constant 0 : i32
    %c0_i32_1 = arith.constant 0 : i32
    return %c0_i32, %c0_i32_0 : i32, i32
  }
  func.func @transform_12(%arg0: i32, %arg1: i32) -> (i32, i32) {
    %c0_i32 = arith.constant 0 : i32
    %c0_i32_0 = arith.constant 0 : i32
    %c0_i32_1 = arith.constant 0 : i32
    return %c0_i32, %c0_i32_0 : i32, i32
  }
  func.func @transform_13(%arg0: i32, %arg1: i32) -> (i32, i32, i32) {
    %c0_i32 = arith.constant 0 : i32
    %c0_i32_0 = arith.constant 0 : i32
    return %arg0, %arg1, %c0_i32 : i32, i32, i32
  }
}

module attributes {stable_mosaic.version = 11 : i64} {
  func.func @_fused_mha_kernel(%arg0: i32, %arg1: i32, %arg2: memref<1x32x8xf32, #tpu.memory_space<vmem>>, %arg3: memref<1x32x8xf32, #tpu.memory_space<vmem>>, %arg4: memref<1x8x8xi8, #tpu.memory_space<vmem>>, %arg5: memref<64x32xf32, #tpu.memory_space<vmem>>, %arg6: memref<64x1xf32, #tpu.memory_space<vmem>>, %arg7: memref<64x32xf32, #tpu.memory_space<vmem>>, %arg8: memref<64x1xf32, #tpu.memory_space<vmem>>, %arg9: memref<64x32xf32, #tpu.memory_space<vmem>>, %arg10: memref<64x1xf32, #tpu.memory_space<vmem>>, %arg11: memref<64x32xf32, #tpu.memory_space<vmem>>, %arg12: memref<1x32xf32, #tpu.memory_space<vmem>>, %arg13: memref<1x32xf32, #tpu.memory_space<vmem>>, %arg14: memref<1x32xf32, #tpu.memory_space<vmem>>, %arg15: memref<1x8x32xf32, #tpu.memory_space<vmem>>, %arg16: memref<64x8xf32, #tpu.memory_space<vmem>>, %arg17: memref<64x8xf32, #tpu.memory_space<vmem>>, %arg18: memref<64x8xf32, #tpu.memory_space<vmem>>, %arg19: memref<64x8xf32, #tpu.memory_space<vmem>>) attributes {dimension_semantics = [#tpu.dimension_semantics<parallel>, #tpu.dimension_semantics<arbitrary>], iteration_bounds = array<i64: 2, 1>, scalar_prefetch = 0 : i64, scratch_operands = 4 : i64, tpu.core_type = #tpu.core_type<tc>, window_params = [{transform_indices = @transform_0, window_bounds = array<i64: 1, 32, 8>}, {transform_indices = @transform_1, window_bounds = array<i64: 1, 32, 8>}, {transform_indices = @transform_2, window_bounds = array<i64: 1, 8, 8>}, {pipeline_mode = #tpu.pipeline_mode<synchronous>, transform_indices = @transform_3, window_bounds = array<i64: 64, 32>}, {pipeline_mode = #tpu.pipeline_mode<synchronous>, transform_indices = @transform_4, window_bounds = array<i64: 64, 1>}, {pipeline_mode = #tpu.pipeline_mode<synchronous>, transform_indices = @transform_5, window_bounds = array<i64: 64, 32>}, {pipeline_mode = #tpu.pipeline_mode<synchronous>, transform_indices = @transform_6, window_bounds = array<i64: 64, 1>}, {pipeline_mode = #tpu.pipeline_mode<synchronous>, transform_indices = @transform_7, window_bounds = array<i64: 64, 32>}, {pipeline_mode = #tpu.pipeline_mode<synchronous>, transform_indices = @transform_8, window_bounds = array<i64: 64, 1>}, {pipeline_mode = #tpu.pipeline_mode<synchronous>, transform_indices = @transform_9, window_bounds = array<i64: 64, 32>}, {pipeline_mode = #tpu.pipeline_mode<synchronous>, transform_indices = @transform_10, window_bounds = array<i64: 1, 32>}, {pipeline_mode = #tpu.pipeline_mode<synchronous>, transform_indices = @transform_11, window_bounds = array<i64: 1, 32>}, {pipeline_mode = #tpu.pipeline_mode<synchronous>, transform_indices = @transform_12, window_bounds = array<i64: 1, 32>}, {transform_indices = @transform_13, window_bounds = array<i64: 1, 8, 32>}]} {
    %c0_i32 = arith.constant 0 : i32
    %0 = arith.cmpi eq, %arg1, %c0_i32 : i32
    %1 = arith.extui %0 : i1 to i32
    %c0_i32_0 = arith.constant 0 : i32
    %2 = arith.cmpi ne, %1, %c0_i32_0 : i32
    scf.if %2 {
      %c0_93 = arith.constant 0 : index
      %c0_94 = arith.constant 0 : index
      %c0_95 = arith.constant 0 : index
      %130 = vector.load %arg2[%c0_93, %c0_94, %c0_95] : memref<1x32x8xf32, #tpu.memory_space<vmem>>, vector<1x32x8xf32>
      %131 = vector.shape_cast %130 : vector<1x32x8xf32> to vector<32x8xf32>
      %c0_96 = arith.constant 0 : index
      %c0_97 = arith.constant 0 : index
      %132 = vector.load %arg7[%c0_96, %c0_97] : memref<64x32xf32, #tpu.memory_space<vmem>>, vector<64x32xf32>
      %cst_98 = arith.constant dense<0.000000e+00> : vector<64x8xf32>
      %133 = tpu.matmul %132, %131, %cst_98 {dimension_numbers = #tpu.dot_dimension_numbers<[1], [0], [0], [1], [0, 0, 1, 1], [], []>} : vector<64x32xf32>, vector<32x8xf32>, vector<64x8xf32> -> vector<64x8xf32>
      %c0_99 = arith.constant 0 : index
      %c0_100 = arith.constant 0 : index
      %134 = vector.load %arg8[%c0_99, %c0_100] : memref<64x1xf32, #tpu.memory_space<vmem>>, vector<64x1xf32>
      %135 = vector.broadcast %134 : vector<64x1xf32> to vector<64x8xf32>
      %136 = arith.addf %133, %135 : vector<64x8xf32>
      %c0_101 = arith.constant 0 : index
      %c0_102 = arith.constant 0 : index
      %137 = vector.load %arg9[%c0_101, %c0_102] : memref<64x32xf32, #tpu.memory_space<vmem>>, vector<64x32xf32>
      %cst_103 = arith.constant dense<0.000000e+00> : vector<64x8xf32>
      %138 = tpu.matmul %137, %131, %cst_103 {dimension_numbers = #tpu.dot_dimension_numbers<[1], [0], [0], [1], [0, 0, 1, 1], [], []>} : vector<64x32xf32>, vector<32x8xf32>, vector<64x8xf32> -> vector<64x8xf32>
      %c0_104 = arith.constant 0 : index
      %c0_105 = arith.constant 0 : index
      %139 = vector.load %arg10[%c0_104, %c0_105] : memref<64x1xf32, #tpu.memory_space<vmem>>, vector<64x1xf32>
      %140 = vector.broadcast %139 : vector<64x1xf32> to vector<64x8xf32>
      %141 = arith.addf %138, %140 : vector<64x8xf32>
      %c0_106 = arith.constant 0 : index
      %c0_107 = arith.constant 0 : index
      %142 = vector.load %arg16[%c0_106, %c0_107] : memref<64x8xf32, #tpu.memory_space<vmem>>, vector<64x8xf32>
      tpu.vector_store %arg16[%c0_106, %c0_107], %136 {strides = array<i32>} : memref<64x8xf32, #tpu.memory_space<vmem>>, vector<64x8xf32>,
      %c0_108 = arith.constant 0 : index
      %c0_109 = arith.constant 0 : index
      %143 = vector.load %arg17[%c0_108, %c0_109] : memref<64x8xf32, #tpu.memory_space<vmem>>, vector<64x8xf32>
      tpu.vector_store %arg17[%c0_108, %c0_109], %141 {strides = array<i32>} : memref<64x8xf32, #tpu.memory_space<vmem>>, vector<64x8xf32>,
    } else {
    }
    %c0 = arith.constant 0 : index
    %c0_1 = arith.constant 0 : index
    %c0_2 = arith.constant 0 : index
    %3 = vector.load %arg3[%c0, %c0_1, %c0_2] : memref<1x32x8xf32, #tpu.memory_space<vmem>>, vector<1x32x8xf32>
    %4 = vector.shape_cast %3 : vector<1x32x8xf32> to vector<32x8xf32>
    %c0_3 = arith.constant 0 : index
    %c0_4 = arith.constant 0 : index
    %5 = vector.load %arg5[%c0_3, %c0_4] : memref<64x32xf32, #tpu.memory_space<vmem>>, vector<64x32xf32>
    %cst = arith.constant dense<0.000000e+00> : vector<64x8xf32>
    %6 = tpu.matmul %5, %4, %cst {dimension_numbers = #tpu.dot_dimension_numbers<[1], [0], [0], [1], [0, 0, 1, 1], [], []>} : vector<64x32xf32>, vector<32x8xf32>, vector<64x8xf32> -> vector<64x8xf32>
    %c0_5 = arith.constant 0 : index
    %c0_6 = arith.constant 0 : index
    %7 = vector.load %arg6[%c0_5, %c0_6] : memref<64x1xf32, #tpu.memory_space<vmem>>, vector<64x1xf32>
    %8 = vector.broadcast %7 : vector<64x1xf32> to vector<64x8xf32>
    %9 = arith.addf %6, %8 : vector<64x8xf32>
    %cst_7 = arith.constant 0.353553385 : f32
    %10 = vector.broadcast %cst_7 : f32 to vector<64x8xf32>
    %11 = arith.mulf %9, %10 : vector<64x8xf32>
    %c0_8 = arith.constant 0 : index
    %c0_9 = arith.constant 0 : index
    %12 = vector.load %arg18[%c0_8, %c0_9] : memref<64x8xf32, #tpu.memory_space<vmem>>, vector<64x8xf32>
    tpu.vector_store %arg18[%c0_8, %c0_9], %11 {strides = array<i32>} : memref<64x8xf32, #tpu.memory_space<vmem>>, vector<64x8xf32>,
    %c0_10 = arith.constant 0 : index
    %c0_11 = arith.constant 0 : index
    %13 = vector.load %arg18[%c0_10, %c0_11] : memref<64x8xf32, #tpu.memory_space<vmem>>, vector<16x8xf32>
    %c0_12 = arith.constant 0 : index
    %c0_13 = arith.constant 0 : index
    %14 = vector.load %arg16[%c0_12, %c0_13] : memref<64x8xf32, #tpu.memory_space<vmem>>, vector<16x8xf32>
    %c0_14 = arith.constant 0 : index
    %c0_15 = arith.constant 0 : index
    %15 = vector.load %arg17[%c0_14, %c0_15] : memref<64x8xf32, #tpu.memory_space<vmem>>, vector<16x8xf32>
    %cst_16 = arith.constant dense<0.000000e+00> : vector<8x8xf32>
    %16 = tpu.matmul %13, %14, %cst_16 {dimension_numbers = #tpu.dot_dimension_numbers<[0], [0], [1], [1], [0, 1, 1, 1], [], []>} : vector<16x8xf32>, vector<16x8xf32>, vector<8x8xf32> -> vector<8x8xf32>
    %c0_17 = arith.constant 0 : index
    %c0_18 = arith.constant 0 : index
    %c0_19 = arith.constant 0 : index
    %17 = vector.load %arg4[%c0_17, %c0_18, %c0_19] : memref<1x8x8xi8, #tpu.memory_space<vmem>>, vector<1x8x8xi8>
    %18 = vector.shape_cast %17 : vector<1x8x8xi8> to vector<8x8xi8>
    %c0_i8 = arith.constant 0 : i8
    %19 = vector.broadcast %c0_i8 : i8 to vector<8x8xi8>
    %20 = arith.cmpi ne, %18, %19 : vector<8x8xi8>
    %cst_20 = arith.constant -1.000000e+09 : f32
    %21 = vector.broadcast %cst_20 : f32 to vector<8x8xf32>
    %22 = arith.select %20, %21, %16 : vector<8x8xi1>, vector<8x8xf32>
    %cst_21 = arith.constant dense<0xFF800000> : vector<8xf32>
    %23 = vector.multi_reduction <maximumf>, %22, %cst_21 [1] : vector<8x8xf32> to vector<8xf32>
    %24 = vector.shape_cast %23 : vector<8xf32> to vector<8x1xf32>
    %25 = vector.broadcast %24 : vector<8x1xf32> to vector<8x8xf32>
    %26 = arith.subf %22, %25 : vector<8x8xf32>
    %27 = math.exp %26 : vector<8x8xf32>
    %cst_22 = arith.constant dense<0.000000e+00> : vector<8xf32>
    %28 = vector.multi_reduction <add>, %27, %cst_22 [1] : vector<8x8xf32> to vector<8xf32>
    %29 = vector.shape_cast %28 : vector<8xf32> to vector<8x1xf32>
    %30 = vector.broadcast %29 : vector<8x1xf32> to vector<8x8xf32>
    %31 = arith.divf %27, %30 : vector<8x8xf32>
    %cst_23 = arith.constant dense<0.000000e+00> : vector<16x8xf32>
    %32 = tpu.matmul %15, %31, %cst_23 {dimension_numbers = #tpu.dot_dimension_numbers<[1], [1], [0], [0], [0, 0, 1, 0], [], []>} : vector<16x8xf32>, vector<8x8xf32>, vector<16x8xf32> -> vector<16x8xf32>
    %c0_24 = arith.constant 0 : index
    %c0_25 = arith.constant 0 : index
    %33 = vector.load %arg19[%c0_24, %c0_25] : memref<64x8xf32, #tpu.memory_space<vmem>>, vector<16x8xf32>
    tpu.vector_store %arg19[%c0_24, %c0_25], %32 {strides = array<i32>} : memref<64x8xf32, #tpu.memory_space<vmem>>, vector<16x8xf32>,
    %c16 = arith.constant 16 : index
    %c0_26 = arith.constant 0 : index
    %34 = vector.load %arg18[%c16, %c0_26] : memref<64x8xf32, #tpu.memory_space<vmem>>, vector<16x8xf32>
    %c16_27 = arith.constant 16 : index
    %c0_28 = arith.constant 0 : index
    %35 = vector.load %arg16[%c16_27, %c0_28] : memref<64x8xf32, #tpu.memory_space<vmem>>, vector<16x8xf32>
    %c16_29 = arith.constant 16 : index
    %c0_30 = arith.constant 0 : index
    %36 = vector.load %arg17[%c16_29, %c0_30] : memref<64x8xf32, #tpu.memory_space<vmem>>, vector<16x8xf32>
    %cst_31 = arith.constant dense<0.000000e+00> : vector<8x8xf32>
    %37 = tpu.matmul %34, %35, %cst_31 {dimension_numbers = #tpu.dot_dimension_numbers<[0], [0], [1], [1], [0, 1, 1, 1], [], []>} : vector<16x8xf32>, vector<16x8xf32>, vector<8x8xf32> -> vector<8x8xf32>
    %c0_32 = arith.constant 0 : index
    %c0_33 = arith.constant 0 : index
    %c0_34 = arith.constant 0 : index
    %38 = vector.load %arg4[%c0_32, %c0_33, %c0_34] : memref<1x8x8xi8, #tpu.memory_space<vmem>>, vector<1x8x8xi8>
    %39 = vector.shape_cast %38 : vector<1x8x8xi8> to vector<8x8xi8>
    %c0_i8_35 = arith.constant 0 : i8
    %40 = vector.broadcast %c0_i8_35 : i8 to vector<8x8xi8>
    %41 = arith.cmpi ne, %39, %40 : vector<8x8xi8>
    %cst_36 = arith.constant -1.000000e+09 : f32
    %42 = vector.broadcast %cst_36 : f32 to vector<8x8xf32>
    %43 = arith.select %41, %42, %37 : vector<8x8xi1>, vector<8x8xf32>
    %cst_37 = arith.constant dense<0xFF800000> : vector<8xf32>
    %44 = vector.multi_reduction <maximumf>, %43, %cst_37 [1] : vector<8x8xf32> to vector<8xf32>
    %45 = vector.shape_cast %44 : vector<8xf32> to vector<8x1xf32>
    %46 = vector.broadcast %45 : vector<8x1xf32> to vector<8x8xf32>
    %47 = arith.subf %43, %46 : vector<8x8xf32>
    %48 = math.exp %47 : vector<8x8xf32>
    %cst_38 = arith.constant dense<0.000000e+00> : vector<8xf32>
    %49 = vector.multi_reduction <add>, %48, %cst_38 [1] : vector<8x8xf32> to vector<8xf32>
    %50 = vector.shape_cast %49 : vector<8xf32> to vector<8x1xf32>
    %51 = vector.broadcast %50 : vector<8x1xf32> to vector<8x8xf32>
    %52 = arith.divf %48, %51 : vector<8x8xf32>
    %cst_39 = arith.constant dense<0.000000e+00> : vector<16x8xf32>
    %53 = tpu.matmul %36, %52, %cst_39 {dimension_numbers = #tpu.dot_dimension_numbers<[1], [1], [0], [0], [0, 0, 1, 0], [], []>} : vector<16x8xf32>, vector<8x8xf32>, vector<16x8xf32> -> vector<16x8xf32>
    %c16_40 = arith.constant 16 : index
    %c0_41 = arith.constant 0 : index
    %54 = vector.load %arg19[%c16_40, %c0_41] : memref<64x8xf32, #tpu.memory_space<vmem>>, vector<16x8xf32>
    tpu.vector_store %arg19[%c16_40, %c0_41], %53 {strides = array<i32>} : memref<64x8xf32, #tpu.memory_space<vmem>>, vector<16x8xf32>,
    %c32 = arith.constant 32 : index
    %c0_42 = arith.constant 0 : index
    %55 = vector.load %arg18[%c32, %c0_42] : memref<64x8xf32, #tpu.memory_space<vmem>>, vector<16x8xf32>
    %c32_43 = arith.constant 32 : index
    %c0_44 = arith.constant 0 : index
    %56 = vector.load %arg16[%c32_43, %c0_44] : memref<64x8xf32, #tpu.memory_space<vmem>>, vector<16x8xf32>
    %c32_45 = arith.constant 32 : index
    %c0_46 = arith.constant 0 : index
    %57 = vector.load %arg17[%c32_45, %c0_46] : memref<64x8xf32, #tpu.memory_space<vmem>>, vector<16x8xf32>
    %cst_47 = arith.constant dense<0.000000e+00> : vector<8x8xf32>
    %58 = tpu.matmul %55, %56, %cst_47 {dimension_numbers = #tpu.dot_dimension_numbers<[0], [0], [1], [1], [0, 1, 1, 1], [], []>} : vector<16x8xf32>, vector<16x8xf32>, vector<8x8xf32> -> vector<8x8xf32>
    %c0_48 = arith.constant 0 : index
    %c0_49 = arith.constant 0 : index
    %c0_50 = arith.constant 0 : index
    %59 = vector.load %arg4[%c0_48, %c0_49, %c0_50] : memref<1x8x8xi8, #tpu.memory_space<vmem>>, vector<1x8x8xi8>
    %60 = vector.shape_cast %59 : vector<1x8x8xi8> to vector<8x8xi8>
    %c0_i8_51 = arith.constant 0 : i8
    %61 = vector.broadcast %c0_i8_51 : i8 to vector<8x8xi8>
    %62 = arith.cmpi ne, %60, %61 : vector<8x8xi8>
    %cst_52 = arith.constant -1.000000e+09 : f32
    %63 = vector.broadcast %cst_52 : f32 to vector<8x8xf32>
    %64 = arith.select %62, %63, %58 : vector<8x8xi1>, vector<8x8xf32>
    %cst_53 = arith.constant dense<0xFF800000> : vector<8xf32>
    %65 = vector.multi_reduction <maximumf>, %64, %cst_53 [1] : vector<8x8xf32> to vector<8xf32>
    %66 = vector.shape_cast %65 : vector<8xf32> to vector<8x1xf32>
    %67 = vector.broadcast %66 : vector<8x1xf32> to vector<8x8xf32>
    %68 = arith.subf %64, %67 : vector<8x8xf32>
    %69 = math.exp %68 : vector<8x8xf32>
    %cst_54 = arith.constant dense<0.000000e+00> : vector<8xf32>
    %70 = vector.multi_reduction <add>, %69, %cst_54 [1] : vector<8x8xf32> to vector<8xf32>
    %71 = vector.shape_cast %70 : vector<8xf32> to vector<8x1xf32>
    %72 = vector.broadcast %71 : vector<8x1xf32> to vector<8x8xf32>
    %73 = arith.divf %69, %72 : vector<8x8xf32>
    %cst_55 = arith.constant dense<0.000000e+00> : vector<16x8xf32>
    %74 = tpu.matmul %57, %73, %cst_55 {dimension_numbers = #tpu.dot_dimension_numbers<[1], [1], [0], [0], [0, 0, 1, 0], [], []>} : vector<16x8xf32>, vector<8x8xf32>, vector<16x8xf32> -> vector<16x8xf32>
    %c32_56 = arith.constant 32 : index
    %c0_57 = arith.constant 0 : index
    %75 = vector.load %arg19[%c32_56, %c0_57] : memref<64x8xf32, #tpu.memory_space<vmem>>, vector<16x8xf32>
    tpu.vector_store %arg19[%c32_56, %c0_57], %74 {strides = array<i32>} : memref<64x8xf32, #tpu.memory_space<vmem>>, vector<16x8xf32>,
    %c48 = arith.constant 48 : index
    %c0_58 = arith.constant 0 : index
    %76 = vector.load %arg18[%c48, %c0_58] : memref<64x8xf32, #tpu.memory_space<vmem>>, vector<16x8xf32>
    %c48_59 = arith.constant 48 : index
    %c0_60 = arith.constant 0 : index
    %77 = vector.load %arg16[%c48_59, %c0_60] : memref<64x8xf32, #tpu.memory_space<vmem>>, vector<16x8xf32>
    %c48_61 = arith.constant 48 : index
    %c0_62 = arith.constant 0 : index
    %78 = vector.load %arg17[%c48_61, %c0_62] : memref<64x8xf32, #tpu.memory_space<vmem>>, vector<16x8xf32>
    %cst_63 = arith.constant dense<0.000000e+00> : vector<8x8xf32>
    %79 = tpu.matmul %76, %77, %cst_63 {dimension_numbers = #tpu.dot_dimension_numbers<[0], [0], [1], [1], [0, 1, 1, 1], [], []>} : vector<16x8xf32>, vector<16x8xf32>, vector<8x8xf32> -> vector<8x8xf32>
    %c0_64 = arith.constant 0 : index
    %c0_65 = arith.constant 0 : index
    %c0_66 = arith.constant 0 : index
    %80 = vector.load %arg4[%c0_64, %c0_65, %c0_66] : memref<1x8x8xi8, #tpu.memory_space<vmem>>, vector<1x8x8xi8>
    %81 = vector.shape_cast %80 : vector<1x8x8xi8> to vector<8x8xi8>
    %c0_i8_67 = arith.constant 0 : i8
    %82 = vector.broadcast %c0_i8_67 : i8 to vector<8x8xi8>
    %83 = arith.cmpi ne, %81, %82 : vector<8x8xi8>
    %cst_68 = arith.constant -1.000000e+09 : f32
    %84 = vector.broadcast %cst_68 : f32 to vector<8x8xf32>
    %85 = arith.select %83, %84, %79 : vector<8x8xi1>, vector<8x8xf32>
    %cst_69 = arith.constant dense<0xFF800000> : vector<8xf32>
    %86 = vector.multi_reduction <maximumf>, %85, %cst_69 [1] : vector<8x8xf32> to vector<8xf32>
    %87 = vector.shape_cast %86 : vector<8xf32> to vector<8x1xf32>
    %88 = vector.broadcast %87 : vector<8x1xf32> to vector<8x8xf32>
    %89 = arith.subf %85, %88 : vector<8x8xf32>
    %90 = math.exp %89 : vector<8x8xf32>
    %cst_70 = arith.constant dense<0.000000e+00> : vector<8xf32>
    %91 = vector.multi_reduction <add>, %90, %cst_70 [1] : vector<8x8xf32> to vector<8xf32>
    %92 = vector.shape_cast %91 : vector<8xf32> to vector<8x1xf32>
    %93 = vector.broadcast %92 : vector<8x1xf32> to vector<8x8xf32>
    %94 = arith.divf %90, %93 : vector<8x8xf32>
    %cst_71 = arith.constant dense<0.000000e+00> : vector<16x8xf32>
    %95 = tpu.matmul %78, %94, %cst_71 {dimension_numbers = #tpu.dot_dimension_numbers<[1], [1], [0], [0], [0, 0, 1, 0], [], []>} : vector<16x8xf32>, vector<8x8xf32>, vector<16x8xf32> -> vector<16x8xf32>
    %c48_72 = arith.constant 48 : index
    %c0_73 = arith.constant 0 : index
    %96 = vector.load %arg19[%c48_72, %c0_73] : memref<64x8xf32, #tpu.memory_space<vmem>>, vector<16x8xf32>
    tpu.vector_store %arg19[%c48_72, %c0_73], %95 {strides = array<i32>} : memref<64x8xf32, #tpu.memory_space<vmem>>, vector<16x8xf32>,
    %c0_74 = arith.constant 0 : index
    %c0_75 = arith.constant 0 : index
    %97 = vector.load %arg19[%c0_74, %c0_75] : memref<64x8xf32, #tpu.memory_space<vmem>>, vector<64x8xf32>
    %c0_76 = arith.constant 0 : index
    %c0_77 = arith.constant 0 : index
    %98 = vector.load %arg11[%c0_76, %c0_77] : memref<64x32xf32, #tpu.memory_space<vmem>>, vector<64x32xf32>
    %cst_78 = arith.constant dense<0.000000e+00> : vector<8x32xf32>
    %99 = tpu.matmul %97, %98, %cst_78 {dimension_numbers = #tpu.dot_dimension_numbers<[0], [0], [1], [1], [0, 1, 1, 1], [], []>} : vector<64x8xf32>, vector<64x32xf32>, vector<8x32xf32> -> vector<8x32xf32>
    %c0_79 = arith.constant 0 : index
    %c0_80 = arith.constant 0 : index
    %100 = vector.load %arg12[%c0_79, %c0_80] : memref<1x32xf32, #tpu.memory_space<vmem>>, vector<1x32xf32>
    %101 = vector.broadcast %100 : vector<1x32xf32> to vector<8x32xf32>
    %102 = arith.addf %99, %101 : vector<8x32xf32>
    %cst_81 = arith.constant dense<0.000000e+00> : vector<8xf32>
    %103 = vector.multi_reduction <add>, %102, %cst_81 [1] : vector<8x32xf32> to vector<8xf32>
    %104 = vector.shape_cast %103 : vector<8xf32> to vector<8x1xf32>
    %cst_82 = arith.constant 3.200000e+01 : f32
    %105 = vector.broadcast %cst_82 : f32 to vector<8x1xf32>
    %106 = arith.divf %104, %105 : vector<8x1xf32>
    %107 = vector.broadcast %106 : vector<8x1xf32> to vector<8x32xf32>
    %108 = arith.subf %102, %107 : vector<8x32xf32>
    %109 = arith.mulf %108, %108 : vector<8x32xf32>
    %cst_83 = arith.constant dense<0.000000e+00> : vector<8xf32>
    %110 = vector.multi_reduction <add>, %109, %cst_83 [1] : vector<8x32xf32> to vector<8xf32>
    %111 = vector.shape_cast %110 : vector<8xf32> to vector<8x1xf32>
    %cst_84 = arith.constant 3.200000e+01 : f32
    %112 = vector.broadcast %cst_84 : f32 to vector<8x1xf32>
    %113 = arith.divf %111, %112 : vector<8x1xf32>
    %114 = vector.broadcast %106 : vector<8x1xf32> to vector<8x32xf32>
    %115 = arith.subf %102, %114 : vector<8x32xf32>
    %cst_85 = arith.constant 9.99999974E-6 : f32
    %116 = vector.broadcast %cst_85 : f32 to vector<8x1xf32>
    %117 = arith.addf %113, %116 : vector<8x1xf32>
    %118 = math.rsqrt %117 : vector<8x1xf32>
    %119 = vector.broadcast %118 : vector<8x1xf32> to vector<8x32xf32>
    %120 = arith.mulf %115, %119 : vector<8x32xf32>
    %c0_86 = arith.constant 0 : index
    %c0_87 = arith.constant 0 : index
    %121 = vector.load %arg13[%c0_86, %c0_87] : memref<1x32xf32, #tpu.memory_space<vmem>>, vector<1x32xf32>
    %122 = vector.broadcast %121 : vector<1x32xf32> to vector<8x32xf32>
    %123 = arith.mulf %120, %122 : vector<8x32xf32>
    %c0_88 = arith.constant 0 : index
    %c0_89 = arith.constant 0 : index
    %124 = vector.load %arg14[%c0_88, %c0_89] : memref<1x32xf32, #tpu.memory_space<vmem>>, vector<1x32xf32>
    %125 = vector.broadcast %124 : vector<1x32xf32> to vector<8x32xf32>
    %126 = arith.addf %123, %125 : vector<8x32xf32>
    %c0_90 = arith.constant 0 : index
    %c0_91 = arith.constant 0 : index
    %c0_92 = arith.constant 0 : index
    %127 = vector.load %arg15[%c0_90, %c0_91, %c0_92] : memref<1x8x32xf32, #tpu.memory_space<vmem>>, vector<1x8x32xf32>
    %128 = vector.shape_cast %127 : vector<1x8x32xf32> to vector<8x32xf32>
    %129 = vector.shape_cast %126 : vector<8x32xf32> to vector<1x8x32xf32>
    tpu.vector_store %arg15[%c0_90, %c0_91, %c0_92], %129 {strides = array<i32>} : memref<1x8x32xf32, #tpu.memory_space<vmem>>, vector<1x8x32xf32>,
    return
  }
  func.func @transform_0(%arg0: i32, %arg1: i32) -> (i32, i32, i32) {
    %c0_i32 = arith.constant 0 : i32
    %c0_i32_0 = arith.constant 0 : i32
    %c0_i32_1 = arith.constant 0 : i32
    return %arg0, %c0_i32, %c0_i32_0 : i32, i32, i32
  }
  func.func @transform_1(%arg0: i32, %arg1: i32) -> (i32, i32, i32) {
    %c0_i32 = arith.constant 0 : i32
    %c0_i32_0 = arith.constant 0 : i32
    return %arg0, %c0_i32, %arg1 : i32, i32, i32
  }
  func.func @transform_2(%arg0: i32, %arg1: i32) -> (i32, i32, i32) {
    %c0_i32 = arith.constant 0 : i32
    %c0_i32_0 = arith.constant 0 : i32
    return %arg0, %arg1, %c0_i32 : i32, i32, i32
  }
  func.func @transform_3(%arg0: i32, %arg1: i32) -> (i32, i32) {
    %c0_i32 = arith.constant 0 : i32
    %c0_i32_0 = arith.constant 0 : i32
    %c0_i32_1 = arith.constant 0 : i32
    return %c0_i32, %c0_i32_0 : i32, i32
  }
  func.func @transform_4(%arg0: i32, %arg1: i32) -> (i32, i32) {
    %c0_i32 = arith.constant 0 : i32
    %c0_i32_0 = arith.constant 0 : i32
    %c0_i32_1 = arith.constant 0 : i32
    return %c0_i32, %c0_i32_0 : i32, i32
  }
  func.func @transform_5(%arg0: i32, %arg1: i32) -> (i32, i32) {
    %c0_i32 = arith.constant 0 : i32
    %c0_i32_0 = arith.constant 0 : i32
    %c0_i32_1 = arith.constant 0 : i32
    return %c0_i32, %c0_i32_0 : i32, i32
  }
  func.func @transform_6(%arg0: i32, %arg1: i32) -> (i32, i32) {
    %c0_i32 = arith.constant 0 : i32
    %c0_i32_0 = arith.constant 0 : i32
    %c0_i32_1 = arith.constant 0 : i32
    return %c0_i32, %c0_i32_0 : i32, i32
  }
  func.func @transform_7(%arg0: i32, %arg1: i32) -> (i32, i32) {
    %c0_i32 = arith.constant 0 : i32
    %c0_i32_0 = arith.constant 0 : i32
    %c0_i32_1 = arith.constant 0 : i32
    return %c0_i32, %c0_i32_0 : i32, i32
  }
  func.func @transform_8(%arg0: i32, %arg1: i32) -> (i32, i32) {
    %c0_i32 = arith.constant 0 : i32
    %c0_i32_0 = arith.constant 0 : i32
    %c0_i32_1 = arith.constant 0 : i32
    return %c0_i32, %c0_i32_0 : i32, i32
  }
  func.func @transform_9(%arg0: i32, %arg1: i32) -> (i32, i32) {
    %c0_i32 = arith.constant 0 : i32
    %c0_i32_0 = arith.constant 0 : i32
    %c0_i32_1 = arith.constant 0 : i32
    return %c0_i32, %c0_i32_0 : i32, i32
  }
  func.func @transform_10(%arg0: i32, %arg1: i32) -> (i32, i32) {
    %c0_i32 = arith.constant 0 : i32
    %c0_i32_0 = arith.constant 0 : i32
    %c0_i32_1 = arith.constant 0 : i32
    return %c0_i32, %c0_i32_0 : i32, i32
  }
  func.func @transform_11(%arg0: i32, %arg1: i32) -> (i32, i32) {
    %c0_i32 = arith.constant 0 : i32
    %c0_i32_0 = arith.constant 0 : i32
    %c0_i32_1 = arith.constant 0 : i32
    return %c0_i32, %c0_i32_0 : i32, i32
  }
  func.func @transform_12(%arg0: i32, %arg1: i32) -> (i32, i32) {
    %c0_i32 = arith.constant 0 : i32
    %c0_i32_0 = arith.constant 0 : i32
    %c0_i32_1 = arith.constant 0 : i32
    return %c0_i32, %c0_i32_0 : i32, i32
  }
  func.func @transform_13(%arg0: i32, %arg1: i32) -> (i32, i32, i32) {
    %c0_i32 = arith.constant 0 : i32
    %c0_i32_0 = arith.constant 0 : i32
    return %arg0, %arg1, %c0_i32 : i32, i32, i32
  }
}

</mosaic_0001>

<llo_original>
// kernel: tpu_custom_call.1
$region0: #{tpu_custom_call.1}
  #allocation0 [shape = 'u32[]', space=smem, size = 0x4, offset = 0x4, fixed_abs, tag = 'smem constant byte address 0x4 - core index']
  #allocation1 [shape = 'u32[144,128]{1,0:T(1,128)}', space=vmem, size = 0x12000, scoped, tag = 'internal scratch']
  #allocation2 [shape = 'f32[64,8]{1,0:T(8,128)}', space=vmem, size = 0x8000, scoped, tag = 'scratch operand']
  #allocation3 [shape = 'f32[64,8]{1,0:T(8,128)}', space=vmem, size = 0x8000, scoped, tag = 'scratch operand']
  #allocation4 [shape = 'f32[64,8]{1,0:T(8,128)}', space=vmem, size = 0x8000, scoped, tag = 'scratch operand']
  #allocation5 [shape = 'f32[64,8]{1,0:T(8,128)}', space=vmem, size = 0x8000, scoped, tag = 'scratch operand']
  %s0 = inlined_call_operand.vmem [shape: f32[2,32,8], index: 0, kind: input, shape index: {}]
  %s1 = inlined_call_operand.vmem [shape: f32[2,32,8], index: 1, kind: input, shape index: {}]
  %s2 = inlined_call_operand.vmem [shape: s8[2,8,8], index: 2, kind: input, shape index: {}]
  %s3 = inlined_call_operand.vmem [shape: f32[64,32], index: 3, kind: input, shape index: {}]
  %s4 = inlined_call_operand.vmem [shape: f32[64,1], index: 4, kind: input, shape index: {}]
  %s5 = inlined_call_operand.vmem [shape: f32[64,32], index: 5, kind: input, shape index: {}]
  %s6 = inlined_call_operand.vmem [shape: f32[64,1], index: 6, kind: input, shape index: {}]
  %s7 = inlined_call_operand.vmem [shape: f32[64,32], index: 7, kind: input, shape index: {}]
  %s8 = inlined_call_operand.vmem [shape: f32[64,1], index: 8, kind: input, shape index: {}]
  %s9 = inlined_call_operand.vmem [shape: f32[64,32], index: 9, kind: input, shape index: {}]
  %s10 = inlined_call_operand.vmem [shape: f32[1,32], index: 10, kind: input, shape index: {}]
  %s11 = inlined_call_operand.vmem [shape: f32[1,32], index: 11, kind: input, shape index: {}]
  %s12 = inlined_call_operand.vmem [shape: f32[1,32], index: 12, kind: input, shape index: {}]
  %s13 = inlined_call_operand.hbm [shape: f32[2,8,32], index: 13, kind: output, shape index: {}]
  %s14 = sld [smem:[#allocation0]]
  $region96: #{tpu_custom_call.1} parent=0
    _
  %s16 = ssub.s32 1, %s14
  %s17 = scalar_select 0, %s16, %s14
  $region1: #{tpu_custom_call.1} parent=0
    #allocation6 [shape = 'u8[8192]{0}', space=vmem, size = 0x2000, scoped, tag = 'output window, operand 0']
    #allocation7 [shape = 's32[2]{0}', space=sflag, size = 0x8, scoped, tag = 'scoped memory for tpu_custom_call.1']
    %18 = vsyncpa [#allocation7], 0
    %s19 = scalar_lea.sflag [#allocation7], 1
    %20 = vsyncpa %s19, 0
    loop: start=0, step=1, limit=4
    $region2: #{tpu_custom_call.1} parent=1 // loop_pre_header
      _
    $region3: #{tpu_custom_call.1} parent=1 // loop_header
      %s22 = sphi 0, %s26
      %p23 = scmp.ge.s32.totalorder %s22, 4
      %s29 = sphi 0, %s41
      %s30 = sphi 0, %s37
      %s31 = sphi 0, %s29
      %s32 = sphi 0, %s30
      %s33 = sphi 0, %s31
      %s34 = sphi 0, %s32
      %s44 = sphi 0, %s46
      %s47 = sphi 0, %s44
      %s48 = sphi 0, %s47
      %s64 = sphi 0, %s48
      %s72 = sphi 0, %s74
      %s75 = sphi 0, %s72
      %s76 = sphi 0, %s75
      %s92 = sphi 0, %s76
      %s100 = sphi 0, %s102
      %s103 = sphi 0, %s100
      %s104 = sphi 0, %s103
      %s120 = sphi 0, %s104
      %s124 = sphi 0, %s124
      %s126 = sphi 0, %s124
      %s127 = sphi 0, %s126
      %s141 = sphi 0, %s127
      %s145 = sphi 0, %s145
      %s147 = sphi 0, %s145
      %s148 = sphi 0, %s147
      %s162 = sphi 0, %s148
      %s166 = sphi 0, %s166
      %s168 = sphi 0, %s166
      %s169 = sphi 0, %s168
      %s183 = sphi 0, %s169
      %s187 = sphi 0, %s187
      %s189 = sphi 0, %s187
      %s190 = sphi 0, %s189
      %s204 = sphi 0, %s190
      %s208 = sphi 0, %s208
      %s210 = sphi 0, %s208
      %s211 = sphi 0, %s210
      %s225 = sphi 0, %s211
      %s229 = sphi 0, %s229
      %s231 = sphi 0, %s229
      %s232 = sphi 0, %s231
      %s246 = sphi 0, %s232
      %s250 = sphi 0, %s250
      %s252 = sphi 0, %s250
      %s253 = sphi 0, %s252
      %s267 = sphi 0, %s253
      %s271 = sphi 0, %s271
      %s273 = sphi 0, %s271
      %s274 = sphi 0, %s273
      %s288 = sphi 0, %s274
      %s292 = sphi 0, %s292
      %s294 = sphi 0, %s292
      %s295 = sphi 0, %s294
      %s309 = sphi 0, %s295
      %s313 = sphi 0, %s313
      %s315 = sphi 0, %s313
      %s316 = sphi 0, %s315
      %s330 = sphi 0, %s316
      %s338 = sphi 0, %s340
      %s341 = sphi 0, %s338
      %s342 = sphi 0, %s341
      %s358 = sphi 0, %s342
    $region4: #{tpu_custom_call.1} parent=1 // loop_header_branch
      %25 = sbr.rel (%p23) target = $region8
    $region5: #{tpu_custom_call.1} parent=1 // loop_body
      %s27 = ssub.s32 %s22, 1
      %s28 = ssub.s32 %s22, 2
      %s35 = sadd.s32 1, %s30
      %p36 = scmp.ge.s32.totalorder %s35, 1
      %s37 = scalar_select %p36, 0, %s35
      %s38 = sadd.s32 1, %s29
      %s39 = scalar_select %p36, %s38, %s29
      %p40 = scmp.ge.s32.totalorder %s39, 2
      %s41 = scalar_select %p40, 0, %s39
      %s42 = ssub.s32 %s29, %s41
      %p43 = scmp.eq.s32.totalorder %s42, 0
      %s45 = sadd.s32 %s44, 1
      %s46 = scalar_select %p43, %s44, %s45
      %p49 = pneg %p43
      %p50 = scmp.eq.s32.totalorder %s22, 1
      %p51 = por %p49, %p50
      %p52 = scmp.ne.s32.totalorder %s44, %s47
      %p53 = scmp.eq.s32.totalorder %s22, 0
      %p54 = por %p52, %p53
      %p55 = scmp.ne.s32.totalorder %s44, %s47
      %p56 = scmp.eq.s32.totalorder %s27, 1
      %p57 = por %p55, %p56
      %p58 = scmp.ne.s32.totalorder %s47, %s48
      %p59 = scmp.eq.s32.totalorder %s27, 0
      %p60 = por %p58, %p59
      %p61 = scmp.ne.s32.totalorder %s47, %s48
      %p62 = scmp.eq.s32.totalorder %s28, 1
      %p63 = por %p61, %p62
      %p65 = scmp.ne.s32.totalorder %s48, %s64
      %p66 = scmp.eq.s32.totalorder %s28, 0
      %p67 = por %p65, %p66
      %s68 = ssub.s32 %s29, %s41
      %s69 = ssub.s32 %s30, %s37
      %s70 = sor.u32 %s68, %s69
      %p71 = scmp.eq.s32.totalorder %s70, 0
      %s73 = sadd.s32 %s72, 1
      %s74 = scalar_select %p71, %s72, %s73
      %p77 = pneg %p71
      %p78 = scmp.eq.s32.totalorder %s22, 1
      %p79 = por %p77, %p78
      %p80 = scmp.ne.s32.totalorder %s72, %s75
      %p81 = scmp.eq.s32.totalorder %s22, 0
      %p82 = por %p80, %p81
      %p83 = scmp.ne.s32.totalorder %s72, %s75
      %p84 = scmp.eq.s32.totalorder %s27, 1
      %p85 = por %p83, %p84
      %p86 = scmp.ne.s32.totalorder %s75, %s76
      %p87 = scmp.eq.s32.totalorder %s27, 0
      %p88 = por %p86, %p87
      %p89 = scmp.ne.s32.totalorder %s75, %s76
      %p90 = scmp.eq.s32.totalorder %s28, 1
      %p91 = por %p89, %p90
      %p93 = scmp.ne.s32.totalorder %s76, %s92
      %p94 = scmp.eq.s32.totalorder %s28, 0
      %p95 = por %p93, %p94
      %s96 = ssub.s32 %s29, %s41
      %s97 = ssub.s32 %s30, %s37
      %s98 = sor.u32 %s96, %s97
      %p99 = scmp.eq.s32.totalorder %s98, 0
      %s101 = sadd.s32 %s100, 1
      %s102 = scalar_select %p99, %s100, %s101
      %p105 = pneg %p99
      %p106 = scmp.eq.s32.totalorder %s22, 1
      %p107 = por %p105, %p106
      %p108 = scmp.ne.s32.totalorder %s100, %s103
      %p109 = scmp.eq.s32.totalorder %s22, 0
      %p110 = por %p108, %p109
      %p111 = scmp.ne.s32.totalorder %s100, %s103
      %p112 = scmp.eq.s32.totalorder %s27, 1
      %p113 = por %p111, %p112
      %p114 = scmp.ne.s32.totalorder %s103, %s104
      %p115 = scmp.eq.s32.totalorder %s27, 0
      %p116 = por %p114, %p115
      %p117 = scmp.ne.s32.totalorder %s103, %s104
      %p118 = scmp.eq.s32.totalorder %s28, 1
      %p119 = por %p117, %p118
      %p121 = scmp.ne.s32.totalorder %s104, %s120
      %p122 = scmp.eq.s32.totalorder %s28, 0
      %p123 = por %p121, %p122
      %s125 = sadd.s32 %s124, 1
      %p128 = scmp.eq.s32.totalorder %s22, 1
      %p129 = scmp.ne.s32.totalorder %s124, %s126
      %p130 = scmp.eq.s32.totalorder %s22, 0
      %p131 = por %p129, %p130
      %p132 = scmp.ne.s32.totalorder %s124, %s126
      %p133 = scmp.eq.s32.totalorder %s27, 1
      %p134 = por %p132, %p133
      %p135 = scmp.ne.s32.totalorder %s126, %s127
      %p136 = scmp.eq.s32.totalorder %s27, 0
      %p137 = por %p135, %p136
      %p138 = scmp.ne.s32.totalorder %s126, %s127
      %p139 = scmp.eq.s32.totalorder %s28, 1
      %p140 = por %p138, %p139
      %p142 = scmp.ne.s32.totalorder %s127, %s141
      %p143 = scmp.eq.s32.totalorder %s28, 0
      %p144 = por %p142, %p143
      %s146 = sadd.s32 %s145, 1
      %p149 = scmp.eq.s32.totalorder %s22, 1
      %p150 = scmp.ne.s32.totalorder %s145, %s147
      %p151 = scmp.eq.s32.totalorder %s22, 0
      %p152 = por %p150, %p151
      %p153 = scmp.ne.s32.totalorder %s145, %s147
      %p154 = scmp.eq.s32.totalorder %s27, 1
      %p155 = por %p153, %p154
      %p156 = scmp.ne.s32.totalorder %s147, %s148
      %p157 = scmp.eq.s32.totalorder %s27, 0
      %p158 = por %p156, %p157
      %p159 = scmp.ne.s32.totalorder %s147, %s148
      %p160 = scmp.eq.s32.totalorder %s28, 1
      %p161 = por %p159, %p160
      %p163 = scmp.ne.s32.totalorder %s148, %s162
      %p164 = scmp.eq.s32.totalorder %s28, 0
      %p165 = por %p163, %p164
      %s167 = sadd.s32 %s166, 1
      %p170 = scmp.eq.s32.totalorder %s22, 1
      %p171 = scmp.ne.s32.totalorder %s166, %s168
      %p172 = scmp.eq.s32.totalorder %s22, 0
      %p173 = por %p171, %p172
      %p174 = scmp.ne.s32.totalorder %s166, %s168
      %p175 = scmp.eq.s32.totalorder %s27, 1
      %p176 = por %p174, %p175
      %p177 = scmp.ne.s32.totalorder %s168, %s169
      %p178 = scmp.eq.s32.totalorder %s27, 0
      %p179 = por %p177, %p178
      %p180 = scmp.ne.s32.totalorder %s168, %s169
      %p181 = scmp.eq.s32.totalorder %s28, 1
      %p182 = por %p180, %p181
      %p184 = scmp.ne.s32.totalorder %s169, %s183
      %p185 = scmp.eq.s32.totalorder %s28, 0
      %p186 = por %p184, %p185
      %s188 = sadd.s32 %s187, 1
      %p191 = scmp.eq.s32.totalorder %s22, 1
      %p192 = scmp.ne.s32.totalorder %s187, %s189
      %p193 = scmp.eq.s32.totalorder %s22, 0
      %p194 = por %p192, %p193
      %p195 = scmp.ne.s32.totalorder %s187, %s189
      %p196 = scmp.eq.s32.totalorder %s27, 1
      %p197 = por %p195, %p196
      %p198 = scmp.ne.s32.totalorder %s189, %s190
      %p199 = scmp.eq.s32.totalorder %s27, 0
      %p200 = por %p198, %p199
      %p201 = scmp.ne.s32.totalorder %s189, %s190
      %p202 = scmp.eq.s32.totalorder %s28, 1
      %p203 = por %p201, %p202
      %p205 = scmp.ne.s32.totalorder %s190, %s204
      %p206 = scmp.eq.s32.totalorder %s28, 0
      %p207 = por %p205, %p206
      %s209 = sadd.s32 %s208, 1
      %p212 = scmp.eq.s32.totalorder %s22, 1
      %p213 = scmp.ne.s32.totalorder %s208, %s210
      %p214 = scmp.eq.s32.totalorder %s22, 0
      %p215 = por %p213, %p214
      %p216 = scmp.ne.s32.totalorder %s208, %s210
      %p217 = scmp.eq.s32.totalorder %s27, 1
      %p218 = por %p216, %p217
      %p219 = scmp.ne.s32.totalorder %s210, %s211
      %p220 = scmp.eq.s32.totalorder %s27, 0
      %p221 = por %p219, %p220
      %p222 = scmp.ne.s32.totalorder %s210, %s211
      %p223 = scmp.eq.s32.totalorder %s28, 1
      %p224 = por %p222, %p223
      %p226 = scmp.ne.s32.totalorder %s211, %s225
      %p227 = scmp.eq.s32.totalorder %s28, 0
      %p228 = por %p226, %p227
      %s230 = sadd.s32 %s229, 1
      %p233 = scmp.eq.s32.totalorder %s22, 1
      %p234 = scmp.ne.s32.totalorder %s229, %s231
      %p235 = scmp.eq.s32.totalorder %s22, 0
      %p236 = por %p234, %p235
      %p237 = scmp.ne.s32.totalorder %s229, %s231
      %p238 = scmp.eq.s32.totalorder %s27, 1
      %p239 = por %p237, %p238
      %p240 = scmp.ne.s32.totalorder %s231, %s232
      %p241 = scmp.eq.s32.totalorder %s27, 0
      %p242 = por %p240, %p241
      %p243 = scmp.ne.s32.totalorder %s231, %s232
      %p244 = scmp.eq.s32.totalorder %s28, 1
      %p245 = por %p243, %p244
      %p247 = scmp.ne.s32.totalorder %s232, %s246
      %p248 = scmp.eq.s32.totalorder %s28, 0
      %p249 = por %p247, %p248
      %s251 = sadd.s32 %s250, 1
      %p254 = scmp.eq.s32.totalorder %s22, 1
      %p255 = scmp.ne.s32.totalorder %s250, %s252
      %p256 = scmp.eq.s32.totalorder %s22, 0
      %p257 = por %p255, %p256
      %p258 = scmp.ne.s32.totalorder %s250, %s252
      %p259 = scmp.eq.s32.totalorder %s27, 1
      %p260 = por %p258, %p259
      %p261 = scmp.ne.s32.totalorder %s252, %s253
      %p262 = scmp.eq.s32.totalorder %s27, 0
      %p263 = por %p261, %p262
      %p264 = scmp.ne.s32.totalorder %s252, %s253
      %p265 = scmp.eq.s32.totalorder %s28, 1
      %p266 = por %p264, %p265
      %p268 = scmp.ne.s32.totalorder %s253, %s267
      %p269 = scmp.eq.s32.totalorder %s28, 0
      %p270 = por %p268, %p269
      %s272 = sadd.s32 %s271, 1
      %p275 = scmp.eq.s32.totalorder %s22, 1
      %p276 = scmp.ne.s32.totalorder %s271, %s273
      %p277 = scmp.eq.s32.totalorder %s22, 0
      %p278 = por %p276, %p277
      %p279 = scmp.ne.s32.totalorder %s271, %s273
      %p280 = scmp.eq.s32.totalorder %s27, 1
      %p281 = por %p279, %p280
      %p282 = scmp.ne.s32.totalorder %s273, %s274
      %p283 = scmp.eq.s32.totalorder %s27, 0
      %p284 = por %p282, %p283
      %p285 = scmp.ne.s32.totalorder %s273, %s274
      %p286 = scmp.eq.s32.totalorder %s28, 1
      %p287 = por %p285, %p286
      %p289 = scmp.ne.s32.totalorder %s274, %s288
      %p290 = scmp.eq.s32.totalorder %s28, 0
      %p291 = por %p289, %p290
      %s293 = sadd.s32 %s292, 1
      %p296 = scmp.eq.s32.totalorder %s22, 1
      %p297 = scmp.ne.s32.totalorder %s292, %s294
      %p298 = scmp.eq.s32.totalorder %s22, 0
      %p299 = por %p297, %p298
      %p300 = scmp.ne.s32.totalorder %s292, %s294
      %p301 = scmp.eq.s32.totalorder %s27, 1
      %p302 = por %p300, %p301
      %p303 = scmp.ne.s32.totalorder %s294, %s295
      %p304 = scmp.eq.s32.totalorder %s27, 0
      %p305 = por %p303, %p304
      %p306 = scmp.ne.s32.totalorder %s294, %s295
      %p307 = scmp.eq.s32.totalorder %s28, 1
      %p308 = por %p306, %p307
      %p310 = scmp.ne.s32.totalorder %s295, %s309
      %p311 = scmp.eq.s32.totalorder %s28, 0
      %p312 = por %p310, %p311
      %s314 = sadd.s32 %s313, 1
      %p317 = scmp.eq.s32.totalorder %s22, 1
      %p318 = scmp.ne.s32.totalorder %s313, %s315
      %p319 = scmp.eq.s32.totalorder %s22, 0
      %p320 = por %p318, %p319
      %p321 = scmp.ne.s32.totalorder %s313, %s315
      %p322 = scmp.eq.s32.totalorder %s27, 1
      %p323 = por %p321, %p322
      %p324 = scmp.ne.s32.totalorder %s315, %s316
      %p325 = scmp.eq.s32.totalorder %s27, 0
      %p326 = por %p324, %p325
      %p327 = scmp.ne.s32.totalorder %s315, %s316
      %p328 = scmp.eq.s32.totalorder %s28, 1
      %p329 = por %p327, %p328
      %p331 = scmp.ne.s32.totalorder %s316, %s330
      %p332 = scmp.eq.s32.totalorder %s28, 0
      %p333 = por %p331, %p332
      %s334 = ssub.s32 %s29, %s41
      %s335 = ssub.s32 %s30, %s37
      %s336 = sor.u32 %s334, %s335
      %p337 = scmp.eq.s32.totalorder %s336, 0
      %s339 = sadd.s32 %s338, 1
      %s340 = scalar_select %p337, %s338, %s339
      %p343 = pneg %p337
      %p344 = scmp.eq.s32.totalorder %s22, 1
      %p345 = por %p343, %p344
      %p346 = scmp.ne.s32.totalorder %s338, %s341
      %p347 = scmp.eq.s32.totalorder %s22, 0
      %p348 = por %p346, %p347
      %p349 = scmp.ne.s32.totalorder %s338, %s341
      %p350 = scmp.eq.s32.totalorder %s27, 1
      %p351 = por %p349, %p350
      %p352 = scmp.ne.s32.totalorder %s341, %s342
      %p353 = scmp.eq.s32.totalorder %s27, 0
      %p354 = por %p352, %p353
      %p355 = scmp.ne.s32.totalorder %s341, %s342
      %p356 = scmp.eq.s32.totalorder %s28, 1
      %p357 = por %p355, %p356
      %p359 = scmp.ne.s32.totalorder %s342, %s358
      %p360 = scmp.eq.s32.totalorder %s28, 0
      %p361 = por %p359, %p360
      %p362 = scmp.le.s32.totalorder 1, %s22
      %p363 = scmp.lt.s32.totalorder %s22, 3
      %p364 = pnand %p362, %p363
      %p365 = pneg %p364
      // Predicated region
      $region9: #{tpu_custom_call.1} parent=5 // pred_check
        _
      $region10: #{tpu_custom_call.1} parent=5 // pred_check_branch
        %367 = sbr.rel (%p364) target = $region12
      $region11: #{tpu_custom_call.1} parent=5 // pred_region
        %s368 = ssub.s32 %s22, 1
        // Predicated region
        $region13: #{tpu_custom_call.1} parent=11 // pred_check
          %p369 = pneg %p137
        $region14: #{tpu_custom_call.1} parent=11 // pred_check_branch
          %371 = sbr.rel (%p369) target = $region16
        $region15: #{tpu_custom_call.1} parent=11 // pred_region
          _
        $region16: #{tpu_custom_call.1} parent=11 // pred_fallthru
          _
        // Predicated region
        $region17: #{tpu_custom_call.1} parent=11 // pred_check
          %p372 = pneg %p158
        $region18: #{tpu_custom_call.1} parent=11 // pred_check_branch
          %374 = sbr.rel (%p372) target = $region20
        $region19: #{tpu_custom_call.1} parent=11 // pred_region
          _
        $region20: #{tpu_custom_call.1} parent=11 // pred_fallthru
          _
        // Predicated region
        $region21: #{tpu_custom_call.1} parent=11 // pred_check
          %p375 = pneg %p179
        $region22: #{tpu_custom_call.1} parent=11 // pred_check_branch
          %377 = sbr.rel (%p375) target = $region24
        $region23: #{tpu_custom_call.1} parent=11 // pred_region
          _
        $region24: #{tpu_custom_call.1} parent=11 // pred_fallthru
          _
        // Predicated region
        $region25: #{tpu_custom_call.1} parent=11 // pred_check
          %p378 = pneg %p200
        $region26: #{tpu_custom_call.1} parent=11 // pred_check_branch
          %380 = sbr.rel (%p378) target = $region28
        $region27: #{tpu_custom_call.1} parent=11 // pred_region
          _
        $region28: #{tpu_custom_call.1} parent=11 // pred_fallthru
          _
        // Predicated region
        $region29: #{tpu_custom_call.1} parent=11 // pred_check
          %p381 = pneg %p221
        $region30: #{tpu_custom_call.1} parent=11 // pred_check_branch
          %383 = sbr.rel (%p381) target = $region32
        $region31: #{tpu_custom_call.1} parent=11 // pred_region
          _
        $region32: #{tpu_custom_call.1} parent=11 // pred_fallthru
          _
        // Predicated region
        $region33: #{tpu_custom_call.1} parent=11 // pred_check
          %p384 = pneg %p242
        $region34: #{tpu_custom_call.1} parent=11 // pred_check_branch
          %386 = sbr.rel (%p384) target = $region36
        $region35: #{tpu_custom_call.1} parent=11 // pred_region
          _
        $region36: #{tpu_custom_call.1} parent=11 // pred_fallthru
          _
        // Predicated region
        $region37: #{tpu_custom_call.1} parent=11 // pred_check
          %p387 = pneg %p263
        $region38: #{tpu_custom_call.1} parent=11 // pred_check_branch
          %389 = sbr.rel (%p387) target = $region40
        $region39: #{tpu_custom_call.1} parent=11 // pred_region
          _
        $region40: #{tpu_custom_call.1} parent=11 // pred_fallthru
          _
        // Predicated region
        $region41: #{tpu_custom_call.1} parent=11 // pred_check
          %p390 = pneg %p284
        $region42: #{tpu_custom_call.1} parent=11 // pred_check_branch
          %392 = sbr.rel (%p390) target = $region44
        $region43: #{tpu_custom_call.1} parent=11 // pred_region
          _
        $region44: #{tpu_custom_call.1} parent=11 // pred_fallthru
          _
        // Predicated region
        $region45: #{tpu_custom_call.1} parent=11 // pred_check
          %p393 = pneg %p305
        $region46: #{tpu_custom_call.1} parent=11 // pred_check_branch
          %395 = sbr.rel (%p393) target = $region48
        $region47: #{tpu_custom_call.1} parent=11 // pred_region
          _
        $region48: #{tpu_custom_call.1} parent=11 // pred_fallthru
          _
        // Predicated region
        $region49: #{tpu_custom_call.1} parent=11 // pred_check
          %p396 = pneg %p326
        $region50: #{tpu_custom_call.1} parent=11 // pred_check_branch
          %398 = sbr.rel (%p396) target = $region52
        $region51: #{tpu_custom_call.1} parent=11 // pred_region
          _
        $region52: #{tpu_custom_call.1} parent=11 // pred_fallthru
          _
      $region12: #{tpu_custom_call.1} parent=5 // pred_fallthru
        _
      %p399 = scmp.lt.s32.totalorder %s22, 2
      // Predicated region
      $region53: #{tpu_custom_call.1} parent=5 // pred_check
        %p400 = pneg %p399
      $region54: #{tpu_custom_call.1} parent=5 // pred_check_branch
        %402 = sbr.rel (%p400) target = $region56
      $region55: #{tpu_custom_call.1} parent=5 // pred_region
        // Predicated region
        $region57: #{tpu_custom_call.1} parent=55 // pred_check
          %p403 = pneg %p54
        $region58: #{tpu_custom_call.1} parent=55 // pred_check_branch
          %405 = sbr.rel (%p403) target = $region60
        $region59: #{tpu_custom_call.1} parent=55 // pred_region
          %p406 = scmp.lt.s32.totalorder %s29, 1
          %s407 = scalar_select %p406, %s29, 1
          %s408 = smul.addr %s407, 4
          %s409 = smul.addr %s408, 8
          %s410 = scalar_lea.vmem %s0, %s409
        $region60: #{tpu_custom_call.1} parent=55 // pred_fallthru
          _
        // Predicated region
        $region61: #{tpu_custom_call.1} parent=55 // pred_check
          %p411 = pneg %p82
        $region62: #{tpu_custom_call.1} parent=55 // pred_check_branch
          %413 = sbr.rel (%p411) target = $region64
        $region63: #{tpu_custom_call.1} parent=55 // pred_region
          %p414 = scmp.lt.s32.totalorder %s29, 1
          %s415 = scalar_select %p414, %s29, 1
          %p416 = scmp.lt.s32.totalorder %s30, 0
          %s417 = scalar_select %p416, %s30, 0
          %s418 = smul.addr %s415, 4
          %s419 = sadd.s32 %s417, %s418
          %s420 = smul.addr %s419, 8
          %s421 = scalar_lea.vmem %s1, %s420
        $region64: #{tpu_custom_call.1} parent=55 // pred_fallthru
          _
        // Predicated region
        $region65: #{tpu_custom_call.1} parent=55 // pred_check
          %p422 = pneg %p110
        $region66: #{tpu_custom_call.1} parent=55 // pred_check_branch
          %424 = sbr.rel (%p422) target = $region68
        $region67: #{tpu_custom_call.1} parent=55 // pred_region
          %p425 = scmp.lt.s32.totalorder %s29, 1
          %s426 = scalar_select %p425, %s29, 1
          %p427 = scmp.lt.s32.totalorder %s30, 0
          %s428 = scalar_select %p427, %s30, 0
          %s429 = sadd.s32 %s428, %s426
          %s430 = smul.addr %s429, 2
          %s431 = scalar_lea.vmem %s2, %s430
        $region68: #{tpu_custom_call.1} parent=55 // pred_fallthru
          _
      $region56: #{tpu_custom_call.1} parent=5 // pred_fallthru
        _
      %p432 = scmp.le.s32.totalorder 1, %s22
      %p433 = scmp.lt.s32.totalorder %s22, 3
      %p434 = pnand %p432, %p433
      %p435 = pneg %p434
      // Predicated region
      $region69: #{tpu_custom_call.1} parent=5 // pred_check
        _
      $region70: #{tpu_custom_call.1} parent=5 // pred_check_branch
        %437 = sbr.rel (%p434) target = $region72
      $region71: #{tpu_custom_call.1} parent=5 // pred_region
        %s438 = ssub.s32 %s22, 1
        %p439 = scmp.lt.s32.totalorder %s31, 1
        %s440 = scalar_select %p439, %s31, 1
        %s441 = smul.addr %s440, 4
        %s442 = smul.addr %s441, 8
        %s443 = scalar_lea.vmem %s0, %s442
        %p444 = pneg %p60
        %p445 = pneg %p57
        %p446 = scmp.lt.s32.totalorder %s31, 1
        %s447 = scalar_select %p446, %s31, 1
        %p448 = scmp.lt.s32.totalorder %s32, 0
        %s449 = scalar_select %p448, %s32, 0
        %s450 = smul.addr %s447, 4
        %s451 = sadd.s32 %s449, %s450
        %s452 = smul.addr %s451, 8
        %s453 = scalar_lea.vmem %s1, %s452
        %p454 = pneg %p88
        %p455 = pneg %p85
        %p456 = scmp.lt.s32.totalorder %s31, 1
        %s457 = scalar_select %p456, %s31, 1
        %p458 = scmp.lt.s32.totalorder %s32, 0
        %s459 = scalar_select %p458, %s32, 0
        %s460 = sadd.s32 %s459, %s457
        %s461 = smul.addr %s460, 2
        %s462 = scalar_lea.vmem %s2, %s461
        %p463 = pneg %p116
        %p464 = pneg %p113
        %p465 = pneg %p137
        %p466 = pneg %p134
        %p467 = pneg %p158
        %p468 = pneg %p155
        %p469 = pneg %p179
        %p470 = pneg %p176
        %p471 = pneg %p200
        %p472 = pneg %p197
        %p473 = pneg %p221
        %p474 = pneg %p218
        %p475 = pneg %p242
        %p476 = pneg %p239
        %p477 = pneg %p263
        %p478 = pneg %p260
        %p479 = pneg %p284
        %p480 = pneg %p281
        %p481 = pneg %p305
        %p482 = pneg %p302
        %p483 = pneg %p326
        %p484 = pneg %p323
        %p485 = pneg %p354
        %p486 = pneg %p351
        %s487 = sand.u32 %s341, 1
        %s488 = scalar_lea.sflag [#allocation7], %s487
        %s489 = sand.u32 %s341, 1
        %s490 = smul.addr %s489, 8
        %s491 = scalar_lea.vmem [#allocation6], %s490
        %p492 = scmp.lt.s32.totalorder %s31, 1
        %s493 = scalar_select %p492, %s31, 1
        %s494 = smul.addr %s493, 4
        %s495 = smul.addr %s494, 8
        %s496 = scalar_lea.vmem %s0, %s495
        %p497 = scmp.lt.s32.totalorder %s31, 1
        %s498 = scalar_select %p497, %s31, 1
        %p499 = scmp.lt.s32.totalorder %s32, 0
        %s500 = scalar_select %p499, %s32, 0
        %s501 = smul.addr %s498, 4
        %s502 = sadd.s32 %s500, %s501
        %s503 = smul.addr %s502, 8
        %s504 = scalar_lea.vmem %s1, %s503
        %p505 = scmp.lt.s32.totalorder %s31, 1
        %s506 = scalar_select %p505, %s31, 1
        %p507 = scmp.lt.s32.totalorder %s32, 0
        %s508 = scalar_select %p507, %s32, 0
        %s509 = sadd.s32 %s508, %s506
        %s510 = smul.addr %s509, 2
        %s511 = scalar_lea.vmem %s2, %s510
        %p514 = scmp.eq.s32.totalorder %s32, 0
        // Predicated region
        $region73: #{tpu_custom_call.1} parent=71 // pred_check
          %p515 = pneg %p514
        $region74: #{tpu_custom_call.1} parent=71 // pred_check_branch
          %517 = sbr.rel (%p515) target = $region76
        $region75: #{tpu_custom_call.1} parent=71 // pred_region
          %v518 = vld [vmem:[%s496] sm:$0xff]
          %v519 = vld [vmem:[%s496 + $0x8] sm:$0xff]
          %v520 = vld [vmem:[%s496 + $0x10] sm:$0xff]
          %v521 = vld [vmem:[%s496 + $0x18] sm:$0xff]
          %v522 = vld [vmem:[%s5] sm:$0xff]
          %v523 = vld [vmem:[%s5 + $0x8] sm:$0xff]
          %v524 = vld [vmem:[%s5 + $0x10] sm:$0xff]
          %v525 = vld [vmem:[%s5 + $0x18] sm:$0xff]
          %v526 = vld [vmem:[%s5 + $0x20] sm:$0xff]
          %v527 = vld [vmem:[%s5 + $0x28] sm:$0xff]
          %v528 = vld [vmem:[%s5 + $0x30] sm:$0xff]
          %v529 = vld [vmem:[%s5 + $0x38] sm:$0xff]
          %v530 = vld [vmem:[%s6] sm:$0xff]
          %v531 = vld [vmem:[%s6 + $0x8] sm:$0xff]
          %v532 = vld [vmem:[%s6 + $0x10] sm:$0xff]
          %v533 = vld [vmem:[%s6 + $0x18] sm:$0xff]
          %v534 = vld [vmem:[%s6 + $0x20] sm:$0xff]
          %v535 = vld [vmem:[%s6 + $0x28] sm:$0xff]
          %v536 = vld [vmem:[%s6 + $0x30] sm:$0xff]
          %v537 = vld [vmem:[%s6 + $0x38] sm:$0xff]
          %539 = vset.pattern.permute.xlu0 0
          %540 = vperm.xlu0 %539, %v530
          %v541 = vpop.permute.xlu0 %540
          %544 = vset.pattern.permute.xlu0 0
          %545 = vperm.xlu0 %544, %v531
          %v546 = vpop.permute.xlu0 %545
          %549 = vset.pattern.permute.xlu0 0
          %550 = vperm.xlu0 %549, %v532
          %v551 = vpop.permute.xlu0 %550
          %554 = vset.pattern.permute.xlu0 0
          %555 = vperm.xlu0 %554, %v533
          %v556 = vpop.permute.xlu0 %555
          %559 = vset.pattern.permute.xlu0 0
          %560 = vperm.xlu0 %559, %v534
          %v561 = vpop.permute.xlu0 %560
          %564 = vset.pattern.permute.xlu0 0
          %565 = vperm.xlu0 %564, %v535
          %v566 = vpop.permute.xlu0 %565
          %569 = vset.pattern.permute.xlu0 0
          %570 = vperm.xlu0 %569, %v536
          %v571 = vpop.permute.xlu0 %570
          %574 = vset.pattern.permute.xlu0 0
          %575 = vperm.xlu0 %574, %v537
          %v576 = vpop.permute.xlu0 %575
          %vm578 = vcmask 261120
          %v580 = vsel %vm578, %v522, 0
          %v583 = vsel %vm578, %v523, 0
          %v586 = vsel %vm578, %v524, 0
          %v589 = vsel %vm578, %v525, 0
          %v592 = vsel %vm578, %v526, 0
          %v595 = vsel %vm578, %v527, 0
          %v598 = vsel %vm578, %v528, 0
          %v601 = vsel %vm578, %v529, 0
          %603 = vmatprep.subr.mxu0 0.0
          %604 = vmatpush1.msra.mxu0 0.0
          %605 = vmatprep.subr.mxu0 0.0
          %606 = vmatpush1.msra.mxu0 0.0
          %607 = vmatprep.subr.mxu0 0.0
          %608 = vmatpush1.msra.mxu0 0.0
          %609 = vmatprep.subr.mxu0 0.0
          %610 = vmatpush1.msra.mxu0 0.0
          %611 = vmatprep.subr.mxu0 0.0
          %612 = vmatpush1.msra.mxu0 0.0
          %613 = vmatprep.subr.mxu0 0.0
          %614 = vmatpush1.msra.mxu0 0.0
          %615 = vmatprep.subr.mxu0 0.0
          %616 = vmatpush1.msra.mxu0 0.0
          %617 = vmatprep.subr.mxu0 0.0
          %618 = vmatpush1.msra.mxu0 0.0
          %619 = vmatprep.subr.mxu0 0.0
          %620 = vmatpush1.msra.mxu0 0.0
          %621 = vmatprep.subr.mxu0 0.0
          %622 = vmatpush1.msra.mxu0 0.0
          %623 = vmatprep.subr.mxu0 0.0
          %624 = vmatpush1.msra.mxu0 0.0
          %625 = vmatprep.subr.mxu0 0.0
          %626 = vmatpush1.msra.mxu0 0.0
          %627 = vmatprep.subr.mxu0 0.0
          %628 = vmatpush1.msra.mxu0 %v521
          %629 = vmatprep.subr.mxu0 0.0
          %630 = vmatpush1.msra.mxu0 %v520
          %631 = vmatprep.subr.mxu0 0.0
          %632 = vmatpush1.msra.mxu0 %v519
          %633 = vmatprep.subr.mxu0 0.0
          %634 = vmatpush1.msra.mxu0 %v518
          %635 = vmatprep.subr.mxu0 0.0
          %636 = vmatpush2.msra.mxu0 0.0
          %637 = vmatprep.subr.mxu0 0.0
          %638 = vmatpush2.msra.mxu0 0.0
          %639 = vmatprep.subr.mxu0 0.0
          %640 = vmatpush2.msra.mxu0 0.0
          %641 = vmatprep.subr.mxu0 0.0
          %642 = vmatpush2.msra.mxu0 0.0
          %643 = vmatprep.subr.mxu0 0.0
          %644 = vmatpush2.msra.mxu0 0.0
          %645 = vmatprep.subr.mxu0 0.0
          %646 = vmatpush2.msra.mxu0 0.0
          %647 = vmatprep.subr.mxu0 0.0
          %648 = vmatpush2.msra.mxu0 0.0
          %649 = vmatprep.subr.mxu0 0.0
          %650 = vmatpush2.msra.mxu0 0.0
          %651 = vmatprep.subr.mxu0 0.0
          %652 = vmatpush2.msra.mxu0 0.0
          %653 = vmatprep.subr.mxu0 0.0
          %654 = vmatpush2.msra.mxu0 0.0
          %655 = vmatprep.subr.mxu0 0.0
          %656 = vmatpush2.msra.mxu0 0.0
          %657 = vmatprep.subr.mxu0 0.0
          %658 = vmatpush2.msra.mxu0 0.0
          %659 = vmatprep.subr.mxu0 0.0
          %660 = vmatpush2.msra.mxu0 0.0
          %661 = vmatprep.subr.mxu0 0.0
          %662 = vmatpush2.msra.mxu0 0.0
          %663 = vmatprep.subr.mxu0 0.0
          %664 = vmatpush2.msra.mxu0 0.0
          %665 = vmatprep.subr.mxu0 0.0
          %666 = vmatpush2.msra.mxu0 0.0
          %667 = vmatprep.mubr.f32.mxu0 0.0
          %668 = vmatmul.mubr.f32.gmra.mxu0 %v580
          %v669 = vpop.f32.mrf.mxu0
          %v670 = vadd.f32 %v541, %v669
          %v671 = vpop.f32.mrf.mxu0
          %672 = vmatprep.mubr.f32.mxu0 0.0
          %673 = vmatmul.mubr.f32.gmra.mxu0 %v583
          %v674 = vpop.f32.mrf.mxu0
          %v675 = vadd.f32 %v546, %v674
          %v676 = vpop.f32.mrf.mxu0
          %677 = vmatprep.mubr.f32.mxu0 0.0
          %678 = vmatmul.mubr.f32.gmra.mxu0 %v586
          %v679 = vpop.f32.mrf.mxu0
          %v680 = vadd.f32 %v551, %v679
          %v681 = vpop.f32.mrf.mxu0
          %682 = vmatprep.mubr.f32.mxu0 0.0
          %683 = vmatmul.mubr.f32.gmra.mxu0 %v589
          %v684 = vpop.f32.mrf.mxu0
          %v685 = vadd.f32 %v556, %v684
          %v686 = vpop.f32.mrf.mxu0
          %687 = vmatprep.mubr.f32.mxu0 0.0
          %688 = vmatmul.mubr.f32.gmra.mxu0 %v592
          %v689 = vpop.f32.mrf.mxu0
          %v690 = vadd.f32 %v561, %v689
          %v691 = vpop.f32.mrf.mxu0
          %692 = vmatprep.mubr.f32.mxu0 0.0
          %693 = vmatmul.mubr.f32.gmra.mxu0 %v595
          %v694 = vpop.f32.mrf.mxu0
          %v695 = vadd.f32 %v566, %v694
          %v696 = vpop.f32.mrf.mxu0
          %697 = vmatprep.mubr.f32.mxu0 0.0
          %698 = vmatmul.mubr.f32.gmra.mxu0 %v598
          %v699 = vpop.f32.mrf.mxu0
          %v700 = vadd.f32 %v571, %v699
          %v701 = vpop.f32.mrf.mxu0
          %702 = vmatprep.mubr.f32.mxu0 0.0
          %703 = vmatmul.mubr.f32.gmra.mxu0 %v601
          %v704 = vpop.f32.mrf.mxu0
          %v705 = vadd.f32 %v576, %v704
          %v706 = vpop.f32.mrf.mxu0
          %707 = vdwg.mxu0
          %v708 = vld [vmem:[%s7] sm:$0xff]
          %v709 = vld [vmem:[%s7 + $0x8] sm:$0xff]
          %v710 = vld [vmem:[%s7 + $0x10] sm:$0xff]
          %v711 = vld [vmem:[%s7 + $0x18] sm:$0xff]
          %v712 = vld [vmem:[%s7 + $0x20] sm:$0xff]
          %v713 = vld [vmem:[%s7 + $0x28] sm:$0xff]
          %v714 = vld [vmem:[%s7 + $0x30] sm:$0xff]
          %v715 = vld [vmem:[%s7 + $0x38] sm:$0xff]
          %v716 = vld [vmem:[%s8] sm:$0xff]
          %v717 = vld [vmem:[%s8 + $0x8] sm:$0xff]
          %v718 = vld [vmem:[%s8 + $0x10] sm:$0xff]
          %v719 = vld [vmem:[%s8 + $0x18] sm:$0xff]
          %v720 = vld [vmem:[%s8 + $0x20] sm:$0xff]
          %v721 = vld [vmem:[%s8 + $0x28] sm:$0xff]
          %v722 = vld [vmem:[%s8 + $0x30] sm:$0xff]
          %v723 = vld [vmem:[%s8 + $0x38] sm:$0xff]
          %725 = vset.pattern.permute.xlu0 0
          %726 = vperm.xlu0 %725, %v716
          %v727 = vpop.permute.xlu0 %726
          %730 = vset.pattern.permute.xlu0 0
          %731 = vperm.xlu0 %730, %v717
          %v732 = vpop.permute.xlu0 %731
          %735 = vset.pattern.permute.xlu0 0
          %736 = vperm.xlu0 %735, %v718
          %v737 = vpop.permute.xlu0 %736
          %740 = vset.pattern.permute.xlu0 0
          %741 = vperm.xlu0 %740, %v719
          %v742 = vpop.permute.xlu0 %741
          %745 = vset.pattern.permute.xlu0 0
          %746 = vperm.xlu0 %745, %v720
          %v747 = vpop.permute.xlu0 %746
          %750 = vset.pattern.permute.xlu0 0
          %751 = vperm.xlu0 %750, %v721
          %v752 = vpop.permute.xlu0 %751
          %755 = vset.pattern.permute.xlu0 0
          %756 = vperm.xlu0 %755, %v722
          %v757 = vpop.permute.xlu0 %756
          %760 = vset.pattern.permute.xlu0 0
          %761 = vperm.xlu0 %760, %v723
          %v762 = vpop.permute.xlu0 %761
          %v765 = vsel %vm578, %v708, 0
          %v768 = vsel %vm578, %v709, 0
          %v771 = vsel %vm578, %v710, 0
          %v774 = vsel %vm578, %v711, 0
          %v777 = vsel %vm578, %v712, 0
          %v780 = vsel %vm578, %v713, 0
          %v783 = vsel %vm578, %v714, 0
          %v786 = vsel %vm578, %v715, 0
          %788 = vmatprep.subr.mxu0 0.0
          %789 = vmatpush1.msra.mxu0 0.0
          %790 = vmatprep.subr.mxu0 0.0
          %791 = vmatpush1.msra.mxu0 0.0
          %792 = vmatprep.subr.mxu0 0.0
          %793 = vmatpush1.msra.mxu0 0.0
          %794 = vmatprep.subr.mxu0 0.0
          %795 = vmatpush1.msra.mxu0 0.0
          %796 = vmatprep.subr.mxu0 0.0
          %797 = vmatpush1.msra.mxu0 0.0
          %798 = vmatprep.subr.mxu0 0.0
          %799 = vmatpush1.msra.mxu0 0.0
          %800 = vmatprep.subr.mxu0 0.0
          %801 = vmatpush1.msra.mxu0 0.0
          %802 = vmatprep.subr.mxu0 0.0
          %803 = vmatpush1.msra.mxu0 0.0
          %804 = vmatprep.subr.mxu0 0.0
          %805 = vmatpush1.msra.mxu0 0.0
          %806 = vmatprep.subr.mxu0 0.0
          %807 = vmatpush1.msra.mxu0 0.0
          %808 = vmatprep.subr.mxu0 0.0
          %809 = vmatpush1.msra.mxu0 0.0
          %810 = vmatprep.subr.mxu0 0.0
          %811 = vmatpush1.msra.mxu0 0.0
          %812 = vmatprep.subr.mxu0 0.0
          %813 = vmatpush1.msra.mxu0 %v521
          %814 = vmatprep.subr.mxu0 0.0
          %815 = vmatpush1.msra.mxu0 %v520
          %816 = vmatprep.subr.mxu0 0.0
          %817 = vmatpush1.msra.mxu0 %v519
          %818 = vmatprep.subr.mxu0 0.0
          %819 = vmatpush1.msra.mxu0 %v518
          %820 = vmatprep.subr.mxu0 0.0
          %821 = vmatpush2.msra.mxu0 0.0
          %822 = vmatprep.subr.mxu0 0.0
          %823 = vmatpush2.msra.mxu0 0.0
          %824 = vmatprep.subr.mxu0 0.0
          %825 = vmatpush2.msra.mxu0 0.0
          %826 = vmatprep.subr.mxu0 0.0
          %827 = vmatpush2.msra.mxu0 0.0
          %828 = vmatprep.subr.mxu0 0.0
          %829 = vmatpush2.msra.mxu0 0.0
          %830 = vmatprep.subr.mxu0 0.0
          %831 = vmatpush2.msra.mxu0 0.0
          %832 = vmatprep.subr.mxu0 0.0
          %833 = vmatpush2.msra.mxu0 0.0
          %834 = vmatprep.subr.mxu0 0.0
          %835 = vmatpush2.msra.mxu0 0.0
          %836 = vmatprep.subr.mxu0 0.0
          %837 = vmatpush2.msra.mxu0 0.0
          %838 = vmatprep.subr.mxu0 0.0
          %839 = vmatpush2.msra.mxu0 0.0
          %840 = vmatprep.subr.mxu0 0.0
          %841 = vmatpush2.msra.mxu0 0.0
          %842 = vmatprep.subr.mxu0 0.0
          %843 = vmatpush2.msra.mxu0 0.0
          %844 = vmatprep.subr.mxu0 0.0
          %845 = vmatpush2.msra.mxu0 0.0
          %846 = vmatprep.subr.mxu0 0.0
          %847 = vmatpush2.msra.mxu0 0.0
          %848 = vmatprep.subr.mxu0 0.0
          %849 = vmatpush2.msra.mxu0 0.0
          %850 = vmatprep.subr.mxu0 0.0
          %851 = vmatpush2.msra.mxu0 0.0
          %852 = vmatprep.mubr.f32.mxu0 0.0
          %853 = vmatmul.mubr.f32.gmra.mxu0 %v765
          %v854 = vpop.f32.mrf.mxu0
          %v855 = vadd.f32 %v727, %v854
          %v856 = vpop.f32.mrf.mxu0
          %857 = vmatprep.mubr.f32.mxu0 0.0
          %858 = vmatmul.mubr.f32.gmra.mxu0 %v768
          %v859 = vpop.f32.mrf.mxu0
          %v860 = vadd.f32 %v732, %v859
          %v861 = vpop.f32.mrf.mxu0
          %862 = vmatprep.mubr.f32.mxu0 0.0
          %863 = vmatmul.mubr.f32.gmra.mxu0 %v771
          %v864 = vpop.f32.mrf.mxu0
          %v865 = vadd.f32 %v737, %v864
          %v866 = vpop.f32.mrf.mxu0
          %867 = vmatprep.mubr.f32.mxu0 0.0
          %868 = vmatmul.mubr.f32.gmra.mxu0 %v774
          %v869 = vpop.f32.mrf.mxu0
          %v870 = vadd.f32 %v742, %v869
          %v871 = vpop.f32.mrf.mxu0
          %872 = vmatprep.mubr.f32.mxu0 0.0
          %873 = vmatmul.mubr.f32.gmra.mxu0 %v777
          %v874 = vpop.f32.mrf.mxu0
          %v875 = vadd.f32 %v747, %v874
          %v876 = vpop.f32.mrf.mxu0
          %877 = vmatprep.mubr.f32.mxu0 0.0
          %878 = vmatmul.mubr.f32.gmra.mxu0 %v780
          %v879 = vpop.f32.mrf.mxu0
          %v880 = vadd.f32 %v752, %v879
          %v881 = vpop.f32.mrf.mxu0
          %882 = vmatprep.mubr.f32.mxu0 0.0
          %883 = vmatmul.mubr.f32.gmra.mxu0 %v783
          %v884 = vpop.f32.mrf.mxu0
          %v885 = vadd.f32 %v757, %v884
          %v886 = vpop.f32.mrf.mxu0
          %887 = vmatprep.mubr.f32.mxu0 0.0
          %888 = vmatmul.mubr.f32.gmra.mxu0 %v786
          %v889 = vpop.f32.mrf.mxu0
          %v890 = vadd.f32 %v762, %v889
          %v891 = vpop.f32.mrf.mxu0
          %892 = vdwg.mxu0
          %vm893 = vcmask 64512
          %894 = vst.msk [vmem:[#allocation2] sm:$0xff] %vm893, %v670
          %895 = vst.msk [vmem:[#allocation2 + $0x8] sm:$0xff] %vm893, %v675
          %896 = vst.msk [vmem:[#allocation2 + $0x10] sm:$0xff] %vm893, %v680
          %897 = vst.msk [vmem:[#allocation2 + $0x18] sm:$0xff] %vm893, %v685
          %898 = vst.msk [vmem:[#allocation2 + $0x20] sm:$0xff] %vm893, %v690
          %899 = vst.msk [vmem:[#allocation2 + $0x28] sm:$0xff] %vm893, %v695
          %900 = vst.msk [vmem:[#allocation2 + $0x30] sm:$0xff] %vm893, %v700
          %901 = vst.msk [vmem:[#allocation2 + $0x38] sm:$0xff] %vm893, %v705
          %902 = vst.msk [vmem:[#allocation3] sm:$0xff] %vm893, %v855
          %903 = vst.msk [vmem:[#allocation3 + $0x8] sm:$0xff] %vm893, %v860
          %904 = vst.msk [vmem:[#allocation3 + $0x10] sm:$0xff] %vm893, %v865
          %905 = vst.msk [vmem:[#allocation3 + $0x18] sm:$0xff] %vm893, %v870
          %906 = vst.msk [vmem:[#allocation3 + $0x20] sm:$0xff] %vm893, %v875
          %907 = vst.msk [vmem:[#allocation3 + $0x28] sm:$0xff] %vm893, %v880
          %908 = vst.msk [vmem:[#allocation3 + $0x30] sm:$0xff] %vm893, %v885
          %909 = vst.msk [vmem:[#allocation3 + $0x38] sm:$0xff] %vm893, %v890
        $region76: #{tpu_custom_call.1} parent=71 // pred_fallthru
          _
        %v910 = vld [vmem:[%s504] sm:$0xff]
        %v911 = vld [vmem:[%s504 + $0x8] sm:$0xff]
        %v912 = vld [vmem:[%s504 + $0x10] sm:$0xff]
        %v913 = vld [vmem:[%s504 + $0x18] sm:$0xff]
        %v914 = vld [vmem:[%s3] sm:$0xff]
        %v915 = vld [vmem:[%s3 + $0x8] sm:$0xff]
        %v916 = vld [vmem:[%s3 + $0x10] sm:$0xff]
        %v917 = vld [vmem:[%s3 + $0x18] sm:$0xff]
        %v918 = vld [vmem:[%s3 + $0x20] sm:$0xff]
        %v919 = vld [vmem:[%s3 + $0x28] sm:$0xff]
        %v920 = vld [vmem:[%s3 + $0x30] sm:$0xff]
        %v921 = vld [vmem:[%s3 + $0x38] sm:$0xff]
        %v922 = vld [vmem:[%s4] sm:$0xff]
        %v923 = vld [vmem:[%s4 + $0x8] sm:$0xff]
        %v924 = vld [vmem:[%s4 + $0x10] sm:$0xff]
        %v925 = vld [vmem:[%s4 + $0x18] sm:$0xff]
        %v926 = vld [vmem:[%s4 + $0x20] sm:$0xff]
        %v927 = vld [vmem:[%s4 + $0x28] sm:$0xff]
        %v928 = vld [vmem:[%s4 + $0x30] sm:$0xff]
        %v929 = vld [vmem:[%s4 + $0x38] sm:$0xff]
        %931 = vset.pattern.permute.xlu0 0
        %932 = vperm.xlu0 %931, %v922
        %v933 = vpop.permute.xlu0 %932
        %936 = vset.pattern.permute.xlu0 0
        %937 = vperm.xlu0 %936, %v923
        %v938 = vpop.permute.xlu0 %937
        %941 = vset.pattern.permute.xlu0 0
        %942 = vperm.xlu0 %941, %v924
        %v943 = vpop.permute.xlu0 %942
        %946 = vset.pattern.permute.xlu0 0
        %947 = vperm.xlu0 %946, %v925
        %v948 = vpop.permute.xlu0 %947
        %951 = vset.pattern.permute.xlu0 0
        %952 = vperm.xlu0 %951, %v926
        %v953 = vpop.permute.xlu0 %952
        %956 = vset.pattern.permute.xlu0 0
        %957 = vperm.xlu0 %956, %v927
        %v958 = vpop.permute.xlu0 %957
        %961 = vset.pattern.permute.xlu0 0
        %962 = vperm.xlu0 %961, %v928
        %v963 = vpop.permute.xlu0 %962
        %966 = vset.pattern.permute.xlu0 0
        %967 = vperm.xlu0 %966, %v929
        %v968 = vpop.permute.xlu0 %967
        %vm970 = vcmask 261120
        %v972 = vsel %vm970, %v914, 0
        %v975 = vsel %vm970, %v915, 0
        %v978 = vsel %vm970, %v916, 0
        %v981 = vsel %vm970, %v917, 0
        %v984 = vsel %vm970, %v918, 0
        %v987 = vsel %vm970, %v919, 0
        %v990 = vsel %vm970, %v920, 0
        %v993 = vsel %vm970, %v921, 0
        %995 = vmatprep.subr.mxu0 0.0
        %996 = vmatpush1.msra.mxu0 0.0
        %997 = vmatprep.subr.mxu0 0.0
        %998 = vmatpush1.msra.mxu0 0.0
        %999 = vmatprep.subr.mxu0 0.0
        %1000 = vmatpush1.msra.mxu0 0.0
        %1001 = vmatprep.subr.mxu0 0.0
        %1002 = vmatpush1.msra.mxu0 0.0
        %1003 = vmatprep.subr.mxu0 0.0
        %1004 = vmatpush1.msra.mxu0 0.0
        %1005 = vmatprep.subr.mxu0 0.0
        %1006 = vmatpush1.msra.mxu0 0.0
        %1007 = vmatprep.subr.mxu0 0.0
        %1008 = vmatpush1.msra.mxu0 0.0
        %1009 = vmatprep.subr.mxu0 0.0
        %1010 = vmatpush1.msra.mxu0 0.0
        %1011 = vmatprep.subr.mxu0 0.0
        %1012 = vmatpush1.msra.mxu0 0.0
        %1013 = vmatprep.subr.mxu0 0.0
        %1014 = vmatpush1.msra.mxu0 0.0
        %1015 = vmatprep.subr.mxu0 0.0
        %1016 = vmatpush1.msra.mxu0 0.0
        %1017 = vmatprep.subr.mxu0 0.0
        %1018 = vmatpush1.msra.mxu0 0.0
        %1019 = vmatprep.subr.mxu0 0.0
        %1020 = vmatpush1.msra.mxu0 %v913
        %1021 = vmatprep.subr.mxu0 0.0
        %1022 = vmatpush1.msra.mxu0 %v912
        %1023 = vmatprep.subr.mxu0 0.0
        %1024 = vmatpush1.msra.mxu0 %v911
        %1025 = vmatprep.subr.mxu0 0.0
        %1026 = vmatpush1.msra.mxu0 %v910
        %1027 = vmatprep.subr.mxu0 0.0
        %1028 = vmatpush2.msra.mxu0 0.0
        %1029 = vmatprep.subr.mxu0 0.0
        %1030 = vmatpush2.msra.mxu0 0.0
        %1031 = vmatprep.subr.mxu0 0.0
        %1032 = vmatpush2.msra.mxu0 0.0
        %1033 = vmatprep.subr.mxu0 0.0
        %1034 = vmatpush2.msra.mxu0 0.0
        %1035 = vmatprep.subr.mxu0 0.0
        %1036 = vmatpush2.msra.mxu0 0.0
        %1037 = vmatprep.subr.mxu0 0.0
        %1038 = vmatpush2.msra.mxu0 0.0
        %1039 = vmatprep.subr.mxu0 0.0
        %1040 = vmatpush2.msra.mxu0 0.0
        %1041 = vmatprep.subr.mxu0 0.0
        %1042 = vmatpush2.msra.mxu0 0.0
        %1043 = vmatprep.subr.mxu0 0.0
        %1044 = vmatpush2.msra.mxu0 0.0
        %1045 = vmatprep.subr.mxu0 0.0
        %1046 = vmatpush2.msra.mxu0 0.0
        %1047 = vmatprep.subr.mxu0 0.0
        %1048 = vmatpush2.msra.mxu0 0.0
        %1049 = vmatprep.subr.mxu0 0.0
        %1050 = vmatpush2.msra.mxu0 0.0
        %1051 = vmatprep.subr.mxu0 0.0
        %1052 = vmatpush2.msra.mxu0 0.0
        %1053 = vmatprep.subr.mxu0 0.0
        %1054 = vmatpush2.msra.mxu0 0.0
        %1055 = vmatprep.subr.mxu0 0.0
        %1056 = vmatpush2.msra.mxu0 0.0
        %1057 = vmatprep.subr.mxu0 0.0
        %1058 = vmatpush2.msra.mxu0 0.0
        %1059 = vmatprep.mubr.f32.mxu0 0.0
        %1060 = vmatmul.mubr.f32.gmra.mxu0 %v972
        %v1061 = vpop.f32.mrf.mxu0
        %v1062 = vadd.f32 %v933, %v1061
        %v1063 = vpop.f32.mrf.mxu0
        %1064 = vmatprep.mubr.f32.mxu0 0.0
        %1065 = vmatmul.mubr.f32.gmra.mxu0 %v975
        %v1066 = vpop.f32.mrf.mxu0
        %v1067 = vadd.f32 %v938, %v1066
        %v1068 = vpop.f32.mrf.mxu0
        %1069 = vmatprep.mubr.f32.mxu0 0.0
        %1070 = vmatmul.mubr.f32.gmra.mxu0 %v978
        %v1071 = vpop.f32.mrf.mxu0
        %v1072 = vadd.f32 %v943, %v1071
        %v1073 = vpop.f32.mrf.mxu0
        %1074 = vmatprep.mubr.f32.mxu0 0.0
        %1075 = vmatmul.mubr.f32.gmra.mxu0 %v981
        %v1076 = vpop.f32.mrf.mxu0
        %v1077 = vadd.f32 %v948, %v1076
        %v1078 = vpop.f32.mrf.mxu0
        %1079 = vmatprep.mubr.f32.mxu0 0.0
        %1080 = vmatmul.mubr.f32.gmra.mxu0 %v984
        %v1081 = vpop.f32.mrf.mxu0
        %v1082 = vadd.f32 %v953, %v1081
        %v1083 = vpop.f32.mrf.mxu0
        %1084 = vmatprep.mubr.f32.mxu0 0.0
        %1085 = vmatmul.mubr.f32.gmra.mxu0 %v987
        %v1086 = vpop.f32.mrf.mxu0
        %v1087 = vadd.f32 %v958, %v1086
        %v1088 = vpop.f32.mrf.mxu0
        %1089 = vmatprep.mubr.f32.mxu0 0.0
        %1090 = vmatmul.mubr.f32.gmra.mxu0 %v990
        %v1091 = vpop.f32.mrf.mxu0
        %v1092 = vadd.f32 %v963, %v1091
        %v1093 = vpop.f32.mrf.mxu0
        %1094 = vmatprep.mubr.f32.mxu0 0.0
        %1095 = vmatmul.mubr.f32.gmra.mxu0 %v993
        %v1096 = vpop.f32.mrf.mxu0
        %v1097 = vadd.f32 %v968, %v1096
        %v1098 = vpop.f32.mrf.mxu0
        %1099 = vdwg.mxu0
        %v1100 = vmul.f32 %v1062, 0.35355338
        %v1101 = vmul.f32 %v1067, 0.35355338
        %v1102 = vmul.f32 %v1072, 0.35355338
        %v1103 = vmul.f32 %v1077, 0.35355338
        %v1104 = vmul.f32 %v1082, 0.35355338
        %v1105 = vmul.f32 %v1087, 0.35355338
        %v1106 = vmul.f32 %v1092, 0.35355338
        %v1107 = vmul.f32 %v1097, 0.35355338
        %vm1108 = vcmask 64512
        %1109 = vst.msk [vmem:[#allocation4] sm:$0xff] %vm1108, %v1100
        %1110 = vst.msk [vmem:[#allocation4 + $0x8] sm:$0xff] %vm1108, %v1101
        %1111 = vst.msk [vmem:[#allocation4 + $0x10] sm:$0xff] %vm1108, %v1102
        %1112 = vst.msk [vmem:[#allocation4 + $0x18] sm:$0xff] %vm1108, %v1103
        %1113 = vst.msk [vmem:[#allocation4 + $0x20] sm:$0xff] %vm1108, %v1104
        %1114 = vst.msk [vmem:[#allocation4 + $0x28] sm:$0xff] %vm1108, %v1105
        %1115 = vst.msk [vmem:[#allocation4 + $0x30] sm:$0xff] %vm1108, %v1106
        %1116 = vst.msk [vmem:[#allocation4 + $0x38] sm:$0xff] %vm1108, %v1107
        loop: start=0, step=1, limit=4
        $region77: #{tpu_custom_call.1} parent=71 // loop_pre_header
          _
        $region78: #{tpu_custom_call.1} parent=71 // loop_header
          %s1118 = sphi 0, %s1122
          %p1119 = scmp.ge.s32.totalorder %s1118, 4
        $region79: #{tpu_custom_call.1} parent=71 // loop_header_branch
          %1121 = sbr.rel (%p1119) target = $region83
        $region80: #{tpu_custom_call.1} parent=71 // loop_body
          %s1123 = smul.u32 %s1118, 16
          %s1124 = scalar_lea.vmem [#allocation4], %s1123
          %v1125 = vld [vmem:[%s1124] sm:$0xff]
          %v1126 = vld [vmem:[%s1124 + $0x8] sm:$0xff]
          %s1127 = scalar_lea.vmem [#allocation2], %s1123
          %v1128 = vld [vmem:[%s1127] sm:$0xff]
          %v1129 = vld [vmem:[%s1127 + $0x8] sm:$0xff]
          %s1130 = scalar_lea.vmem [#allocation3], %s1123
          %v1131 = vld [vmem:[%s1130] sm:$0xff]
          %v1132 = vld [vmem:[%s1130 + $0x8] sm:$0xff]
          %1133 = vxpose.xlu0.b32.start [1/16] %v1125, 128
          %1134 = vxpose.xlu0.b32.cont [2/16] %v1126, 128
          %1135 = vxpose.xlu0.b32.cont [3/16] 0.0, 128
          %1136 = vxpose.xlu0.b32.cont [4/16] 0.0, 128
          %1137 = vxpose.xlu0.b32.cont [5/16] 0.0, 128
          %1138 = vxpose.xlu0.b32.cont [6/16] 0.0, 128
          %1139 = vxpose.xlu0.b32.cont [7/16] 0.0, 128
          %1140 = vxpose.xlu0.b32.cont [8/16] 0.0, 128
          %1141 = vxpose.xlu0.b32.cont [9/16] 0.0, 128
          %1142 = vxpose.xlu0.b32.cont [10/16] 0.0, 128
          %1143 = vxpose.xlu0.b32.cont [11/16] 0.0, 128
          %1144 = vxpose.xlu0.b32.cont [12/16] 0.0, 128
          %1145 = vxpose.xlu0.b32.cont [13/16] 0.0, 128
          %1146 = vxpose.xlu0.b32.cont [14/16] 0.0, 128
          %1147 = vxpose.xlu0.b32.cont [15/16] 0.0, 128
          %1148 = vxpose.xlu0.b32.end [16/16] 0.0, 128
          %v1149 = vpop.trf.xlu0
          %v1150 = vpop.trf.xlu0
          %v1151 = vpop.trf.xlu0
          %v1152 = vpop.trf.xlu0
          %v1153 = vpop.trf.xlu0
          %v1154 = vpop.trf.xlu0
          %v1155 = vpop.trf.xlu0
          %v1156 = vpop.trf.xlu0
          %v1157 = vpop.trf.xlu0
          %v1158 = vpop.trf.xlu0
          %v1159 = vpop.trf.xlu0
          %v1160 = vpop.trf.xlu0
          %v1161 = vpop.trf.xlu0
          %v1162 = vpop.trf.xlu0
          %v1163 = vpop.trf.xlu0
          %v1164 = vpop.trf.xlu0
          %vm1165 = vcmask 130048
          %v1167 = vsel %vm1165, %v1149, 0
          %1169 = vmatprep.subr.mxu0 0.0
          %1170 = vmatpush1.msra.mxu0 0.0
          %1171 = vmatprep.subr.mxu0 0.0
          %1172 = vmatpush1.msra.mxu0 0.0
          %1173 = vmatprep.subr.mxu0 0.0
          %1174 = vmatpush1.msra.mxu0 0.0
          %1175 = vmatprep.subr.mxu0 0.0
          %1176 = vmatpush1.msra.mxu0 0.0
          %1177 = vmatprep.subr.mxu0 0.0
          %1178 = vmatpush1.msra.mxu0 0.0
          %1179 = vmatprep.subr.mxu0 0.0
          %1180 = vmatpush1.msra.mxu0 0.0
          %1181 = vmatprep.subr.mxu0 0.0
          %1182 = vmatpush1.msra.mxu0 0.0
          %1183 = vmatprep.subr.mxu0 0.0
          %1184 = vmatpush1.msra.mxu0 0.0
          %1185 = vmatprep.subr.mxu0 0.0
          %1186 = vmatpush1.msra.mxu0 0.0
          %1187 = vmatprep.subr.mxu0 0.0
          %1188 = vmatpush1.msra.mxu0 0.0
          %1189 = vmatprep.subr.mxu0 0.0
          %1190 = vmatpush1.msra.mxu0 0.0
          %1191 = vmatprep.subr.mxu0 0.0
          %1192 = vmatpush1.msra.mxu0 0.0
          %1193 = vmatprep.subr.mxu0 0.0
          %1194 = vmatpush1.msra.mxu0 0.0
          %1195 = vmatprep.subr.mxu0 0.0
          %1196 = vmatpush1.msra.mxu0 0.0
          %1197 = vmatprep.subr.mxu0 0.0
          %1198 = vmatpush1.msra.mxu0 %v1129
          %1199 = vmatprep.subr.mxu0 0.0
          %1200 = vmatpush1.msra.mxu0 %v1128
          %1201 = vmatprep.subr.mxu0 0.0
          %1202 = vmatpush2.msra.mxu0 0.0
          %1203 = vmatprep.subr.mxu0 0.0
          %1204 = vmatpush2.msra.mxu0 0.0
          %1205 = vmatprep.subr.mxu0 0.0
          %1206 = vmatpush2.msra.mxu0 0.0
          %1207 = vmatprep.subr.mxu0 0.0
          %1208 = vmatpush2.msra.mxu0 0.0
          %1209 = vmatprep.subr.mxu0 0.0
          %1210 = vmatpush2.msra.mxu0 0.0
          %1211 = vmatprep.subr.mxu0 0.0
          %1212 = vmatpush2.msra.mxu0 0.0
          %1213 = vmatprep.subr.mxu0 0.0
          %1214 = vmatpush2.msra.mxu0 0.0
          %1215 = vmatprep.subr.mxu0 0.0
          %1216 = vmatpush2.msra.mxu0 0.0
          %1217 = vmatprep.subr.mxu0 0.0
          %1218 = vmatpush2.msra.mxu0 0.0
          %1219 = vmatprep.subr.mxu0 0.0
          %1220 = vmatpush2.msra.mxu0 0.0
          %1221 = vmatprep.subr.mxu0 0.0
          %1222 = vmatpush2.msra.mxu0 0.0
          %1223 = vmatprep.subr.mxu0 0.0
          %1224 = vmatpush2.msra.mxu0 0.0
          %1225 = vmatprep.subr.mxu0 0.0
          %1226 = vmatpush2.msra.mxu0 0.0
          %1227 = vmatprep.subr.mxu0 0.0
          %1228 = vmatpush2.msra.mxu0 0.0
          %1229 = vmatprep.subr.mxu0 0.0
          %1230 = vmatpush2.msra.mxu0 0.0
          %1231 = vmatprep.subr.mxu0 0.0
          %1232 = vmatpush2.msra.mxu0 0.0
          %1233 = vmatprep.mubr.f32.mxu0 0.0
          %1234 = vmatmul.mubr.f32.gmra.mxu0 %v1167
          %v1235 = vpop.f32.mrf.mxu0
          %v1236 = vadd.f32 0.0, %v1235
          %v1237 = vpop.f32.mrf.mxu0
          %1238 = vdwg.mxu0
          %v1239 = vld [vmem:[%s511] sm:$0x3]
          %vm1240 = vnez %v1239
          %v1241 = vsel %vm1240, 16843009, 0
          %v1242 = vunpack.c.0.s8 %v1241
          %vm1243 = vcmp.ne.s32.totalorder %v1242, 0
          %v1244 = vsel %vm1243, -1e+09, %v1236
          %v1245 = vsel %vm1108, %v1244, -inf
          %1246 = vmax.xlane.f32.xlu0 %v1245
          %v1247 = vpop.xlane.xlu0 %1246
          %v1248 = vsub.f32 %v1244, %v1247
          %v1249 = vmul.f32 %v1248, 1.442695
          %v1250 = vpow.pop %v1249
          %v1251 = vsel %vm1108, %v1250, 0.0
          %1252 = vadd.xlane.f32.xlu0 %v1251
          %v1253 = vpop.xlane.xlu0 %1252
          %v1254 = vrcp.pop %v1253
          %v1255 = vmul.f32 %v1250, %v1254
          %v1257 = vsel %vm1108, %v1131, 0
          %v1260 = vsel %vm1108, %v1132, 0
          %v1263 = vsel %vm1108, %v1255, 0
          %1265 = vmatprep.subr.mxu0 0.0
          %1266 = vmatpush1.xpose.msra.mxu0 0.0
          %1267 = vmatprep.subr.mxu0 0.0
          %1268 = vmatpush1.xpose.msra.mxu0 0.0
          %1269 = vmatprep.subr.mxu0 0.0
          %1270 = vmatpush1.xpose.msra.mxu0 0.0
          %1271 = vmatprep.subr.mxu0 0.0
          %1272 = vmatpush1.xpose.msra.mxu0 0.0
          %1273 = vmatprep.subr.mxu0 0.0
          %1274 = vmatpush1.xpose.msra.mxu0 0.0
          %1275 = vmatprep.subr.mxu0 0.0
          %1276 = vmatpush1.xpose.msra.mxu0 0.0
          %1277 = vmatprep.subr.mxu0 0.0
          %1278 = vmatpush1.xpose.msra.mxu0 0.0
          %1279 = vmatprep.subr.mxu0 0.0
          %1280 = vmatpush1.xpose.msra.mxu0 0.0
          %1281 = vmatprep.subr.mxu0 0.0
          %1282 = vmatpush1.xpose.msra.mxu0 0.0
          %1283 = vmatprep.subr.mxu0 0.0
          %1284 = vmatpush1.xpose.msra.mxu0 0.0
          %1285 = vmatprep.subr.mxu0 0.0
          %1286 = vmatpush1.xpose.msra.mxu0 0.0
          %1287 = vmatprep.subr.mxu0 0.0
          %1288 = vmatpush1.xpose.msra.mxu0 0.0
          %1289 = vmatprep.subr.mxu0 0.0
          %1290 = vmatpush1.xpose.msra.mxu0 0.0
          %1291 = vmatprep.subr.mxu0 0.0
          %1292 = vmatpush1.xpose.msra.mxu0 0.0
          %1293 = vmatprep.subr.mxu0 0.0
          %1294 = vmatpush1.xpose.msra.mxu0 0.0
          %1295 = vmatprep.subr.mxu0 0.0
          %1296 = vmatpush1.xpose.msra.mxu0 %v1263
          %1297 = vmatprep.subr.mxu0 0.0
          %1298 = vmatpush2.xpose.msra.mxu0 0.0
          %1299 = vmatprep.subr.mxu0 0.0
          %1300 = vmatpush2.xpose.msra.mxu0 0.0
          %1301 = vmatprep.subr.mxu0 0.0
          %1302 = vmatpush2.xpose.msra.mxu0 0.0
          %1303 = vmatprep.subr.mxu0 0.0
          %1304 = vmatpush2.xpose.msra.mxu0 0.0
          %1305 = vmatprep.subr.mxu0 0.0
          %1306 = vmatpush2.xpose.msra.mxu0 0.0
          %1307 = vmatprep.subr.mxu0 0.0
          %1308 = vmatpush2.xpose.msra.mxu0 0.0
          %1309 = vmatprep.subr.mxu0 0.0
          %1310 = vmatpush2.xpose.msra.mxu0 0.0
          %1311 = vmatprep.subr.mxu0 0.0
          %1312 = vmatpush2.xpose.msra.mxu0 0.0
          %1313 = vmatprep.subr.mxu0 0.0
          %1314 = vmatpush2.xpose.msra.mxu0 0.0
          %1315 = vmatprep.subr.mxu0 0.0
          %1316 = vmatpush2.xpose.msra.mxu0 0.0
          %1317 = vmatprep.subr.mxu0 0.0
          %1318 = vmatpush2.xpose.msra.mxu0 0.0
          %1319 = vmatprep.subr.mxu0 0.0
          %1320 = vmatpush2.xpose.msra.mxu0 0.0
          %1321 = vmatprep.subr.mxu0 0.0
          %1322 = vmatpush2.xpose.msra.mxu0 0.0
          %1323 = vmatprep.subr.mxu0 0.0
          %1324 = vmatpush2.xpose.msra.mxu0 0.0
          %1325 = vmatprep.subr.mxu0 0.0
          %1326 = vmatpush2.xpose.msra.mxu0 0.0
          %1327 = vmatprep.subr.mxu0 0.0
          %1328 = vmatpush2.xpose.msra.mxu0 0.0
          %1329 = vmatprep.mubr.f32.mxu0 0.0
          %1330 = vmatmul.mubr.f32.gmra.mxu0 %v1257
          %v1331 = vpop.f32.mrf.mxu0
          %v1332 = vadd.f32 0.0, %v1331
          %v1333 = vpop.f32.mrf.mxu0
          %1334 = vmatprep.mubr.f32.mxu0 0.0
          %1335 = vmatmul.mubr.f32.gmra.mxu0 %v1260
          %v1336 = vpop.f32.mrf.mxu0
          %v1337 = vadd.f32 0.0, %v1336
          %v1338 = vpop.f32.mrf.mxu0
          %1339 = vdwg.mxu0
          %s1340 = scalar_lea.vmem [#allocation5], %s1123
          %1341 = vst.msk [vmem:[%s1340] sm:$0xff] %vm1108, %v1332
          %1342 = vst.msk [vmem:[%s1340 + $0x8] sm:$0xff] %vm1108, %v1337
        $region81: #{tpu_custom_call.1} parent=71 // loop_footer
          %s1122 = sadd.s32 1, %s1118
        $region82: #{tpu_custom_call.1} parent=71 // loop_footer_branch
          %1117 = sbr.rel target = $region78
        $region83: #{tpu_custom_call.1} parent=71 // loop_exit
          _
        %v1343 = vld [vmem:[#allocation5] sm:$0xff]
        %v1344 = vld [vmem:[#allocation5 + $0x8] sm:$0xff]
        %v1345 = vld [vmem:[#allocation5 + $0x10] sm:$0xff]
        %v1346 = vld [vmem:[#allocation5 + $0x18] sm:$0xff]
        %v1347 = vld [vmem:[#allocation5 + $0x20] sm:$0xff]
        %v1348 = vld [vmem:[#allocation5 + $0x28] sm:$0xff]
        %v1349 = vld [vmem:[#allocation5 + $0x30] sm:$0xff]
        %v1350 = vld [vmem:[#allocation5 + $0x38] sm:$0xff]
        %v1351 = vld [vmem:[%s9] sm:$0xff]
        %v1352 = vld [vmem:[%s9 + $0x8] sm:$0xff]
        %v1353 = vld [vmem:[%s9 + $0x10] sm:$0xff]
        %v1354 = vld [vmem:[%s9 + $0x18] sm:$0xff]
        %v1355 = vld [vmem:[%s9 + $0x20] sm:$0xff]
        %v1356 = vld [vmem:[%s9 + $0x28] sm:$0xff]
        %v1357 = vld [vmem:[%s9 + $0x30] sm:$0xff]
        %v1358 = vld [vmem:[%s9 + $0x38] sm:$0xff]
        %v1359 = vld [vmem:[%s10] sm:$0x1]
        %v1361 = vlaneseq
        %v1362 = vshrl.u32 %v1361, 7
        %v1363 = vsub.s32 0, %v1362
        %v1364 = vrot.slane %v1359, %v1363
        %1366 = vxpose.xlu0.b32.start [1/16] %v1343, 128
        %1367 = vxpose.xlu0.b32.cont [2/16] %v1344, 128
        %1368 = vxpose.xlu0.b32.cont [3/16] %v1345, 128
        %1369 = vxpose.xlu0.b32.cont [4/16] %v1346, 128
        %1370 = vxpose.xlu0.b32.cont [5/16] %v1347, 128
        %1371 = vxpose.xlu0.b32.cont [6/16] %v1348, 128
        %1372 = vxpose.xlu0.b32.cont [7/16] %v1349, 128
        %1373 = vxpose.xlu0.b32.cont [8/16] %v1350, 128
        %1374 = vxpose.xlu0.b32.cont [9/16] 0.0, 128
        %1375 = vxpose.xlu0.b32.cont [10/16] 0.0, 128
        %1376 = vxpose.xlu0.b32.cont [11/16] 0.0, 128
        %1377 = vxpose.xlu0.b32.cont [12/16] 0.0, 128
        %1378 = vxpose.xlu0.b32.cont [13/16] 0.0, 128
        %1379 = vxpose.xlu0.b32.cont [14/16] 0.0, 128
        %1380 = vxpose.xlu0.b32.cont [15/16] 0.0, 128
        %1381 = vxpose.xlu0.b32.end [16/16] 0.0, 128
        %v1382 = vpop.trf.xlu0
        %v1383 = vpop.trf.xlu0
        %v1384 = vpop.trf.xlu0
        %v1385 = vpop.trf.xlu0
        %v1386 = vpop.trf.xlu0
        %v1387 = vpop.trf.xlu0
        %v1388 = vpop.trf.xlu0
        %v1389 = vpop.trf.xlu0
        %v1390 = vpop.trf.xlu0
        %v1391 = vpop.trf.xlu0
        %v1392 = vpop.trf.xlu0
        %v1393 = vpop.trf.xlu0
        %v1394 = vpop.trf.xlu0
        %v1395 = vpop.trf.xlu0
        %v1396 = vpop.trf.xlu0
        %v1397 = vpop.trf.xlu0
        %vm1398 = vcmask 523264
        %v1400 = vsel %vm1398, %v1382, 0
        %1402 = vmatprep.subr.mxu0 0.0
        %1403 = vmatpush1.msra.mxu0 0.0
        %1404 = vmatprep.subr.mxu0 0.0
        %1405 = vmatpush1.msra.mxu0 0.0
        %1406 = vmatprep.subr.mxu0 0.0
        %1407 = vmatpush1.msra.mxu0 0.0
        %1408 = vmatprep.subr.mxu0 0.0
        %1409 = vmatpush1.msra.mxu0 0.0
        %1410 = vmatprep.subr.mxu0 0.0
        %1411 = vmatpush1.msra.mxu0 0.0
        %1412 = vmatprep.subr.mxu0 0.0
        %1413 = vmatpush1.msra.mxu0 0.0
        %1414 = vmatprep.subr.mxu0 0.0
        %1415 = vmatpush1.msra.mxu0 0.0
        %1416 = vmatprep.subr.mxu0 0.0
        %1417 = vmatpush1.msra.mxu0 0.0
        %1418 = vmatprep.subr.mxu0 0.0
        %1419 = vmatpush1.msra.mxu0 %v1358
        %1420 = vmatprep.subr.mxu0 0.0
        %1421 = vmatpush1.msra.mxu0 %v1357
        %1422 = vmatprep.subr.mxu0 0.0
        %1423 = vmatpush1.msra.mxu0 %v1356
        %1424 = vmatprep.subr.mxu0 0.0
        %1425 = vmatpush1.msra.mxu0 %v1355
        %1426 = vmatprep.subr.mxu0 0.0
        %1427 = vmatpush1.msra.mxu0 %v1354
        %1428 = vmatprep.subr.mxu0 0.0
        %1429 = vmatpush1.msra.mxu0 %v1353
        %1430 = vmatprep.subr.mxu0 0.0
        %1431 = vmatpush1.msra.mxu0 %v1352
        %1432 = vmatprep.subr.mxu0 0.0
        %1433 = vmatpush1.msra.mxu0 %v1351
        %1434 = vmatprep.subr.mxu0 0.0
        %1435 = vmatpush2.msra.mxu0 0.0
        %1436 = vmatprep.subr.mxu0 0.0
        %1437 = vmatpush2.msra.mxu0 0.0
        %1438 = vmatprep.subr.mxu0 0.0
        %1439 = vmatpush2.msra.mxu0 0.0
        %1440 = vmatprep.subr.mxu0 0.0
        %1441 = vmatpush2.msra.mxu0 0.0
        %1442 = vmatprep.subr.mxu0 0.0
        %1443 = vmatpush2.msra.mxu0 0.0
        %1444 = vmatprep.subr.mxu0 0.0
        %1445 = vmatpush2.msra.mxu0 0.0
        %1446 = vmatprep.subr.mxu0 0.0
        %1447 = vmatpush2.msra.mxu0 0.0
        %1448 = vmatprep.subr.mxu0 0.0
        %1449 = vmatpush2.msra.mxu0 0.0
        %1450 = vmatprep.subr.mxu0 0.0
        %1451 = vmatpush2.msra.mxu0 0.0
        %1452 = vmatprep.subr.mxu0 0.0
        %1453 = vmatpush2.msra.mxu0 0.0
        %1454 = vmatprep.subr.mxu0 0.0
        %1455 = vmatpush2.msra.mxu0 0.0
        %1456 = vmatprep.subr.mxu0 0.0
        %1457 = vmatpush2.msra.mxu0 0.0
        %1458 = vmatprep.subr.mxu0 0.0
        %1459 = vmatpush2.msra.mxu0 0.0
        %1460 = vmatprep.subr.mxu0 0.0
        %1461 = vmatpush2.msra.mxu0 0.0
        %1462 = vmatprep.subr.mxu0 0.0
        %1463 = vmatpush2.msra.mxu0 0.0
        %1464 = vmatprep.subr.mxu0 0.0
        %1465 = vmatpush2.msra.mxu0 0.0
        %1466 = vmatprep.mubr.f32.mxu0 0.0
        %1467 = vmatmul.mubr.f32.gmra.mxu0 %v1400
        %v1468 = vpop.f32.mrf.mxu0
        %v1469 = vadd.f32 %v1364, %v1468
        %v1470 = vpop.f32.mrf.mxu0
        %1471 = vdwg.mxu0
        %v1472 = vsel %vm970, %v1469, 0.0
        %1473 = vadd.xlane.f32.xlu0 %v1472
        %v1474 = vpop.xlane.xlu0 %1473
        %v1475 = vrcp.pop 32.0
        %v1476 = vmul.f32 %v1474, %v1475
        %v1477 = vsub.f32 %v1469, %v1476
        %v1478 = vmul.f32 %v1477, %v1477
        %v1479 = vsel %vm970, %v1478, 0.0
        %1480 = vadd.xlane.f32.xlu0 %v1479
        %v1481 = vpop.xlane.xlu0 %1480
        %v1482 = vmul.f32 %v1481, %v1475
        %v1483 = vadd.f32 %v1482, 1e-05
        %v1484 = vrsqrt.pop %v1483
        %v1485 = vmul.f32 %v1477, %v1484
        %v1486 = vld [vmem:[%s11] sm:$0x1]
        %v1488 = vlaneseq
        %v1489 = vshrl.u32 %v1488, 7
        %v1490 = vsub.s32 0, %v1489
        %v1491 = vrot.slane %v1486, %v1490
        %v1493 = vmul.f32 %v1485, %v1491
        %v1494 = vld [vmem:[%s12] sm:$0x1]
        %v1496 = vlaneseq
        %v1497 = vshrl.u32 %v1496, 7
        %v1498 = vsub.s32 0, %v1497
        %v1499 = vrot.slane %v1494, %v1498
        %v1501 = vadd.f32 %v1493, %v1499
        %1502 = vst.msk [vmem:[%s491] sm:$0xff] %vm970, %v1501
        %s1503 = sand.u32 %s341, 1
        %s1504 = scalar_lea.sflag [#allocation7], %s1503
        %s1505 = sand.u32 %s341, 1
        %s1506 = smul.addr %s1505, 8
        %s1507 = scalar_lea.vmem [#allocation6], %s1506
        // Predicated region
        $region84: #{tpu_custom_call.1} parent=71 // pred_check
          %p1508 = pneg %p351
        $region85: #{tpu_custom_call.1} parent=71 // pred_check_branch
          %1510 = sbr.rel (%p1508) target = $region87
        $region86: #{tpu_custom_call.1} parent=71 // pred_region
          %s1512 = ssub.s32 128, 128
          %1513 = vsyncadd %s1504, %s1512
          %s1514 = sadd.s32 %s32, %s31
          %s1515 = smul.addr %s1514, 128
          %s1516 = scalar_lea.hbm %s13, %s1515
          %s1518 = sshll.u32 %s1507, 4
          %s1519 = int_to_ptr.vmem [resolvable:$true] %s1518
          %1521 = dma.vmem_to_hbm [thread:$0]  %s1519, 128, %s1516, %s1504
        $region87: #{tpu_custom_call.1} parent=71 // pred_fallthru
          _
      $region72: #{tpu_custom_call.1} parent=5 // pred_fallthru
        _
      %p1522 = scmp.le.s32.totalorder 2, %s22
      // Predicated region
      $region88: #{tpu_custom_call.1} parent=5 // pred_check
        %p1523 = pneg %p1522
      $region89: #{tpu_custom_call.1} parent=5 // pred_check_branch
        %1525 = sbr.rel (%p1523) target = $region91
      $region90: #{tpu_custom_call.1} parent=5 // pred_region
        %s1526 = ssub.s32 %s22, 2
        // Predicated region
        $region92: #{tpu_custom_call.1} parent=90 // pred_check
          %p1527 = pneg %p357
        $region93: #{tpu_custom_call.1} parent=90 // pred_check_branch
          %1529 = sbr.rel (%p1527) target = $region95
        $region94: #{tpu_custom_call.1} parent=90 // pred_region
          %s1530 = sand.u32 %s342, 1
          %s1531 = scalar_lea.sflag [#allocation7], %s1530
          %s1532 = sand.u32 %s342, 1
          %s1533 = smul.addr %s1532, 8
          %s1534 = scalar_lea.vmem [#allocation6], %s1533
          %1535 = dma.done %s1531, 128
        $region95: #{tpu_custom_call.1} parent=90 // pred_fallthru
          _
      $region91: #{tpu_custom_call.1} parent=5 // pred_fallthru
        _
    $region6: #{tpu_custom_call.1} parent=1 // loop_footer
      %s26 = sadd.s32 1, %s22
    $region7: #{tpu_custom_call.1} parent=1 // loop_footer_branch
      %21 = sbr.rel target = $region3
    $region8: #{tpu_custom_call.1} parent=1 // loop_exit
      _
    %1536 = vsyncpa [#allocation7], 1
    %s1537 = scalar_lea.sflag [#allocation7], 1
    %1538 = vsyncpa %s1537, 1

// kernel: tpu_custom_call.1
$region0: #{tpu_custom_call.1}
  #allocation0 [shape = 'u32[]', space=smem, size = 0x4, offset = 0x4, fixed_abs, tag = 'smem constant byte address 0x4 - core index']
  #allocation1 [shape = 'u32[144,128]{1,0:T(1,128)}', space=vmem, size = 0x12000, scoped, tag = 'internal scratch']
  #allocation2 [shape = 'f32[64,8]{1,0:T(8,128)}', space=vmem, size = 0x8000, scoped, tag = 'scratch operand']
  #allocation3 [shape = 'f32[64,8]{1,0:T(8,128)}', space=vmem, size = 0x8000, scoped, tag = 'scratch operand']
  #allocation4 [shape = 'f32[64,8]{1,0:T(8,128)}', space=vmem, size = 0x8000, scoped, tag = 'scratch operand']
  #allocation5 [shape = 'f32[64,8]{1,0:T(8,128)}', space=vmem, size = 0x8000, scoped, tag = 'scratch operand']
  %s0 = inlined_call_operand.vmem [shape: f32[2,32,8], index: 0, kind: input, shape index: {}]
  %s1 = inlined_call_operand.vmem [shape: f32[2,32,8], index: 1, kind: input, shape index: {}]
  %s2 = inlined_call_operand.vmem [shape: s8[2,8,8], index: 2, kind: input, shape index: {}]
  %s3 = inlined_call_operand.vmem [shape: f32[64,32], index: 3, kind: input, shape index: {}]
  %s4 = inlined_call_operand.vmem [shape: f32[64,1], index: 4, kind: input, shape index: {}]
  %s5 = inlined_call_operand.vmem [shape: f32[64,32], index: 5, kind: input, shape index: {}]
  %s6 = inlined_call_operand.vmem [shape: f32[64,1], index: 6, kind: input, shape index: {}]
  %s7 = inlined_call_operand.vmem [shape: f32[64,32], index: 7, kind: input, shape index: {}]
  %s8 = inlined_call_operand.vmem [shape: f32[64,1], index: 8, kind: input, shape index: {}]
  %s9 = inlined_call_operand.vmem [shape: f32[64,32], index: 9, kind: input, shape index: {}]
  %s10 = inlined_call_operand.vmem [shape: f32[1,32], index: 10, kind: input, shape index: {}]
  %s11 = inlined_call_operand.vmem [shape: f32[1,32], index: 11, kind: input, shape index: {}]
  %s12 = inlined_call_operand.vmem [shape: f32[1,32], index: 12, kind: input, shape index: {}]
  %s13 = inlined_call_operand.hbm [shape: f32[2,8,32], index: 13, kind: output, shape index: {}]
  %s14 = sld [smem:[#allocation0]]
  $region96: #{tpu_custom_call.1} parent=0
    _
  %s16 = ssub.s32 1, %s14
  %s17 = scalar_select 0, %s16, %s14
  $region1: #{tpu_custom_call.1} parent=0
    #allocation6 [shape = 'u8[8192]{0}', space=vmem, size = 0x2000, scoped, tag = 'output window, operand 0']
    #allocation7 [shape = 's32[2]{0}', space=sflag, size = 0x8, scoped, tag = 'scoped memory for tpu_custom_call.1']
    %18 = vsyncpa [#allocation7], 0
    %s19 = scalar_lea.sflag [#allocation7], 1
    %20 = vsyncpa %s19, 0
    loop: start=0, step=1, limit=4
    $region2: #{tpu_custom_call.1} parent=1 // loop_pre_header
      _
    $region3: #{tpu_custom_call.1} parent=1 // loop_header
      %s22 = sphi 0, %s26
      %p23 = scmp.ge.s32.totalorder %s22, 4
      %s29 = sphi 0, %s41
      %s30 = sphi 0, %s37
      %s31 = sphi 0, %s29
      %s32 = sphi 0, %s30
      %s33 = sphi 0, %s31
      %s34 = sphi 0, %s32
      %s44 = sphi 0, %s46
      %s47 = sphi 0, %s44
      %s48 = sphi 0, %s47
      %s64 = sphi 0, %s48
      %s72 = sphi 0, %s74
      %s75 = sphi 0, %s72
      %s76 = sphi 0, %s75
      %s92 = sphi 0, %s76
      %s100 = sphi 0, %s102
      %s103 = sphi 0, %s100
      %s104 = sphi 0, %s103
      %s120 = sphi 0, %s104
      %s124 = sphi 0, %s124
      %s126 = sphi 0, %s124
      %s127 = sphi 0, %s126
      %s141 = sphi 0, %s127
      %s145 = sphi 0, %s145
      %s147 = sphi 0, %s145
      %s148 = sphi 0, %s147
      %s162 = sphi 0, %s148
      %s166 = sphi 0, %s166
      %s168 = sphi 0, %s166
      %s169 = sphi 0, %s168
      %s183 = sphi 0, %s169
      %s187 = sphi 0, %s187
      %s189 = sphi 0, %s187
      %s190 = sphi 0, %s189
      %s204 = sphi 0, %s190
      %s208 = sphi 0, %s208
      %s210 = sphi 0, %s208
      %s211 = sphi 0, %s210
      %s225 = sphi 0, %s211
      %s229 = sphi 0, %s229
      %s231 = sphi 0, %s229
      %s232 = sphi 0, %s231
      %s246 = sphi 0, %s232
      %s250 = sphi 0, %s250
      %s252 = sphi 0, %s250
      %s253 = sphi 0, %s252
      %s267 = sphi 0, %s253
      %s271 = sphi 0, %s271
      %s273 = sphi 0, %s271
      %s274 = sphi 0, %s273
      %s288 = sphi 0, %s274
      %s292 = sphi 0, %s292
      %s294 = sphi 0, %s292
      %s295 = sphi 0, %s294
      %s309 = sphi 0, %s295
      %s313 = sphi 0, %s313
      %s315 = sphi 0, %s313
      %s316 = sphi 0, %s315
      %s330 = sphi 0, %s316
      %s338 = sphi 0, %s340
      %s341 = sphi 0, %s338
      %s342 = sphi 0, %s341
      %s358 = sphi 0, %s342
    $region4: #{tpu_custom_call.1} parent=1 // loop_header_branch
      %25 = sbr.rel (%p23) target = $region8
    $region5: #{tpu_custom_call.1} parent=1 // loop_body
      %s27 = ssub.s32 %s22, 1
      %s28 = ssub.s32 %s22, 2
      %s35 = sadd.s32 1, %s30
      %p36 = scmp.ge.s32.totalorder %s35, 1
      %s37 = scalar_select %p36, 0, %s35
      %s38 = sadd.s32 1, %s29
      %s39 = scalar_select %p36, %s38, %s29
      %p40 = scmp.ge.s32.totalorder %s39, 2
      %s41 = scalar_select %p40, 0, %s39
      %s42 = ssub.s32 %s29, %s41
      %p43 = scmp.eq.s32.totalorder %s42, 0
      %s45 = sadd.s32 %s44, 1
      %s46 = scalar_select %p43, %s44, %s45
      %p49 = pneg %p43
      %p50 = scmp.eq.s32.totalorder %s22, 1
      %p51 = por %p49, %p50
      %p52 = scmp.ne.s32.totalorder %s44, %s47
      %p53 = scmp.eq.s32.totalorder %s22, 0
      %p54 = por %p52, %p53
      %p55 = scmp.ne.s32.totalorder %s44, %s47
      %p56 = scmp.eq.s32.totalorder %s27, 1
      %p57 = por %p55, %p56
      %p58 = scmp.ne.s32.totalorder %s47, %s48
      %p59 = scmp.eq.s32.totalorder %s27, 0
      %p60 = por %p58, %p59
      %p61 = scmp.ne.s32.totalorder %s47, %s48
      %p62 = scmp.eq.s32.totalorder %s28, 1
      %p63 = por %p61, %p62
      %p65 = scmp.ne.s32.totalorder %s48, %s64
      %p66 = scmp.eq.s32.totalorder %s28, 0
      %p67 = por %p65, %p66
      %s68 = ssub.s32 %s29, %s41
      %s69 = ssub.s32 %s30, %s37
      %s70 = sor.u32 %s68, %s69
      %p71 = scmp.eq.s32.totalorder %s70, 0
      %s73 = sadd.s32 %s72, 1
      %s74 = scalar_select %p71, %s72, %s73
      %p77 = pneg %p71
      %p78 = scmp.eq.s32.totalorder %s22, 1
      %p79 = por %p77, %p78
      %p80 = scmp.ne.s32.totalorder %s72, %s75
      %p81 = scmp.eq.s32.totalorder %s22, 0
      %p82 = por %p80, %p81
      %p83 = scmp.ne.s32.totalorder %s72, %s75
      %p84 = scmp.eq.s32.totalorder %s27, 1
      %p85 = por %p83, %p84
      %p86 = scmp.ne.s32.totalorder %s75, %s76
      %p87 = scmp.eq.s32.totalorder %s27, 0
      %p88 = por %p86, %p87
      %p89 = scmp.ne.s32.totalorder %s75, %s76
      %p90 = scmp.eq.s32.totalorder %s28, 1
      %p91 = por %p89, %p90
      %p93 = scmp.ne.s32.totalorder %s76, %s92
      %p94 = scmp.eq.s32.totalorder %s28, 0
      %p95 = por %p93, %p94
      %s96 = ssub.s32 %s29, %s41
      %s97 = ssub.s32 %s30, %s37
      %s98 = sor.u32 %s96, %s97
      %p99 = scmp.eq.s32.totalorder %s98, 0
      %s101 = sadd.s32 %s100, 1
      %s102 = scalar_select %p99, %s100, %s101
      %p105 = pneg %p99
      %p106 = scmp.eq.s32.totalorder %s22, 1
      %p107 = por %p105, %p106
      %p108 = scmp.ne.s32.totalorder %s100, %s103
      %p109 = scmp.eq.s32.totalorder %s22, 0
      %p110 = por %p108, %p109
      %p111 = scmp.ne.s32.totalorder %s100, %s103
      %p112 = scmp.eq.s32.totalorder %s27, 1
      %p113 = por %p111, %p112
      %p114 = scmp.ne.s32.totalorder %s103, %s104
      %p115 = scmp.eq.s32.totalorder %s27, 0
      %p116 = por %p114, %p115
      %p117 = scmp.ne.s32.totalorder %s103, %s104
      %p118 = scmp.eq.s32.totalorder %s28, 1
      %p119 = por %p117, %p118
      %p121 = scmp.ne.s32.totalorder %s104, %s120
      %p122 = scmp.eq.s32.totalorder %s28, 0
      %p123 = por %p121, %p122
      %s125 = sadd.s32 %s124, 1
      %p128 = scmp.eq.s32.totalorder %s22, 1
      %p129 = scmp.ne.s32.totalorder %s124, %s126
      %p130 = scmp.eq.s32.totalorder %s22, 0
      %p131 = por %p129, %p130
      %p132 = scmp.ne.s32.totalorder %s124, %s126
      %p133 = scmp.eq.s32.totalorder %s27, 1
      %p134 = por %p132, %p133
      %p135 = scmp.ne.s32.totalorder %s126, %s127
      %p136 = scmp.eq.s32.totalorder %s27, 0
      %p137 = por %p135, %p136
      %p138 = scmp.ne.s32.totalorder %s126, %s127
      %p139 = scmp.eq.s32.totalorder %s28, 1
      %p140 = por %p138, %p139
      %p142 = scmp.ne.s32.totalorder %s127, %s141
      %p143 = scmp.eq.s32.totalorder %s28, 0
      %p144 = por %p142, %p143
      %s146 = sadd.s32 %s145, 1
      %p149 = scmp.eq.s32.totalorder %s22, 1
      %p150 = scmp.ne.s32.totalorder %s145, %s147
      %p151 = scmp.eq.s32.totalorder %s22, 0
      %p152 = por %p150, %p151
      %p153 = scmp.ne.s32.totalorder %s145, %s147
      %p154 = scmp.eq.s32.totalorder %s27, 1
      %p155 = por %p153, %p154
      %p156 = scmp.ne.s32.totalorder %s147, %s148
      %p157 = scmp.eq.s32.totalorder %s27, 0
      %p158 = por %p156, %p157
      %p159 = scmp.ne.s32.totalorder %s147, %s148
      %p160 = scmp.eq.s32.totalorder %s28, 1
      %p161 = por %p159, %p160
      %p163 = scmp.ne.s32.totalorder %s148, %s162
      %p164 = scmp.eq.s32.totalorder %s28, 0
      %p165 = por %p163, %p164
      %s167 = sadd.s32 %s166, 1
      %p170 = scmp.eq.s32.totalorder %s22, 1
      %p171 = scmp.ne.s32.totalorder %s166, %s168
      %p172 = scmp.eq.s32.totalorder %s22, 0
      %p173 = por %p171, %p172
      %p174 = scmp.ne.s32.totalorder %s166, %s168
      %p175 = scmp.eq.s32.totalorder %s27, 1
      %p176 = por %p174, %p175
      %p177 = scmp.ne.s32.totalorder %s168, %s169
      %p178 = scmp.eq.s32.totalorder %s27, 0
      %p179 = por %p177, %p178
      %p180 = scmp.ne.s32.totalorder %s168, %s169
      %p181 = scmp.eq.s32.totalorder %s28, 1
      %p182 = por %p180, %p181
      %p184 = scmp.ne.s32.totalorder %s169, %s183
      %p185 = scmp.eq.s32.totalorder %s28, 0
      %p186 = por %p184, %p185
      %s188 = sadd.s32 %s187, 1
      %p191 = scmp.eq.s32.totalorder %s22, 1
      %p192 = scmp.ne.s32.totalorder %s187, %s189
      %p193 = scmp.eq.s32.totalorder %s22, 0
      %p194 = por %p192, %p193
      %p195 = scmp.ne.s32.totalorder %s187, %s189
      %p196 = scmp.eq.s32.totalorder %s27, 1
      %p197 = por %p195, %p196
      %p198 = scmp.ne.s32.totalorder %s189, %s190
      %p199 = scmp.eq.s32.totalorder %s27, 0
      %p200 = por %p198, %p199
      %p201 = scmp.ne.s32.totalorder %s189, %s190
      %p202 = scmp.eq.s32.totalorder %s28, 1
      %p203 = por %p201, %p202
      %p205 = scmp.ne.s32.totalorder %s190, %s204
      %p206 = scmp.eq.s32.totalorder %s28, 0
      %p207 = por %p205, %p206
      %s209 = sadd.s32 %s208, 1
      %p212 = scmp.eq.s32.totalorder %s22, 1
      %p213 = scmp.ne.s32.totalorder %s208, %s210
      %p214 = scmp.eq.s32.totalorder %s22, 0
      %p215 = por %p213, %p214
      %p216 = scmp.ne.s32.totalorder %s208, %s210
      %p217 = scmp.eq.s32.totalorder %s27, 1
      %p218 = por %p216, %p217
      %p219 = scmp.ne.s32.totalorder %s210, %s211
      %p220 = scmp.eq.s32.totalorder %s27, 0
      %p221 = por %p219, %p220
      %p222 = scmp.ne.s32.totalorder %s210, %s211
      %p223 = scmp.eq.s32.totalorder %s28, 1
      %p224 = por %p222, %p223
      %p226 = scmp.ne.s32.totalorder %s211, %s225
      %p227 = scmp.eq.s32.totalorder %s28, 0
      %p228 = por %p226, %p227
      %s230 = sadd.s32 %s229, 1
      %p233 = scmp.eq.s32.totalorder %s22, 1
      %p234 = scmp.ne.s32.totalorder %s229, %s231
      %p235 = scmp.eq.s32.totalorder %s22, 0
      %p236 = por %p234, %p235
      %p237 = scmp.ne.s32.totalorder %s229, %s231
      %p238 = scmp.eq.s32.totalorder %s27, 1
      %p239 = por %p237, %p238
      %p240 = scmp.ne.s32.totalorder %s231, %s232
      %p241 = scmp.eq.s32.totalorder %s27, 0
      %p242 = por %p240, %p241
      %p243 = scmp.ne.s32.totalorder %s231, %s232
      %p244 = scmp.eq.s32.totalorder %s28, 1
      %p245 = por %p243, %p244
      %p247 = scmp.ne.s32.totalorder %s232, %s246
      %p248 = scmp.eq.s32.totalorder %s28, 0
      %p249 = por %p247, %p248
      %s251 = sadd.s32 %s250, 1
      %p254 = scmp.eq.s32.totalorder %s22, 1
      %p255 = scmp.ne.s32.totalorder %s250, %s252
      %p256 = scmp.eq.s32.totalorder %s22, 0
      %p257 = por %p255, %p256
      %p258 = scmp.ne.s32.totalorder %s250, %s252
      %p259 = scmp.eq.s32.totalorder %s27, 1
      %p260 = por %p258, %p259
      %p261 = scmp.ne.s32.totalorder %s252, %s253
      %p262 = scmp.eq.s32.totalorder %s27, 0
      %p263 = por %p261, %p262
      %p264 = scmp.ne.s32.totalorder %s252, %s253
      %p265 = scmp.eq.s32.totalorder %s28, 1
      %p266 = por %p264, %p265
      %p268 = scmp.ne.s32.totalorder %s253, %s267
      %p269 = scmp.eq.s32.totalorder %s28, 0
      %p270 = por %p268, %p269
      %s272 = sadd.s32 %s271, 1
      %p275 = scmp.eq.s32.totalorder %s22, 1
      %p276 = scmp.ne.s32.totalorder %s271, %s273
      %p277 = scmp.eq.s32.totalorder %s22, 0
      %p278 = por %p276, %p277
      %p279 = scmp.ne.s32.totalorder %s271, %s273
      %p280 = scmp.eq.s32.totalorder %s27, 1
      %p281 = por %p279, %p280
      %p282 = scmp.ne.s32.totalorder %s273, %s274
      %p283 = scmp.eq.s32.totalorder %s27, 0
      %p284 = por %p282, %p283
      %p285 = scmp.ne.s32.totalorder %s273, %s274
      %p286 = scmp.eq.s32.totalorder %s28, 1
      %p287 = por %p285, %p286
      %p289 = scmp.ne.s32.totalorder %s274, %s288
      %p290 = scmp.eq.s32.totalorder %s28, 0
      %p291 = por %p289, %p290
      %s293 = sadd.s32 %s292, 1
      %p296 = scmp.eq.s32.totalorder %s22, 1
      %p297 = scmp.ne.s32.totalorder %s292, %s294
      %p298 = scmp.eq.s32.totalorder %s22, 0
      %p299 = por %p297, %p298
      %p300 = scmp.ne.s32.totalorder %s292, %s294
      %p301 = scmp.eq.s32.totalorder %s27, 1
      %p302 = por %p300, %p301
      %p303 = scmp.ne.s32.totalorder %s294, %s295
      %p304 = scmp.eq.s32.totalorder %s27, 0
      %p305 = por %p303, %p304
      %p306 = scmp.ne.s32.totalorder %s294, %s295
      %p307 = scmp.eq.s32.totalorder %s28, 1
      %p308 = por %p306, %p307
      %p310 = scmp.ne.s32.totalorder %s295, %s309
      %p311 = scmp.eq.s32.totalorder %s28, 0
      %p312 = por %p310, %p311
      %s314 = sadd.s32 %s313, 1
      %p317 = scmp.eq.s32.totalorder %s22, 1
      %p318 = scmp.ne.s32.totalorder %s313, %s315
      %p319 = scmp.eq.s32.totalorder %s22, 0
      %p320 = por %p318, %p319
      %p321 = scmp.ne.s32.totalorder %s313, %s315
      %p322 = scmp.eq.s32.totalorder %s27, 1
      %p323 = por %p321, %p322
      %p324 = scmp.ne.s32.totalorder %s315, %s316
      %p325 = scmp.eq.s32.totalorder %s27, 0
      %p326 = por %p324, %p325
      %p327 = scmp.ne.s32.totalorder %s315, %s316
      %p328 = scmp.eq.s32.totalorder %s28, 1
      %p329 = por %p327, %p328
      %p331 = scmp.ne.s32.totalorder %s316, %s330
      %p332 = scmp.eq.s32.totalorder %s28, 0
      %p333 = por %p331, %p332
      %s334 = ssub.s32 %s29, %s41
      %s335 = ssub.s32 %s30, %s37
      %s336 = sor.u32 %s334, %s335
      %p337 = scmp.eq.s32.totalorder %s336, 0
      %s339 = sadd.s32 %s338, 1
      %s340 = scalar_select %p337, %s338, %s339
      %p343 = pneg %p337
      %p344 = scmp.eq.s32.totalorder %s22, 1
      %p345 = por %p343, %p344
      %p346 = scmp.ne.s32.totalorder %s338, %s341
      %p347 = scmp.eq.s32.totalorder %s22, 0
      %p348 = por %p346, %p347
      %p349 = scmp.ne.s32.totalorder %s338, %s341
      %p350 = scmp.eq.s32.totalorder %s27, 1
      %p351 = por %p349, %p350
      %p352 = scmp.ne.s32.totalorder %s341, %s342
      %p353 = scmp.eq.s32.totalorder %s27, 0
      %p354 = por %p352, %p353
      %p355 = scmp.ne.s32.totalorder %s341, %s342
      %p356 = scmp.eq.s32.totalorder %s28, 1
      %p357 = por %p355, %p356
      %p359 = scmp.ne.s32.totalorder %s342, %s358
      %p360 = scmp.eq.s32.totalorder %s28, 0
      %p361 = por %p359, %p360
      %p362 = scmp.le.s32.totalorder 1, %s22
      %p363 = scmp.lt.s32.totalorder %s22, 3
      %p364 = pnand %p362, %p363
      %p365 = pneg %p364
      // Predicated region
      $region9: #{tpu_custom_call.1} parent=5 // pred_check
        _
      $region10: #{tpu_custom_call.1} parent=5 // pred_check_branch
        %367 = sbr.rel (%p364) target = $region12
      $region11: #{tpu_custom_call.1} parent=5 // pred_region
        %s368 = ssub.s32 %s22, 1
        // Predicated region
        $region13: #{tpu_custom_call.1} parent=11 // pred_check
          %p369 = pneg %p137
        $region14: #{tpu_custom_call.1} parent=11 // pred_check_branch
          %371 = sbr.rel (%p369) target = $region16
        $region15: #{tpu_custom_call.1} parent=11 // pred_region
          _
        $region16: #{tpu_custom_call.1} parent=11 // pred_fallthru
          _
        // Predicated region
        $region17: #{tpu_custom_call.1} parent=11 // pred_check
          %p372 = pneg %p158
        $region18: #{tpu_custom_call.1} parent=11 // pred_check_branch
          %374 = sbr.rel (%p372) target = $region20
        $region19: #{tpu_custom_call.1} parent=11 // pred_region
          _
        $region20: #{tpu_custom_call.1} parent=11 // pred_fallthru
          _
        // Predicated region
        $region21: #{tpu_custom_call.1} parent=11 // pred_check
          %p375 = pneg %p179
        $region22: #{tpu_custom_call.1} parent=11 // pred_check_branch
          %377 = sbr.rel (%p375) target = $region24
        $region23: #{tpu_custom_call.1} parent=11 // pred_region
          _
        $region24: #{tpu_custom_call.1} parent=11 // pred_fallthru
          _
        // Predicated region
        $region25: #{tpu_custom_call.1} parent=11 // pred_check
          %p378 = pneg %p200
        $region26: #{tpu_custom_call.1} parent=11 // pred_check_branch
          %380 = sbr.rel (%p378) target = $region28
        $region27: #{tpu_custom_call.1} parent=11 // pred_region
          _
        $region28: #{tpu_custom_call.1} parent=11 // pred_fallthru
          _
        // Predicated region
        $region29: #{tpu_custom_call.1} parent=11 // pred_check
          %p381 = pneg %p221
        $region30: #{tpu_custom_call.1} parent=11 // pred_check_branch
          %383 = sbr.rel (%p381) target = $region32
        $region31: #{tpu_custom_call.1} parent=11 // pred_region
          _
        $region32: #{tpu_custom_call.1} parent=11 // pred_fallthru
          _
        // Predicated region
        $region33: #{tpu_custom_call.1} parent=11 // pred_check
          %p384 = pneg %p242
        $region34: #{tpu_custom_call.1} parent=11 // pred_check_branch
          %386 = sbr.rel (%p384) target = $region36
        $region35: #{tpu_custom_call.1} parent=11 // pred_region
          _
        $region36: #{tpu_custom_call.1} parent=11 // pred_fallthru
          _
        // Predicated region
        $region37: #{tpu_custom_call.1} parent=11 // pred_check
          %p387 = pneg %p263
        $region38: #{tpu_custom_call.1} parent=11 // pred_check_branch
          %389 = sbr.rel (%p387) target = $region40
        $region39: #{tpu_custom_call.1} parent=11 // pred_region
          _
        $region40: #{tpu_custom_call.1} parent=11 // pred_fallthru
          _
        // Predicated region
        $region41: #{tpu_custom_call.1} parent=11 // pred_check
          %p390 = pneg %p284
        $region42: #{tpu_custom_call.1} parent=11 // pred_check_branch
          %392 = sbr.rel (%p390) target = $region44
        $region43: #{tpu_custom_call.1} parent=11 // pred_region
          _
        $region44: #{tpu_custom_call.1} parent=11 // pred_fallthru
          _
        // Predicated region
        $region45: #{tpu_custom_call.1} parent=11 // pred_check
          %p393 = pneg %p305
        $region46: #{tpu_custom_call.1} parent=11 // pred_check_branch
          %395 = sbr.rel (%p393) target = $region48
        $region47: #{tpu_custom_call.1} parent=11 // pred_region
          _
        $region48: #{tpu_custom_call.1} parent=11 // pred_fallthru
          _
        // Predicated region
        $region49: #{tpu_custom_call.1} parent=11 // pred_check
          %p396 = pneg %p326
        $region50: #{tpu_custom_call.1} parent=11 // pred_check_branch
          %398 = sbr.rel (%p396) target = $region52
        $region51: #{tpu_custom_call.1} parent=11 // pred_region
          _
        $region52: #{tpu_custom_call.1} parent=11 // pred_fallthru
          _
      $region12: #{tpu_custom_call.1} parent=5 // pred_fallthru
        _
      %p399 = scmp.lt.s32.totalorder %s22, 2
      // Predicated region
      $region53: #{tpu_custom_call.1} parent=5 // pred_check
        %p400 = pneg %p399
      $region54: #{tpu_custom_call.1} parent=5 // pred_check_branch
        %402 = sbr.rel (%p400) target = $region56
      $region55: #{tpu_custom_call.1} parent=5 // pred_region
        // Predicated region
        $region57: #{tpu_custom_call.1} parent=55 // pred_check
          %p403 = pneg %p54
        $region58: #{tpu_custom_call.1} parent=55 // pred_check_branch
          %405 = sbr.rel (%p403) target = $region60
        $region59: #{tpu_custom_call.1} parent=55 // pred_region
          %p406 = scmp.lt.s32.totalorder %s29, 1
          %s407 = scalar_select %p406, %s29, 1
          %s408 = smul.addr %s407, 4
          %s409 = smul.addr %s408, 8
          %s410 = scalar_lea.vmem %s0, %s409
        $region60: #{tpu_custom_call.1} parent=55 // pred_fallthru
          _
        // Predicated region
        $region61: #{tpu_custom_call.1} parent=55 // pred_check
          %p411 = pneg %p82
        $region62: #{tpu_custom_call.1} parent=55 // pred_check_branch
          %413 = sbr.rel (%p411) target = $region64
        $region63: #{tpu_custom_call.1} parent=55 // pred_region
          %p414 = scmp.lt.s32.totalorder %s29, 1
          %s415 = scalar_select %p414, %s29, 1
          %p416 = scmp.lt.s32.totalorder %s30, 0
          %s417 = scalar_select %p416, %s30, 0
          %s418 = smul.addr %s415, 4
          %s419 = sadd.s32 %s417, %s418
          %s420 = smul.addr %s419, 8
          %s421 = scalar_lea.vmem %s1, %s420
        $region64: #{tpu_custom_call.1} parent=55 // pred_fallthru
          _
        // Predicated region
        $region65: #{tpu_custom_call.1} parent=55 // pred_check
          %p422 = pneg %p110
        $region66: #{tpu_custom_call.1} parent=55 // pred_check_branch
          %424 = sbr.rel (%p422) target = $region68
        $region67: #{tpu_custom_call.1} parent=55 // pred_region
          %p425 = scmp.lt.s32.totalorder %s29, 1
          %s426 = scalar_select %p425, %s29, 1
          %p427 = scmp.lt.s32.totalorder %s30, 0
          %s428 = scalar_select %p427, %s30, 0
          %s429 = sadd.s32 %s428, %s426
          %s430 = smul.addr %s429, 2
          %s431 = scalar_lea.vmem %s2, %s430
        $region68: #{tpu_custom_call.1} parent=55 // pred_fallthru
          _
      $region56: #{tpu_custom_call.1} parent=5 // pred_fallthru
        _
      %p432 = scmp.le.s32.totalorder 1, %s22
      %p433 = scmp.lt.s32.totalorder %s22, 3
      %p434 = pnand %p432, %p433
      %p435 = pneg %p434
      // Predicated region
      $region69: #{tpu_custom_call.1} parent=5 // pred_check
        _
      $region70: #{tpu_custom_call.1} parent=5 // pred_check_branch
        %437 = sbr.rel (%p434) target = $region72
      $region71: #{tpu_custom_call.1} parent=5 // pred_region
        %s438 = ssub.s32 %s22, 1
        %p439 = scmp.lt.s32.totalorder %s31, 1
        %s440 = scalar_select %p439, %s31, 1
        %s441 = smul.addr %s440, 4
        %s442 = smul.addr %s441, 8
        %s443 = scalar_lea.vmem %s0, %s442
        %p444 = pneg %p60
        %p445 = pneg %p57
        %p446 = scmp.lt.s32.totalorder %s31, 1
        %s447 = scalar_select %p446, %s31, 1
        %p448 = scmp.lt.s32.totalorder %s32, 0
        %s449 = scalar_select %p448, %s32, 0
        %s450 = smul.addr %s447, 4
        %s451 = sadd.s32 %s449, %s450
        %s452 = smul.addr %s451, 8
        %s453 = scalar_lea.vmem %s1, %s452
        %p454 = pneg %p88
        %p455 = pneg %p85
        %p456 = scmp.lt.s32.totalorder %s31, 1
        %s457 = scalar_select %p456, %s31, 1
        %p458 = scmp.lt.s32.totalorder %s32, 0
        %s459 = scalar_select %p458, %s32, 0
        %s460 = sadd.s32 %s459, %s457
        %s461 = smul.addr %s460, 2
        %s462 = scalar_lea.vmem %s2, %s461
        %p463 = pneg %p116
        %p464 = pneg %p113
        %p465 = pneg %p137
        %p466 = pneg %p134
        %p467 = pneg %p158
        %p468 = pneg %p155
        %p469 = pneg %p179
        %p470 = pneg %p176
        %p471 = pneg %p200
        %p472 = pneg %p197
        %p473 = pneg %p221
        %p474 = pneg %p218
        %p475 = pneg %p242
        %p476 = pneg %p239
        %p477 = pneg %p263
        %p478 = pneg %p260
        %p479 = pneg %p284
        %p480 = pneg %p281
        %p481 = pneg %p305
        %p482 = pneg %p302
        %p483 = pneg %p326
        %p484 = pneg %p323
        %p485 = pneg %p354
        %p486 = pneg %p351
        %s487 = sand.u32 %s341, 1
        %s488 = scalar_lea.sflag [#allocation7], %s487
        %s489 = sand.u32 %s341, 1
        %s490 = smul.addr %s489, 8
        %s491 = scalar_lea.vmem [#allocation6], %s490
        %p492 = scmp.lt.s32.totalorder %s31, 1
        %s493 = scalar_select %p492, %s31, 1
        %s494 = smul.addr %s493, 4
        %s495 = smul.addr %s494, 8
        %s496 = scalar_lea.vmem %s0, %s495
        %p497 = scmp.lt.s32.totalorder %s31, 1
        %s498 = scalar_select %p497, %s31, 1
        %p499 = scmp.lt.s32.totalorder %s32, 0
        %s500 = scalar_select %p499, %s32, 0
        %s501 = smul.addr %s498, 4
        %s502 = sadd.s32 %s500, %s501
        %s503 = smul.addr %s502, 8
        %s504 = scalar_lea.vmem %s1, %s503
        %p505 = scmp.lt.s32.totalorder %s31, 1
        %s506 = scalar_select %p505, %s31, 1
        %p507 = scmp.lt.s32.totalorder %s32, 0
        %s508 = scalar_select %p507, %s32, 0
        %s509 = sadd.s32 %s508, %s506
        %s510 = smul.addr %s509, 2
        %s511 = scalar_lea.vmem %s2, %s510
        %p514 = scmp.eq.s32.totalorder %s32, 0
        // Predicated region
        $region73: #{tpu_custom_call.1} parent=71 // pred_check
          %p515 = pneg %p514
        $region74: #{tpu_custom_call.1} parent=71 // pred_check_branch
          %517 = sbr.rel (%p515) target = $region76
        $region75: #{tpu_custom_call.1} parent=71 // pred_region
          %v518 = vld [vmem:[%s496] sm:$0xff]
          %v519 = vld [vmem:[%s496 + $0x8] sm:$0xff]
          %v520 = vld [vmem:[%s496 + $0x10] sm:$0xff]
          %v521 = vld [vmem:[%s496 + $0x18] sm:$0xff]
          %v522 = vld [vmem:[%s5] sm:$0xff]
          %v523 = vld [vmem:[%s5 + $0x8] sm:$0xff]
          %v524 = vld [vmem:[%s5 + $0x10] sm:$0xff]
          %v525 = vld [vmem:[%s5 + $0x18] sm:$0xff]
          %v526 = vld [vmem:[%s5 + $0x20] sm:$0xff]
          %v527 = vld [vmem:[%s5 + $0x28] sm:$0xff]
          %v528 = vld [vmem:[%s5 + $0x30] sm:$0xff]
          %v529 = vld [vmem:[%s5 + $0x38] sm:$0xff]
          %v530 = vld [vmem:[%s6] sm:$0xff]
          %v531 = vld [vmem:[%s6 + $0x8] sm:$0xff]
          %v532 = vld [vmem:[%s6 + $0x10] sm:$0xff]
          %v533 = vld [vmem:[%s6 + $0x18] sm:$0xff]
          %v534 = vld [vmem:[%s6 + $0x20] sm:$0xff]
          %v535 = vld [vmem:[%s6 + $0x28] sm:$0xff]
          %v536 = vld [vmem:[%s6 + $0x30] sm:$0xff]
          %v537 = vld [vmem:[%s6 + $0x38] sm:$0xff]
          %539 = vset.pattern.permute.xlu0 0
          %540 = vperm.xlu0 %539, %v530
          %v541 = vpop.permute.xlu0 %540
          %544 = vset.pattern.permute.xlu0 0
          %545 = vperm.xlu0 %544, %v531
          %v546 = vpop.permute.xlu0 %545
          %549 = vset.pattern.permute.xlu0 0
          %550 = vperm.xlu0 %549, %v532
          %v551 = vpop.permute.xlu0 %550
          %554 = vset.pattern.permute.xlu0 0
          %555 = vperm.xlu0 %554, %v533
          %v556 = vpop.permute.xlu0 %555
          %559 = vset.pattern.permute.xlu0 0
          %560 = vperm.xlu0 %559, %v534
          %v561 = vpop.permute.xlu0 %560
          %564 = vset.pattern.permute.xlu0 0
          %565 = vperm.xlu0 %564, %v535
          %v566 = vpop.permute.xlu0 %565
          %569 = vset.pattern.permute.xlu0 0
          %570 = vperm.xlu0 %569, %v536
          %v571 = vpop.permute.xlu0 %570
          %574 = vset.pattern.permute.xlu0 0
          %575 = vperm.xlu0 %574, %v537
          %v576 = vpop.permute.xlu0 %575
          %vm578 = vcmask 261120
          %v580 = vsel %vm578, %v522, 0
          %v583 = vsel %vm578, %v523, 0
          %v586 = vsel %vm578, %v524, 0
          %v589 = vsel %vm578, %v525, 0
          %v592 = vsel %vm578, %v526, 0
          %v595 = vsel %vm578, %v527, 0
          %v598 = vsel %vm578, %v528, 0
          %v601 = vsel %vm578, %v529, 0
          %603 = vmatprep.subr.mxu0 0.0
          %604 = vmatpush1.msra.mxu0 0.0
          %605 = vmatprep.subr.mxu0 0.0
          %606 = vmatpush1.msra.mxu0 0.0
          %607 = vmatprep.subr.mxu0 0.0
          %608 = vmatpush1.msra.mxu0 0.0
          %609 = vmatprep.subr.mxu0 0.0
          %610 = vmatpush1.msra.mxu0 0.0
          %611 = vmatprep.subr.mxu0 0.0
          %612 = vmatpush1.msra.mxu0 0.0
          %613 = vmatprep.subr.mxu0 0.0
          %614 = vmatpush1.msra.mxu0 0.0
          %615 = vmatprep.subr.mxu0 0.0
          %616 = vmatpush1.msra.mxu0 0.0
          %617 = vmatprep.subr.mxu0 0.0
          %618 = vmatpush1.msra.mxu0 0.0
          %619 = vmatprep.subr.mxu0 0.0
          %620 = vmatpush1.msra.mxu0 0.0
          %621 = vmatprep.subr.mxu0 0.0
          %622 = vmatpush1.msra.mxu0 0.0
          %623 = vmatprep.subr.mxu0 0.0
          %624 = vmatpush1.msra.mxu0 0.0
          %625 = vmatprep.subr.mxu0 0.0
          %626 = vmatpush1.msra.mxu0 0.0
          %627 = vmatprep.subr.mxu0 0.0
          %628 = vmatpush1.msra.mxu0 %v521
          %629 = vmatprep.subr.mxu0 0.0
          %630 = vmatpush1.msra.mxu0 %v520
          %631 = vmatprep.subr.mxu0 0.0
          %632 = vmatpush1.msra.mxu0 %v519
          %633 = vmatprep.subr.mxu0 0.0
          %634 = vmatpush1.msra.mxu0 %v518
          %635 = vmatprep.subr.mxu0 0.0
          %636 = vmatpush2.msra.mxu0 0.0
          %637 = vmatprep.subr.mxu0 0.0
          %638 = vmatpush2.msra.mxu0 0.0
          %639 = vmatprep.subr.mxu0 0.0
          %640 = vmatpush2.msra.mxu0 0.0
          %641 = vmatprep.subr.mxu0 0.0
          %642 = vmatpush2.msra.mxu0 0.0
          %643 = vmatprep.subr.mxu0 0.0
          %644 = vmatpush2.msra.mxu0 0.0
          %645 = vmatprep.subr.mxu0 0.0
          %646 = vmatpush2.msra.mxu0 0.0
          %647 = vmatprep.subr.mxu0 0.0
          %648 = vmatpush2.msra.mxu0 0.0
          %649 = vmatprep.subr.mxu0 0.0
          %650 = vmatpush2.msra.mxu0 0.0
          %651 = vmatprep.subr.mxu0 0.0
          %652 = vmatpush2.msra.mxu0 0.0
          %653 = vmatprep.subr.mxu0 0.0
          %654 = vmatpush2.msra.mxu0 0.0
          %655 = vmatprep.subr.mxu0 0.0
          %656 = vmatpush2.msra.mxu0 0.0
          %657 = vmatprep.subr.mxu0 0.0
          %658 = vmatpush2.msra.mxu0 0.0
          %659 = vmatprep.subr.mxu0 0.0
          %660 = vmatpush2.msra.mxu0 0.0
          %661 = vmatprep.subr.mxu0 0.0
          %662 = vmatpush2.msra.mxu0 0.0
          %663 = vmatprep.subr.mxu0 0.0
          %664 = vmatpush2.msra.mxu0 0.0
          %665 = vmatprep.subr.mxu0 0.0
          %666 = vmatpush2.msra.mxu0 0.0
          %667 = vmatprep.mubr.f32.mxu0 0.0
          %668 = vmatmul.mubr.f32.gmra.mxu0 %v580
          %v669 = vpop.f32.mrf.mxu0
          %v670 = vadd.f32 %v541, %v669
          %v671 = vpop.f32.mrf.mxu0
          %672 = vmatprep.mubr.f32.mxu0 0.0
          %673 = vmatmul.mubr.f32.gmra.mxu0 %v583
          %v674 = vpop.f32.mrf.mxu0
          %v675 = vadd.f32 %v546, %v674
          %v676 = vpop.f32.mrf.mxu0
          %677 = vmatprep.mubr.f32.mxu0 0.0
          %678 = vmatmul.mubr.f32.gmra.mxu0 %v586
          %v679 = vpop.f32.mrf.mxu0
          %v680 = vadd.f32 %v551, %v679
          %v681 = vpop.f32.mrf.mxu0
          %682 = vmatprep.mubr.f32.mxu0 0.0
          %683 = vmatmul.mubr.f32.gmra.mxu0 %v589
          %v684 = vpop.f32.mrf.mxu0
          %v685 = vadd.f32 %v556, %v684
          %v686 = vpop.f32.mrf.mxu0
          %687 = vmatprep.mubr.f32.mxu0 0.0
          %688 = vmatmul.mubr.f32.gmra.mxu0 %v592
          %v689 = vpop.f32.mrf.mxu0
          %v690 = vadd.f32 %v561, %v689
          %v691 = vpop.f32.mrf.mxu0
          %692 = vmatprep.mubr.f32.mxu0 0.0
          %693 = vmatmul.mubr.f32.gmra.mxu0 %v595
          %v694 = vpop.f32.mrf.mxu0
          %v695 = vadd.f32 %v566, %v694
          %v696 = vpop.f32.mrf.mxu0
          %697 = vmatprep.mubr.f32.mxu0 0.0
          %698 = vmatmul.mubr.f32.gmra.mxu0 %v598
          %v699 = vpop.f32.mrf.mxu0
          %v700 = vadd.f32 %v571, %v699
          %v701 = vpop.f32.mrf.mxu0
          %702 = vmatprep.mubr.f32.mxu0 0.0
          %703 = vmatmul.mubr.f32.gmra.mxu0 %v601
          %v704 = vpop.f32.mrf.mxu0
          %v705 = vadd.f32 %v576, %v704
          %v706 = vpop.f32.mrf.mxu0
          %707 = vdwg.mxu0
          %v708 = vld [vmem:[%s7] sm:$0xff]
          %v709 = vld [vmem:[%s7 + $0x8] sm:$0xff]
          %v710 = vld [vmem:[%s7 + $0x10] sm:$0xff]
          %v711 = vld [vmem:[%s7 + $0x18] sm:$0xff]
          %v712 = vld [vmem:[%s7 + $0x20] sm:$0xff]
          %v713 = vld [vmem:[%s7 + $0x28] sm:$0xff]
          %v714 = vld [vmem:[%s7 + $0x30] sm:$0xff]
          %v715 = vld [vmem:[%s7 + $0x38] sm:$0xff]
          %v716 = vld [vmem:[%s8] sm:$0xff]
          %v717 = vld [vmem:[%s8 + $0x8] sm:$0xff]
          %v718 = vld [vmem:[%s8 + $0x10] sm:$0xff]
          %v719 = vld [vmem:[%s8 + $0x18] sm:$0xff]
          %v720 = vld [vmem:[%s8 + $0x20] sm:$0xff]
          %v721 = vld [vmem:[%s8 + $0x28] sm:$0xff]
          %v722 = vld [vmem:[%s8 + $0x30] sm:$0xff]
          %v723 = vld [vmem:[%s8 + $0x38] sm:$0xff]
          %725 = vset.pattern.permute.xlu0 0
          %726 = vperm.xlu0 %725, %v716
          %v727 = vpop.permute.xlu0 %726
          %730 = vset.pattern.permute.xlu0 0
          %731 = vperm.xlu0 %730, %v717
          %v732 = vpop.permute.xlu0 %731
          %735 = vset.pattern.permute.xlu0 0
          %736 = vperm.xlu0 %735, %v718
          %v737 = vpop.permute.xlu0 %736
          %740 = vset.pattern.permute.xlu0 0
          %741 = vperm.xlu0 %740, %v719
          %v742 = vpop.permute.xlu0 %741
          %745 = vset.pattern.permute.xlu0 0
          %746 = vperm.xlu0 %745, %v720
          %v747 = vpop.permute.xlu0 %746
          %750 = vset.pattern.permute.xlu0 0
          %751 = vperm.xlu0 %750, %v721
          %v752 = vpop.permute.xlu0 %751
          %755 = vset.pattern.permute.xlu0 0
          %756 = vperm.xlu0 %755, %v722
          %v757 = vpop.permute.xlu0 %756
          %760 = vset.pattern.permute.xlu0 0
          %761 = vperm.xlu0 %760, %v723
          %v762 = vpop.permute.xlu0 %761
          %v765 = vsel %vm578, %v708, 0
          %v768 = vsel %vm578, %v709, 0
          %v771 = vsel %vm578, %v710, 0
          %v774 = vsel %vm578, %v711, 0
          %v777 = vsel %vm578, %v712, 0
          %v780 = vsel %vm578, %v713, 0
          %v783 = vsel %vm578, %v714, 0
          %v786 = vsel %vm578, %v715, 0
          %788 = vmatprep.subr.mxu0 0.0
          %789 = vmatpush1.msra.mxu0 0.0
          %790 = vmatprep.subr.mxu0 0.0
          %791 = vmatpush1.msra.mxu0 0.0
          %792 = vmatprep.subr.mxu0 0.0
          %793 = vmatpush1.msra.mxu0 0.0
          %794 = vmatprep.subr.mxu0 0.0
          %795 = vmatpush1.msra.mxu0 0.0
          %796 = vmatprep.subr.mxu0 0.0
          %797 = vmatpush1.msra.mxu0 0.0
          %798 = vmatprep.subr.mxu0 0.0
          %799 = vmatpush1.msra.mxu0 0.0
          %800 = vmatprep.subr.mxu0 0.0
          %801 = vmatpush1.msra.mxu0 0.0
          %802 = vmatprep.subr.mxu0 0.0
          %803 = vmatpush1.msra.mxu0 0.0
          %804 = vmatprep.subr.mxu0 0.0
          %805 = vmatpush1.msra.mxu0 0.0
          %806 = vmatprep.subr.mxu0 0.0
          %807 = vmatpush1.msra.mxu0 0.0
          %808 = vmatprep.subr.mxu0 0.0
          %809 = vmatpush1.msra.mxu0 0.0
          %810 = vmatprep.subr.mxu0 0.0
          %811 = vmatpush1.msra.mxu0 0.0
          %812 = vmatprep.subr.mxu0 0.0
          %813 = vmatpush1.msra.mxu0 %v521
          %814 = vmatprep.subr.mxu0 0.0
          %815 = vmatpush1.msra.mxu0 %v520
          %816 = vmatprep.subr.mxu0 0.0
          %817 = vmatpush1.msra.mxu0 %v519
          %818 = vmatprep.subr.mxu0 0.0
          %819 = vmatpush1.msra.mxu0 %v518
          %820 = vmatprep.subr.mxu0 0.0
          %821 = vmatpush2.msra.mxu0 0.0
          %822 = vmatprep.subr.mxu0 0.0
          %823 = vmatpush2.msra.mxu0 0.0
          %824 = vmatprep.subr.mxu0 0.0
          %825 = vmatpush2.msra.mxu0 0.0
          %826 = vmatprep.subr.mxu0 0.0
          %827 = vmatpush2.msra.mxu0 0.0
          %828 = vmatprep.subr.mxu0 0.0
          %829 = vmatpush2.msra.mxu0 0.0
          %830 = vmatprep.subr.mxu0 0.0
          %831 = vmatpush2.msra.mxu0 0.0
          %832 = vmatprep.subr.mxu0 0.0
          %833 = vmatpush2.msra.mxu0 0.0
          %834 = vmatprep.subr.mxu0 0.0
          %835 = vmatpush2.msra.mxu0 0.0
          %836 = vmatprep.subr.mxu0 0.0
          %837 = vmatpush2.msra.mxu0 0.0
          %838 = vmatprep.subr.mxu0 0.0
          %839 = vmatpush2.msra.mxu0 0.0
          %840 = vmatprep.subr.mxu0 0.0
          %841 = vmatpush2.msra.mxu0 0.0
          %842 = vmatprep.subr.mxu0 0.0
          %843 = vmatpush2.msra.mxu0 0.0
          %844 = vmatprep.subr.mxu0 0.0
          %845 = vmatpush2.msra.mxu0 0.0
          %846 = vmatprep.subr.mxu0 0.0
          %847 = vmatpush2.msra.mxu0 0.0
          %848 = vmatprep.subr.mxu0 0.0
          %849 = vmatpush2.msra.mxu0 0.0
          %850 = vmatprep.subr.mxu0 0.0
          %851 = vmatpush2.msra.mxu0 0.0
          %852 = vmatprep.mubr.f32.mxu0 0.0
          %853 = vmatmul.mubr.f32.gmra.mxu0 %v765
          %v854 = vpop.f32.mrf.mxu0
          %v855 = vadd.f32 %v727, %v854
          %v856 = vpop.f32.mrf.mxu0
          %857 = vmatprep.mubr.f32.mxu0 0.0
          %858 = vmatmul.mubr.f32.gmra.mxu0 %v768
          %v859 = vpop.f32.mrf.mxu0
          %v860 = vadd.f32 %v732, %v859
          %v861 = vpop.f32.mrf.mxu0
          %862 = vmatprep.mubr.f32.mxu0 0.0
          %863 = vmatmul.mubr.f32.gmra.mxu0 %v771
          %v864 = vpop.f32.mrf.mxu0
          %v865 = vadd.f32 %v737, %v864
          %v866 = vpop.f32.mrf.mxu0
          %867 = vmatprep.mubr.f32.mxu0 0.0
          %868 = vmatmul.mubr.f32.gmra.mxu0 %v774
          %v869 = vpop.f32.mrf.mxu0
          %v870 = vadd.f32 %v742, %v869
          %v871 = vpop.f32.mrf.mxu0
          %872 = vmatprep.mubr.f32.mxu0 0.0
          %873 = vmatmul.mubr.f32.gmra.mxu0 %v777
          %v874 = vpop.f32.mrf.mxu0
          %v875 = vadd.f32 %v747, %v874
          %v876 = vpop.f32.mrf.mxu0
          %877 = vmatprep.mubr.f32.mxu0 0.0
          %878 = vmatmul.mubr.f32.gmra.mxu0 %v780
          %v879 = vpop.f32.mrf.mxu0
          %v880 = vadd.f32 %v752, %v879
          %v881 = vpop.f32.mrf.mxu0
          %882 = vmatprep.mubr.f32.mxu0 0.0
          %883 = vmatmul.mubr.f32.gmra.mxu0 %v783
          %v884 = vpop.f32.mrf.mxu0
          %v885 = vadd.f32 %v757, %v884
          %v886 = vpop.f32.mrf.mxu0
          %887 = vmatprep.mubr.f32.mxu0 0.0
          %888 = vmatmul.mubr.f32.gmra.mxu0 %v786
          %v889 = vpop.f32.mrf.mxu0
          %v890 = vadd.f32 %v762, %v889
          %v891 = vpop.f32.mrf.mxu0
          %892 = vdwg.mxu0
          %vm893 = vcmask 64512
          %894 = vst.msk [vmem:[#allocation2] sm:$0xff] %vm893, %v670
          %895 = vst.msk [vmem:[#allocation2 + $0x8] sm:$0xff] %vm893, %v675
          %896 = vst.msk [vmem:[#allocation2 + $0x10] sm:$0xff] %vm893, %v680
          %897 = vst.msk [vmem:[#allocation2 + $0x18] sm:$0xff] %vm893, %v685
          %898 = vst.msk [vmem:[#allocation2 + $0x20] sm:$0xff] %vm893, %v690
          %899 = vst.msk [vmem:[#allocation2 + $0x28] sm:$0xff] %vm893, %v695
          %900 = vst.msk [vmem:[#allocation2 + $0x30] sm:$0xff] %vm893, %v700
          %901 = vst.msk [vmem:[#allocation2 + $0x38] sm:$0xff] %vm893, %v705
          %902 = vst.msk [vmem:[#allocation3] sm:$0xff] %vm893, %v855
          %903 = vst.msk [vmem:[#allocation3 + $0x8] sm:$0xff] %vm893, %v860
          %904 = vst.msk [vmem:[#allocation3 + $0x10] sm:$0xff] %vm893, %v865
          %905 = vst.msk [vmem:[#allocation3 + $0x18] sm:$0xff] %vm893, %v870
          %906 = vst.msk [vmem:[#allocation3 + $0x20] sm:$0xff] %vm893, %v875
          %907 = vst.msk [vmem:[#allocation3 + $0x28] sm:$0xff] %vm893, %v880
          %908 = vst.msk [vmem:[#allocation3 + $0x30] sm:$0xff] %vm893, %v885
          %909 = vst.msk [vmem:[#allocation3 + $0x38] sm:$0xff] %vm893, %v890
        $region76: #{tpu_custom_call.1} parent=71 // pred_fallthru
          _
        %v910 = vld [vmem:[%s504] sm:$0xff]
        %v911 = vld [vmem:[%s504 + $0x8] sm:$0xff]
        %v912 = vld [vmem:[%s504 + $0x10] sm:$0xff]
        %v913 = vld [vmem:[%s504 + $0x18] sm:$0xff]
        %v914 = vld [vmem:[%s3] sm:$0xff]
        %v915 = vld [vmem:[%s3 + $0x8] sm:$0xff]
        %v916 = vld [vmem:[%s3 + $0x10] sm:$0xff]
        %v917 = vld [vmem:[%s3 + $0x18] sm:$0xff]
        %v918 = vld [vmem:[%s3 + $0x20] sm:$0xff]
        %v919 = vld [vmem:[%s3 + $0x28] sm:$0xff]
        %v920 = vld [vmem:[%s3 + $0x30] sm:$0xff]
        %v921 = vld [vmem:[%s3 + $0x38] sm:$0xff]
        %v922 = vld [vmem:[%s4] sm:$0xff]
        %v923 = vld [vmem:[%s4 + $0x8] sm:$0xff]
        %v924 = vld [vmem:[%s4 + $0x10] sm:$0xff]
        %v925 = vld [vmem:[%s4 + $0x18] sm:$0xff]
        %v926 = vld [vmem:[%s4 + $0x20] sm:$0xff]
        %v927 = vld [vmem:[%s4 + $0x28] sm:$0xff]
        %v928 = vld [vmem:[%s4 + $0x30] sm:$0xff]
        %v929 = vld [vmem:[%s4 + $0x38] sm:$0xff]
        %931 = vset.pattern.permute.xlu0 0
        %932 = vperm.xlu0 %931, %v922
        %v933 = vpop.permute.xlu0 %932
        %936 = vset.pattern.permute.xlu0 0
        %937 = vperm.xlu0 %936, %v923
        %v938 = vpop.permute.xlu0 %937
        %941 = vset.pattern.permute.xlu0 0
        %942 = vperm.xlu0 %941, %v924
        %v943 = vpop.permute.xlu0 %942
        %946 = vset.pattern.permute.xlu0 0
        %947 = vperm.xlu0 %946, %v925
        %v948 = vpop.permute.xlu0 %947
        %951 = vset.pattern.permute.xlu0 0
        %952 = vperm.xlu0 %951, %v926
        %v953 = vpop.permute.xlu0 %952
        %956 = vset.pattern.permute.xlu0 0
        %957 = vperm.xlu0 %956, %v927
        %v958 = vpop.permute.xlu0 %957
        %961 = vset.pattern.permute.xlu0 0
        %962 = vperm.xlu0 %961, %v928
        %v963 = vpop.permute.xlu0 %962
        %966 = vset.pattern.permute.xlu0 0
        %967 = vperm.xlu0 %966, %v929
        %v968 = vpop.permute.xlu0 %967
        %vm970 = vcmask 261120
        %v972 = vsel %vm970, %v914, 0
        %v975 = vsel %vm970, %v915, 0
        %v978 = vsel %vm970, %v916, 0
        %v981 = vsel %vm970, %v917, 0
        %v984 = vsel %vm970, %v918, 0
        %v987 = vsel %vm970, %v919, 0
        %v990 = vsel %vm970, %v920, 0
        %v993 = vsel %vm970, %v921, 0
        %995 = vmatprep.subr.mxu0 0.0
        %996 = vmatpush1.msra.mxu0 0.0
        %997 = vmatprep.subr.mxu0 0.0
        %998 = vmatpush1.msra.mxu0 0.0
        %999 = vmatprep.subr.mxu0 0.0
        %1000 = vmatpush1.msra.mxu0 0.0
        %1001 = vmatprep.subr.mxu0 0.0
        %1002 = vmatpush1.msra.mxu0 0.0
        %1003 = vmatprep.subr.mxu0 0.0
        %1004 = vmatpush1.msra.mxu0 0.0
        %1005 = vmatprep.subr.mxu0 0.0
        %1006 = vmatpush1.msra.mxu0 0.0
        %1007 = vmatprep.subr.mxu0 0.0
        %1008 = vmatpush1.msra.mxu0 0.0
        %1009 = vmatprep.subr.mxu0 0.0
        %1010 = vmatpush1.msra.mxu0 0.0
        %1011 = vmatprep.subr.mxu0 0.0
        %1012 = vmatpush1.msra.mxu0 0.0
        %1013 = vmatprep.subr.mxu0 0.0
        %1014 = vmatpush1.msra.mxu0 0.0
        %1015 = vmatprep.subr.mxu0 0.0
        %1016 = vmatpush1.msra.mxu0 0.0
        %1017 = vmatprep.subr.mxu0 0.0
        %1018 = vmatpush1.msra.mxu0 0.0
        %1019 = vmatprep.subr.mxu0 0.0
        %1020 = vmatpush1.msra.mxu0 %v913
        %1021 = vmatprep.subr.mxu0 0.0
        %1022 = vmatpush1.msra.mxu0 %v912
        %1023 = vmatprep.subr.mxu0 0.0
        %1024 = vmatpush1.msra.mxu0 %v911
        %1025 = vmatprep.subr.mxu0 0.0
        %1026 = vmatpush1.msra.mxu0 %v910
        %1027 = vmatprep.subr.mxu0 0.0
        %1028 = vmatpush2.msra.mxu0 0.0
        %1029 = vmatprep.subr.mxu0 0.0
        %1030 = vmatpush2.msra.mxu0 0.0
        %1031 = vmatprep.subr.mxu0 0.0
        %1032 = vmatpush2.msra.mxu0 0.0
        %1033 = vmatprep.subr.mxu0 0.0
        %1034 = vmatpush2.msra.mxu0 0.0
        %1035 = vmatprep.subr.mxu0 0.0
        %1036 = vmatpush2.msra.mxu0 0.0
        %1037 = vmatprep.subr.mxu0 0.0
        %1038 = vmatpush2.msra.mxu0 0.0
        %1039 = vmatprep.subr.mxu0 0.0
        %1040 = vmatpush2.msra.mxu0 0.0
        %1041 = vmatprep.subr.mxu0 0.0
        %1042 = vmatpush2.msra.mxu0 0.0
        %1043 = vmatprep.subr.mxu0 0.0
        %1044 = vmatpush2.msra.mxu0 0.0
        %1045 = vmatprep.subr.mxu0 0.0
        %1046 = vmatpush2.msra.mxu0 0.0
        %1047 = vmatprep.subr.mxu0 0.0
        %1048 = vmatpush2.msra.mxu0 0.0
        %1049 = vmatprep.subr.mxu0 0.0
        %1050 = vmatpush2.msra.mxu0 0.0
        %1051 = vmatprep.subr.mxu0 0.0
        %1052 = vmatpush2.msra.mxu0 0.0
        %1053 = vmatprep.subr.mxu0 0.0
        %1054 = vmatpush2.msra.mxu0 0.0
        %1055 = vmatprep.subr.mxu0 0.0
        %1056 = vmatpush2.msra.mxu0 0.0
        %1057 = vmatprep.subr.mxu0 0.0
        %1058 = vmatpush2.msra.mxu0 0.0
        %1059 = vmatprep.mubr.f32.mxu0 0.0
        %1060 = vmatmul.mubr.f32.gmra.mxu0 %v972
        %v1061 = vpop.f32.mrf.mxu0
        %v1062 = vadd.f32 %v933, %v1061
        %v1063 = vpop.f32.mrf.mxu0
        %1064 = vmatprep.mubr.f32.mxu0 0.0
        %1065 = vmatmul.mubr.f32.gmra.mxu0 %v975
        %v1066 = vpop.f32.mrf.mxu0
        %v1067 = vadd.f32 %v938, %v1066
        %v1068 = vpop.f32.mrf.mxu0
        %1069 = vmatprep.mubr.f32.mxu0 0.0
        %1070 = vmatmul.mubr.f32.gmra.mxu0 %v978
        %v1071 = vpop.f32.mrf.mxu0
        %v1072 = vadd.f32 %v943, %v1071
        %v1073 = vpop.f32.mrf.mxu0
        %1074 = vmatprep.mubr.f32.mxu0 0.0
        %1075 = vmatmul.mubr.f32.gmra.mxu0 %v981
        %v1076 = vpop.f32.mrf.mxu0
        %v1077 = vadd.f32 %v948, %v1076
        %v1078 = vpop.f32.mrf.mxu0
        %1079 = vmatprep.mubr.f32.mxu0 0.0
        %1080 = vmatmul.mubr.f32.gmra.mxu0 %v984
        %v1081 = vpop.f32.mrf.mxu0
        %v1082 = vadd.f32 %v953, %v1081
        %v1083 = vpop.f32.mrf.mxu0
        %1084 = vmatprep.mubr.f32.mxu0 0.0
        %1085 = vmatmul.mubr.f32.gmra.mxu0 %v987
        %v1086 = vpop.f32.mrf.mxu0
        %v1087 = vadd.f32 %v958, %v1086
        %v1088 = vpop.f32.mrf.mxu0
        %1089 = vmatprep.mubr.f32.mxu0 0.0
        %1090 = vmatmul.mubr.f32.gmra.mxu0 %v990
        %v1091 = vpop.f32.mrf.mxu0
        %v1092 = vadd.f32 %v963, %v1091
        %v1093 = vpop.f32.mrf.mxu0
        %1094 = vmatprep.mubr.f32.mxu0 0.0
        %1095 = vmatmul.mubr.f32.gmra.mxu0 %v993
        %v1096 = vpop.f32.mrf.mxu0
        %v1097 = vadd.f32 %v968, %v1096
        %v1098 = vpop.f32.mrf.mxu0
        %1099 = vdwg.mxu0
        %v1100 = vmul.f32 %v1062, 0.35355338
        %v1101 = vmul.f32 %v1067, 0.35355338
        %v1102 = vmul.f32 %v1072, 0.35355338
        %v1103 = vmul.f32 %v1077, 0.35355338
        %v1104 = vmul.f32 %v1082, 0.35355338
        %v1105 = vmul.f32 %v1087, 0.35355338
        %v1106 = vmul.f32 %v1092, 0.35355338
        %v1107 = vmul.f32 %v1097, 0.35355338
        %vm1108 = vcmask 64512
        %1109 = vst.msk [vmem:[#allocation4] sm:$0xff] %vm1108, %v1100
        %1110 = vst.msk [vmem:[#allocation4 + $0x8] sm:$0xff] %vm1108, %v1101
        %1111 = vst.msk [vmem:[#allocation4 + $0x10] sm:$0xff] %vm1108, %v1102
        %1112 = vst.msk [vmem:[#allocation4 + $0x18] sm:$0xff] %vm1108, %v1103
        %1113 = vst.msk [vmem:[#allocation4 + $0x20] sm:$0xff] %vm1108, %v1104
        %1114 = vst.msk [vmem:[#allocation4 + $0x28] sm:$0xff] %vm1108, %v1105
        %1115 = vst.msk [vmem:[#allocation4 + $0x30] sm:$0xff] %vm1108, %v1106
        %1116 = vst.msk [vmem:[#allocation4 + $0x38] sm:$0xff] %vm1108, %v1107
        loop: start=0, step=1, limit=4
        $region77: #{tpu_custom_call.1} parent=71 // loop_pre_header
          _
        $region78: #{tpu_custom_call.1} parent=71 // loop_header
          %s1118 = sphi 0, %s1122
          %p1119 = scmp.ge.s32.totalorder %s1118, 4
        $region79: #{tpu_custom_call.1} parent=71 // loop_header_branch
          %1121 = sbr.rel (%p1119) target = $region83
        $region80: #{tpu_custom_call.1} parent=71 // loop_body
          %s1123 = smul.u32 %s1118, 16
          %s1124 = scalar_lea.vmem [#allocation4], %s1123
          %v1125 = vld [vmem:[%s1124] sm:$0xff]
          %v1126 = vld [vmem:[%s1124 + $0x8] sm:$0xff]
          %s1127 = scalar_lea.vmem [#allocation2], %s1123
          %v1128 = vld [vmem:[%s1127] sm:$0xff]
          %v1129 = vld [vmem:[%s1127 + $0x8] sm:$0xff]
          %s1130 = scalar_lea.vmem [#allocation3], %s1123
          %v1131 = vld [vmem:[%s1130] sm:$0xff]
          %v1132 = vld [vmem:[%s1130 + $0x8] sm:$0xff]
          %1133 = vxpose.xlu0.b32.start [1/16] %v1125, 128
          %1134 = vxpose.xlu0.b32.cont [2/16] %v1126, 128
          %1135 = vxpose.xlu0.b32.cont [3/16] 0.0, 128
          %1136 = vxpose.xlu0.b32.cont [4/16] 0.0, 128
          %1137 = vxpose.xlu0.b32.cont [5/16] 0.0, 128
          %1138 = vxpose.xlu0.b32.cont [6/16] 0.0, 128
          %1139 = vxpose.xlu0.b32.cont [7/16] 0.0, 128
          %1140 = vxpose.xlu0.b32.cont [8/16] 0.0, 128
          %1141 = vxpose.xlu0.b32.cont [9/16] 0.0, 128
          %1142 = vxpose.xlu0.b32.cont [10/16] 0.0, 128
          %1143 = vxpose.xlu0.b32.cont [11/16] 0.0, 128
          %1144 = vxpose.xlu0.b32.cont [12/16] 0.0, 128
          %1145 = vxpose.xlu0.b32.cont [13/16] 0.0, 128
          %1146 = vxpose.xlu0.b32.cont [14/16] 0.0, 128
          %1147 = vxpose.xlu0.b32.cont [15/16] 0.0, 128
          %1148 = vxpose.xlu0.b32.end [16/16] 0.0, 128
          %v1149 = vpop.trf.xlu0
          %v1150 = vpop.trf.xlu0
          %v1151 = vpop.trf.xlu0
          %v1152 = vpop.trf.xlu0
          %v1153 = vpop.trf.xlu0
          %v1154 = vpop.trf.xlu0
          %v1155 = vpop.trf.xlu0
          %v1156 = vpop.trf.xlu0
          %v1157 = vpop.trf.xlu0
          %v1158 = vpop.trf.xlu0
          %v1159 = vpop.trf.xlu0
          %v1160 = vpop.trf.xlu0
          %v1161 = vpop.trf.xlu0
          %v1162 = vpop.trf.xlu0
          %v1163 = vpop.trf.xlu0
          %v1164 = vpop.trf.xlu0
          %vm1165 = vcmask 130048
          %v1167 = vsel %vm1165, %v1149, 0
          %1169 = vmatprep.subr.mxu0 0.0
          %1170 = vmatpush1.msra.mxu0 0.0
          %1171 = vmatprep.subr.mxu0 0.0
          %1172 = vmatpush1.msra.mxu0 0.0
          %1173 = vmatprep.subr.mxu0 0.0
          %1174 = vmatpush1.msra.mxu0 0.0
          %1175 = vmatprep.subr.mxu0 0.0
          %1176 = vmatpush1.msra.mxu0 0.0
          %1177 = vmatprep.subr.mxu0 0.0
          %1178 = vmatpush1.msra.mxu0 0.0
          %1179 = vmatprep.subr.mxu0 0.0
          %1180 = vmatpush1.msra.mxu0 0.0
          %1181 = vmatprep.subr.mxu0 0.0
          %1182 = vmatpush1.msra.mxu0 0.0
          %1183 = vmatprep.subr.mxu0 0.0
          %1184 = vmatpush1.msra.mxu0 0.0
          %1185 = vmatprep.subr.mxu0 0.0
          %1186 = vmatpush1.msra.mxu0 0.0
          %1187 = vmatprep.subr.mxu0 0.0
          %1188 = vmatpush1.msra.mxu0 0.0
          %1189 = vmatprep.subr.mxu0 0.0
          %1190 = vmatpush1.msra.mxu0 0.0
          %1191 = vmatprep.subr.mxu0 0.0
          %1192 = vmatpush1.msra.mxu0 0.0
          %1193 = vmatprep.subr.mxu0 0.0
          %1194 = vmatpush1.msra.mxu0 0.0
          %1195 = vmatprep.subr.mxu0 0.0
          %1196 = vmatpush1.msra.mxu0 0.0
          %1197 = vmatprep.subr.mxu0 0.0
          %1198 = vmatpush1.msra.mxu0 %v1129
          %1199 = vmatprep.subr.mxu0 0.0
          %1200 = vmatpush1.msra.mxu0 %v1128
          %1201 = vmatprep.subr.mxu0 0.0
          %1202 = vmatpush2.msra.mxu0 0.0
          %1203 = vmatprep.subr.mxu0 0.0
          %1204 = vmatpush2.msra.mxu0 0.0
          %1205 = vmatprep.subr.mxu0 0.0
          %1206 = vmatpush2.msra.mxu0 0.0
          %1207 = vmatprep.subr.mxu0 0.0
          %1208 = vmatpush2.msra.mxu0 0.0
          %1209 = vmatprep.subr.mxu0 0.0
          %1210 = vmatpush2.msra.mxu0 0.0
          %1211 = vmatprep.subr.mxu0 0.0
          %1212 = vmatpush2.msra.mxu0 0.0
          %1213 = vmatprep.subr.mxu0 0.0
          %1214 = vmatpush2.msra.mxu0 0.0
          %1215 = vmatprep.subr.mxu0 0.0
          %1216 = vmatpush2.msra.mxu0 0.0
          %1217 = vmatprep.subr.mxu0 0.0
          %1218 = vmatpush2.msra.mxu0 0.0
          %1219 = vmatprep.subr.mxu0 0.0
          %1220 = vmatpush2.msra.mxu0 0.0
          %1221 = vmatprep.subr.mxu0 0.0
          %1222 = vmatpush2.msra.mxu0 0.0
          %1223 = vmatprep.subr.mxu0 0.0
          %1224 = vmatpush2.msra.mxu0 0.0
          %1225 = vmatprep.subr.mxu0 0.0
          %1226 = vmatpush2.msra.mxu0 0.0
          %1227 = vmatprep.subr.mxu0 0.0
          %1228 = vmatpush2.msra.mxu0 0.0
          %1229 = vmatprep.subr.mxu0 0.0
          %1230 = vmatpush2.msra.mxu0 0.0
          %1231 = vmatprep.subr.mxu0 0.0
          %1232 = vmatpush2.msra.mxu0 0.0
          %1233 = vmatprep.mubr.f32.mxu0 0.0
          %1234 = vmatmul.mubr.f32.gmra.mxu0 %v1167
          %v1235 = vpop.f32.mrf.mxu0
          %v1236 = vadd.f32 0.0, %v1235
          %v1237 = vpop.f32.mrf.mxu0
          %1238 = vdwg.mxu0
          %v1239 = vld [vmem:[%s511] sm:$0x3]
          %vm1240 = vnez %v1239
          %v1241 = vsel %vm1240, 16843009, 0
          %v1242 = vunpack.c.0.s8 %v1241
          %vm1243 = vcmp.ne.s32.totalorder %v1242, 0
          %v1244 = vsel %vm1243, -1e+09, %v1236
          %v1245 = vsel %vm1108, %v1244, -inf
          %1246 = vmax.xlane.f32.xlu0 %v1245
          %v1247 = vpop.xlane.xlu0 %1246
          %v1248 = vsub.f32 %v1244, %v1247
          %v1249 = vmul.f32 %v1248, 1.442695
          %v1250 = vpow.pop %v1249
          %v1251 = vsel %vm1108, %v1250, 0.0
          %1252 = vadd.xlane.f32.xlu0 %v1251
          %v1253 = vpop.xlane.xlu0 %1252
          %v1254 = vrcp.pop %v1253
          %v1255 = vmul.f32 %v1250, %v1254
          %v1257 = vsel %vm1108, %v1131, 0
          %v1260 = vsel %vm1108, %v1132, 0
          %v1263 = vsel %vm1108, %v1255, 0
          %1265 = vmatprep.subr.mxu0 0.0
          %1266 = vmatpush1.xpose.msra.mxu0 0.0
          %1267 = vmatprep.subr.mxu0 0.0
          %1268 = vmatpush1.xpose.msra.mxu0 0.0
          %1269 = vmatprep.subr.mxu0 0.0
          %1270 = vmatpush1.xpose.msra.mxu0 0.0
          %1271 = vmatprep.subr.mxu0 0.0
          %1272 = vmatpush1.xpose.msra.mxu0 0.0
          %1273 = vmatprep.subr.mxu0 0.0
          %1274 = vmatpush1.xpose.msra.mxu0 0.0
          %1275 = vmatprep.subr.mxu0 0.0
          %1276 = vmatpush1.xpose.msra.mxu0 0.0
          %1277 = vmatprep.subr.mxu0 0.0
          %1278 = vmatpush1.xpose.msra.mxu0 0.0
          %1279 = vmatprep.subr.mxu0 0.0
          %1280 = vmatpush1.xpose.msra.mxu0 0.0
          %1281 = vmatprep.subr.mxu0 0.0
          %1282 = vmatpush1.xpose.msra.mxu0 0.0
          %1283 = vmatprep.subr.mxu0 0.0
          %1284 = vmatpush1.xpose.msra.mxu0 0.0
          %1285 = vmatprep.subr.mxu0 0.0
          %1286 = vmatpush1.xpose.msra.mxu0 0.0
          %1287 = vmatprep.subr.mxu0 0.0
          %1288 = vmatpush1.xpose.msra.mxu0 0.0
          %1289 = vmatprep.subr.mxu0 0.0
          %1290 = vmatpush1.xpose.msra.mxu0 0.0
          %1291 = vmatprep.subr.mxu0 0.0
          %1292 = vmatpush1.xpose.msra.mxu0 0.0
          %1293 = vmatprep.subr.mxu0 0.0
          %1294 = vmatpush1.xpose.msra.mxu0 0.0
          %1295 = vmatprep.subr.mxu0 0.0
          %1296 = vmatpush1.xpose.msra.mxu0 %v1263
          %1297 = vmatprep.subr.mxu0 0.0
          %1298 = vmatpush2.xpose.msra.mxu0 0.0
          %1299 = vmatprep.subr.mxu0 0.0
          %1300 = vmatpush2.xpose.msra.mxu0 0.0
          %1301 = vmatprep.subr.mxu0 0.0
          %1302 = vmatpush2.xpose.msra.mxu0 0.0
          %1303 = vmatprep.subr.mxu0 0.0
          %1304 = vmatpush2.xpose.msra.mxu0 0.0
          %1305 = vmatprep.subr.mxu0 0.0
          %1306 = vmatpush2.xpose.msra.mxu0 0.0
          %1307 = vmatprep.subr.mxu0 0.0
          %1308 = vmatpush2.xpose.msra.mxu0 0.0
          %1309 = vmatprep.subr.mxu0 0.0
          %1310 = vmatpush2.xpose.msra.mxu0 0.0
          %1311 = vmatprep.subr.mxu0 0.0
          %1312 = vmatpush2.xpose.msra.mxu0 0.0
          %1313 = vmatprep.subr.mxu0 0.0
          %1314 = vmatpush2.xpose.msra.mxu0 0.0
          %1315 = vmatprep.subr.mxu0 0.0
          %1316 = vmatpush2.xpose.msra.mxu0 0.0
          %1317 = vmatprep.subr.mxu0 0.0
          %1318 = vmatpush2.xpose.msra.mxu0 0.0
          %1319 = vmatprep.subr.mxu0 0.0
          %1320 = vmatpush2.xpose.msra.mxu0 0.0
          %1321 = vmatprep.subr.mxu0 0.0
          %1322 = vmatpush2.xpose.msra.mxu0 0.0
          %1323 = vmatprep.subr.mxu0 0.0
          %1324 = vmatpush2.xpose.msra.mxu0 0.0
          %1325 = vmatprep.subr.mxu0 0.0
          %1326 = vmatpush2.xpose.msra.mxu0 0.0
          %1327 = vmatprep.subr.mxu0 0.0
          %1328 = vmatpush2.xpose.msra.mxu0 0.0
          %1329 = vmatprep.mubr.f32.mxu0 0.0
          %1330 = vmatmul.mubr.f32.gmra.mxu0 %v1257
          %v1331 = vpop.f32.mrf.mxu0
          %v1332 = vadd.f32 0.0, %v1331
          %v1333 = vpop.f32.mrf.mxu0
          %1334 = vmatprep.mubr.f32.mxu0 0.0
          %1335 = vmatmul.mubr.f32.gmra.mxu0 %v1260
          %v1336 = vpop.f32.mrf.mxu0
          %v1337 = vadd.f32 0.0, %v1336
          %v1338 = vpop.f32.mrf.mxu0
          %1339 = vdwg.mxu0
          %s1340 = scalar_lea.vmem [#allocation5], %s1123
          %1341 = vst.msk [vmem:[%s1340] sm:$0xff] %vm1108, %v1332
          %1342 = vst.msk [vmem:[%s1340 + $0x8] sm:$0xff] %vm1108, %v1337
        $region81: #{tpu_custom_call.1} parent=71 // loop_footer
          %s1122 = sadd.s32 1, %s1118
        $region82: #{tpu_custom_call.1} parent=71 // loop_footer_branch
          %1117 = sbr.rel target = $region78
        $region83: #{tpu_custom_call.1} parent=71 // loop_exit
          _
        %v1343 = vld [vmem:[#allocation5] sm:$0xff]
        %v1344 = vld [vmem:[#allocation5 + $0x8] sm:$0xff]
        %v1345 = vld [vmem:[#allocation5 + $0x10] sm:$0xff]
        %v1346 = vld [vmem:[#allocation5 + $0x18] sm:$0xff]
        %v1347 = vld [vmem:[#allocation5 + $0x20] sm:$0xff]
        %v1348 = vld [vmem:[#allocation5 + $0x28] sm:$0xff]
        %v1349 = vld [vmem:[#allocation5 + $0x30] sm:$0xff]
        %v1350 = vld [vmem:[#allocation5 + $0x38] sm:$0xff]
        %v1351 = vld [vmem:[%s9] sm:$0xff]
        %v1352 = vld [vmem:[%s9 + $0x8] sm:$0xff]
        %v1353 = vld [vmem:[%s9 + $0x10] sm:$0xff]
        %v1354 = vld [vmem:[%s9 + $0x18] sm:$0xff]
        %v1355 = vld [vmem:[%s9 + $0x20] sm:$0xff]
        %v1356 = vld [vmem:[%s9 + $0x28] sm:$0xff]
        %v1357 = vld [vmem:[%s9 + $0x30] sm:$0xff]
        %v1358 = vld [vmem:[%s9 + $0x38] sm:$0xff]
        %v1359 = vld [vmem:[%s10] sm:$0x1]
        %v1361 = vlaneseq
        %v1362 = vshrl.u32 %v1361, 7
        %v1363 = vsub.s32 0, %v1362
        %v1364 = vrot.slane %v1359, %v1363
        %1366 = vxpose.xlu0.b32.start [1/16] %v1343, 128
        %1367 = vxpose.xlu0.b32.cont [2/16] %v1344, 128
        %1368 = vxpose.xlu0.b32.cont [3/16] %v1345, 128
        %1369 = vxpose.xlu0.b32.cont [4/16] %v1346, 128
        %1370 = vxpose.xlu0.b32.cont [5/16] %v1347, 128
        %1371 = vxpose.xlu0.b32.cont [6/16] %v1348, 128
        %1372 = vxpose.xlu0.b32.cont [7/16] %v1349, 128
        %1373 = vxpose.xlu0.b32.cont [8/16] %v1350, 128
        %1374 = vxpose.xlu0.b32.cont [9/16] 0.0, 128
        %1375 = vxpose.xlu0.b32.cont [10/16] 0.0, 128
        %1376 = vxpose.xlu0.b32.cont [11/16] 0.0, 128
        %1377 = vxpose.xlu0.b32.cont [12/16] 0.0, 128
        %1378 = vxpose.xlu0.b32.cont [13/16] 0.0, 128
        %1379 = vxpose.xlu0.b32.cont [14/16] 0.0, 128
        %1380 = vxpose.xlu0.b32.cont [15/16] 0.0, 128
        %1381 = vxpose.xlu0.b32.end [16/16] 0.0, 128
        %v1382 = vpop.trf.xlu0
        %v1383 = vpop.trf.xlu0
        %v1384 = vpop.trf.xlu0
        %v1385 = vpop.trf.xlu0
        %v1386 = vpop.trf.xlu0
        %v1387 = vpop.trf.xlu0
        %v1388 = vpop.trf.xlu0
        %v1389 = vpop.trf.xlu0
        %v1390 = vpop.trf.xlu0
        %v1391 = vpop.trf.xlu0
        %v1392 = vpop.trf.xlu0
        %v1393 = vpop.trf.xlu0
        %v1394 = vpop.trf.xlu0
        %v1395 = vpop.trf.xlu0
        %v1396 = vpop.trf.xlu0
        %v1397 = vpop.trf.xlu0
        %vm1398 = vcmask 523264
        %v1400 = vsel %vm1398, %v1382, 0
        %1402 = vmatprep.subr.mxu0 0.0
        %1403 = vmatpush1.msra.mxu0 0.0
        %1404 = vmatprep.subr.mxu0 0.0
        %1405 = vmatpush1.msra.mxu0 0.0
        %1406 = vmatprep.subr.mxu0 0.0
        %1407 = vmatpush1.msra.mxu0 0.0
        %1408 = vmatprep.subr.mxu0 0.0
        %1409 = vmatpush1.msra.mxu0 0.0
        %1410 = vmatprep.subr.mxu0 0.0
        %1411 = vmatpush1.msra.mxu0 0.0
        %1412 = vmatprep.subr.mxu0 0.0
        %1413 = vmatpush1.msra.mxu0 0.0
        %1414 = vmatprep.subr.mxu0 0.0
        %1415 = vmatpush1.msra.mxu0 0.0
        %1416 = vmatprep.subr.mxu0 0.0
        %1417 = vmatpush1.msra.mxu0 0.0
        %1418 = vmatprep.subr.mxu0 0.0
        %1419 = vmatpush1.msra.mxu0 %v1358
        %1420 = vmatprep.subr.mxu0 0.0
        %1421 = vmatpush1.msra.mxu0 %v1357
        %1422 = vmatprep.subr.mxu0 0.0
        %1423 = vmatpush1.msra.mxu0 %v1356
        %1424 = vmatprep.subr.mxu0 0.0
        %1425 = vmatpush1.msra.mxu0 %v1355
        %1426 = vmatprep.subr.mxu0 0.0
        %1427 = vmatpush1.msra.mxu0 %v1354
        %1428 = vmatprep.subr.mxu0 0.0
        %1429 = vmatpush1.msra.mxu0 %v1353
        %1430 = vmatprep.subr.mxu0 0.0
        %1431 = vmatpush1.msra.mxu0 %v1352
        %1432 = vmatprep.subr.mxu0 0.0
        %1433 = vmatpush1.msra.mxu0 %v1351
        %1434 = vmatprep.subr.mxu0 0.0
        %1435 = vmatpush2.msra.mxu0 0.0
        %1436 = vmatprep.subr.mxu0 0.0
        %1437 = vmatpush2.msra.mxu0 0.0
        %1438 = vmatprep.subr.mxu0 0.0
        %1439 = vmatpush2.msra.mxu0 0.0
        %1440 = vmatprep.subr.mxu0 0.0
        %1441 = vmatpush2.msra.mxu0 0.0
        %1442 = vmatprep.subr.mxu0 0.0
        %1443 = vmatpush2.msra.mxu0 0.0
        %1444 = vmatprep.subr.mxu0 0.0
        %1445 = vmatpush2.msra.mxu0 0.0
        %1446 = vmatprep.subr.mxu0 0.0
        %1447 = vmatpush2.msra.mxu0 0.0
        %1448 = vmatprep.subr.mxu0 0.0
        %1449 = vmatpush2.msra.mxu0 0.0
        %1450 = vmatprep.subr.mxu0 0.0
        %1451 = vmatpush2.msra.mxu0 0.0
        %1452 = vmatprep.subr.mxu0 0.0
        %1453 = vmatpush2.msra.mxu0 0.0
        %1454 = vmatprep.subr.mxu0 0.0
        %1455 = vmatpush2.msra.mxu0 0.0
        %1456 = vmatprep.subr.mxu0 0.0
        %1457 = vmatpush2.msra.mxu0 0.0
        %1458 = vmatprep.subr.mxu0 0.0
        %1459 = vmatpush2.msra.mxu0 0.0
        %1460 = vmatprep.subr.mxu0 0.0
        %1461 = vmatpush2.msra.mxu0 0.0
        %1462 = vmatprep.subr.mxu0 0.0
        %1463 = vmatpush2.msra.mxu0 0.0
        %1464 = vmatprep.subr.mxu0 0.0
        %1465 = vmatpush2.msra.mxu0 0.0
        %1466 = vmatprep.mubr.f32.mxu0 0.0
        %1467 = vmatmul.mubr.f32.gmra.mxu0 %v1400
        %v1468 = vpop.f32.mrf.mxu0
        %v1469 = vadd.f32 %v1364, %v1468
        %v1470 = vpop.f32.mrf.mxu0
        %1471 = vdwg.mxu0
        %v1472 = vsel %vm970, %v1469, 0.0
        %1473 = vadd.xlane.f32.xlu0 %v1472
        %v1474 = vpop.xlane.xlu0 %1473
        %v1475 = vrcp.pop 32.0
        %v1476 = vmul.f32 %v1474, %v1475
        %v1477 = vsub.f32 %v1469, %v1476
        %v1478 = vmul.f32 %v1477, %v1477
        %v1479 = vsel %vm970, %v1478, 0.0
        %1480 = vadd.xlane.f32.xlu0 %v1479
        %v1481 = vpop.xlane.xlu0 %1480
        %v1482 = vmul.f32 %v1481, %v1475
        %v1483 = vadd.f32 %v1482, 1e-05
        %v1484 = vrsqrt.pop %v1483
        %v1485 = vmul.f32 %v1477, %v1484
        %v1486 = vld [vmem:[%s11] sm:$0x1]
        %v1488 = vlaneseq
        %v1489 = vshrl.u32 %v1488, 7
        %v1490 = vsub.s32 0, %v1489
        %v1491 = vrot.slane %v1486, %v1490
        %v1493 = vmul.f32 %v1485, %v1491
        %v1494 = vld [vmem:[%s12] sm:$0x1]
        %v1496 = vlaneseq
        %v1497 = vshrl.u32 %v1496, 7
        %v1498 = vsub.s32 0, %v1497
        %v1499 = vrot.slane %v1494, %v1498
        %v1501 = vadd.f32 %v1493, %v1499
        %1502 = vst.msk [vmem:[%s491] sm:$0xff] %vm970, %v1501
        %s1503 = sand.u32 %s341, 1
        %s1504 = scalar_lea.sflag [#allocation7], %s1503
        %s1505 = sand.u32 %s341, 1
        %s1506 = smul.addr %s1505, 8
        %s1507 = scalar_lea.vmem [#allocation6], %s1506
        // Predicated region
        $region84: #{tpu_custom_call.1} parent=71 // pred_check
          %p1508 = pneg %p351
        $region85: #{tpu_custom_call.1} parent=71 // pred_check_branch
          %1510 = sbr.rel (%p1508) target = $region87
        $region86: #{tpu_custom_call.1} parent=71 // pred_region
          %s1512 = ssub.s32 128, 128
          %1513 = vsyncadd %s1504, %s1512
          %s1514 = sadd.s32 %s32, %s31
          %s1515 = smul.addr %s1514, 128
          %s1516 = scalar_lea.hbm %s13, %s1515
          %s1518 = sshll.u32 %s1507, 4
          %s1519 = int_to_ptr.vmem [resolvable:$true] %s1518
          %1521 = dma.vmem_to_hbm [thread:$0]  %s1519, 128, %s1516, %s1504
        $region87: #{tpu_custom_call.1} parent=71 // pred_fallthru
          _
      $region72: #{tpu_custom_call.1} parent=5 // pred_fallthru
        _
      %p1522 = scmp.le.s32.totalorder 2, %s22
      // Predicated region
      $region88: #{tpu_custom_call.1} parent=5 // pred_check
        %p1523 = pneg %p1522
      $region89: #{tpu_custom_call.1} parent=5 // pred_check_branch
        %1525 = sbr.rel (%p1523) target = $region91
      $region90: #{tpu_custom_call.1} parent=5 // pred_region
        %s1526 = ssub.s32 %s22, 2
        // Predicated region
        $region92: #{tpu_custom_call.1} parent=90 // pred_check
          %p1527 = pneg %p357
        $region93: #{tpu_custom_call.1} parent=90 // pred_check_branch
          %1529 = sbr.rel (%p1527) target = $region95
        $region94: #{tpu_custom_call.1} parent=90 // pred_region
          %s1530 = sand.u32 %s342, 1
          %s1531 = scalar_lea.sflag [#allocation7], %s1530
          %s1532 = sand.u32 %s342, 1
          %s1533 = smul.addr %s1532, 8
          %s1534 = scalar_lea.vmem [#allocation6], %s1533
          %1535 = dma.done %s1531, 128
        $region95: #{tpu_custom_call.1} parent=90 // pred_fallthru
          _
      $region91: #{tpu_custom_call.1} parent=5 // pred_fallthru
        _
    $region6: #{tpu_custom_call.1} parent=1 // loop_footer
      %s26 = sadd.s32 1, %s22
    $region7: #{tpu_custom_call.1} parent=1 // loop_footer_branch
      %21 = sbr.rel target = $region3
    $region8: #{tpu_custom_call.1} parent=1 // loop_exit
      _
    %1536 = vsyncpa [#allocation7], 1
    %s1537 = scalar_lea.sflag [#allocation7], 1
    %1538 = vsyncpa %s1537, 1

// kernel: tpu_custom_call.1
$region0: #{tpu_custom_call.1}
  #allocation0 [shape = 'u32[]', space=smem, size = 0x4, offset = 0x4, fixed_abs, tag = 'smem constant byte address 0x4 - core index']
  #allocation1 [shape = 'u32[144,128]{1,0:T(1,128)}', space=vmem, size = 0x12000, scoped, tag = 'internal scratch']
  #allocation2 [shape = 'f32[64,8]{1,0:T(8,128)}', space=vmem, size = 0x8000, scoped, tag = 'scratch operand']
  #allocation3 [shape = 'f32[64,8]{1,0:T(8,128)}', space=vmem, size = 0x8000, scoped, tag = 'scratch operand']
  #allocation4 [shape = 'f32[64,8]{1,0:T(8,128)}', space=vmem, size = 0x8000, scoped, tag = 'scratch operand']
  #allocation5 [shape = 'f32[64,8]{1,0:T(8,128)}', space=vmem, size = 0x8000, scoped, tag = 'scratch operand']
  %s0 = inlined_call_operand.vmem [shape: f32[2,32,8], index: 0, kind: input, shape index: {}]
  %s1 = inlined_call_operand.vmem [shape: f32[2,32,8], index: 1, kind: input, shape index: {}]
  %s2 = inlined_call_operand.vmem [shape: s8[2,8,8], index: 2, kind: input, shape index: {}]
  %s3 = inlined_call_operand.vmem [shape: f32[64,32], index: 3, kind: input, shape index: {}]
  %s4 = inlined_call_operand.vmem [shape: f32[64,1], index: 4, kind: input, shape index: {}]
  %s5 = inlined_call_operand.vmem [shape: f32[64,32], index: 5, kind: input, shape index: {}]
  %s6 = inlined_call_operand.vmem [shape: f32[64,1], index: 6, kind: input, shape index: {}]
  %s7 = inlined_call_operand.vmem [shape: f32[64,32], index: 7, kind: input, shape index: {}]
  %s8 = inlined_call_operand.vmem [shape: f32[64,1], index: 8, kind: input, shape index: {}]
  %s9 = inlined_call_operand.vmem [shape: f32[64,32], index: 9, kind: input, shape index: {}]
  %s10 = inlined_call_operand.vmem [shape: f32[1,32], index: 10, kind: input, shape index: {}]
  %s11 = inlined_call_operand.vmem [shape: f32[1,32], index: 11, kind: input, shape index: {}]
  %s12 = inlined_call_operand.vmem [shape: f32[1,32], index: 12, kind: input, shape index: {}]
  %s13 = inlined_call_operand.hbm [shape: f32[2,8,32], index: 13, kind: output, shape index: {}]
  %s14 = sld [smem:[#allocation0]]
  $region89: #{tpu_custom_call.1} parent=0
    _
  %s16 = ssub.s32 1, %s14
  %s17 = scalar_select 0, %s16, %s14
  $region1: #{tpu_custom_call.1} parent=0
    #allocation6 [shape = 'u8[8192]{0}', space=vmem, size = 0x2000, scoped, tag = 'output window, operand 0']
    #allocation7 [shape = 's32[2]{0}', space=sflag, size = 0x8, scoped, tag = 'scoped memory for tpu_custom_call.1']
    %18 = vsyncpa [#allocation7], 0
    %s19 = scalar_lea.sflag [#allocation7], 1
    %20 = vsyncpa %s19, 0
    loop: start=0, step=1, limit=4
    $region2: #{tpu_custom_call.1} parent=1 // loop_pre_header
      _
    $region3: #{tpu_custom_call.1} parent=1 // loop_header
      %s22 = sphi 0, %s26
      %p23 = scmp.ge.s32.totalorder %s22, 4
      %s29 = sphi 0, %s41
      %s30 = sphi 0, %s37
      %s31 = sphi 0, %s29
      %s32 = sphi 0, %s30
      %s33 = sphi 0, %s31
      %s34 = sphi 0, %s32
      %s44 = sphi 0, %s46
      %s47 = sphi 0, %s44
      %s48 = sphi 0, %s47
      %s64 = sphi 0, %s48
      %s72 = sphi 0, %s74
      %s75 = sphi 0, %s72
      %s76 = sphi 0, %s75
      %s92 = sphi 0, %s76
      %s100 = sphi 0, %s102
      %s103 = sphi 0, %s100
      %s104 = sphi 0, %s103
      %s120 = sphi 0, %s104
      %s124 = sphi 0, %s124
      %s126 = sphi 0, %s124
      %s127 = sphi 0, %s126
      %s141 = sphi 0, %s127
      %s145 = sphi 0, %s145
      %s147 = sphi 0, %s145
      %s148 = sphi 0, %s147
      %s162 = sphi 0, %s148
      %s166 = sphi 0, %s166
      %s168 = sphi 0, %s166
      %s169 = sphi 0, %s168
      %s183 = sphi 0, %s169
      %s187 = sphi 0, %s187
      %s189 = sphi 0, %s187
      %s190 = sphi 0, %s189
      %s204 = sphi 0, %s190
      %s208 = sphi 0, %s208
      %s210 = sphi 0, %s208
      %s211 = sphi 0, %s210
      %s225 = sphi 0, %s211
      %s229 = sphi 0, %s229
      %s231 = sphi 0, %s229
      %s232 = sphi 0, %s231
      %s246 = sphi 0, %s232
      %s250 = sphi 0, %s250
      %s252 = sphi 0, %s250
      %s253 = sphi 0, %s252
      %s267 = sphi 0, %s253
      %s271 = sphi 0, %s271
      %s273 = sphi 0, %s271
      %s274 = sphi 0, %s273
      %s288 = sphi 0, %s274
      %s292 = sphi 0, %s292
      %s294 = sphi 0, %s292
      %s295 = sphi 0, %s294
      %s309 = sphi 0, %s295
      %s313 = sphi 0, %s313
      %s315 = sphi 0, %s313
      %s316 = sphi 0, %s315
      %s330 = sphi 0, %s316
      %s338 = sphi 0, %s340
      %s341 = sphi 0, %s338
      %s342 = sphi 0, %s341
      %s358 = sphi 0, %s342
    $region4: #{tpu_custom_call.1} parent=1 // loop_header_branch
      %25 = sbr.rel (%p23) target = $region8
    $region5: #{tpu_custom_call.1} parent=1 // loop_body
      %s27 = ssub.s32 %s22, 1
      %s28 = ssub.s32 %s22, 2
      %s35 = sadd.s32 1, %s30
      %p36 = scmp.ge.s32.totalorder %s35, 1
      %s37 = scalar_select %p36, 0, %s35
      %s38 = sadd.s32 1, %s29
      %s39 = scalar_select %p36, %s38, %s29
      %p40 = scmp.ge.s32.totalorder %s39, 2
      %s41 = scalar_select %p40, 0, %s39
      %s42 = ssub.s32 %s29, %s41
      %p43 = scmp.eq.s32.totalorder %s42, 0
      %s45 = sadd.s32 %s44, 1
      %s46 = scalar_select %p43, %s44, %s45
      %p49 = pneg %p43
      %p50 = scmp.eq.s32.totalorder %s22, 1
      %p51 = por %p49, %p50
      %p52 = scmp.ne.s32.totalorder %s44, %s47
      %p53 = scmp.eq.s32.totalorder %s22, 0
      %p54 = por %p52, %p53
      %p55 = scmp.ne.s32.totalorder %s44, %s47
      %p56 = scmp.eq.s32.totalorder %s27, 1
      %p57 = por %p55, %p56
      %p58 = scmp.ne.s32.totalorder %s47, %s48
      %p59 = scmp.eq.s32.totalorder %s27, 0
      %p60 = por %p58, %p59
      %p61 = scmp.ne.s32.totalorder %s47, %s48
      %p62 = scmp.eq.s32.totalorder %s28, 1
      %p63 = por %p61, %p62
      %p65 = scmp.ne.s32.totalorder %s48, %s64
      %p66 = scmp.eq.s32.totalorder %s28, 0
      %p67 = por %p65, %p66
      %s68 = ssub.s32 %s29, %s41
      %s69 = ssub.s32 %s30, %s37
      %s70 = sor.u32 %s68, %s69
      %p71 = scmp.eq.s32.totalorder %s70, 0
      %s73 = sadd.s32 %s72, 1
      %s74 = scalar_select %p71, %s72, %s73
      %p77 = pneg %p71
      %p78 = scmp.eq.s32.totalorder %s22, 1
      %p79 = por %p77, %p78
      %p80 = scmp.ne.s32.totalorder %s72, %s75
      %p81 = scmp.eq.s32.totalorder %s22, 0
      %p82 = por %p80, %p81
      %p83 = scmp.ne.s32.totalorder %s72, %s75
      %p84 = scmp.eq.s32.totalorder %s27, 1
      %p85 = por %p83, %p84
      %p86 = scmp.ne.s32.totalorder %s75, %s76
      %p87 = scmp.eq.s32.totalorder %s27, 0
      %p88 = por %p86, %p87
      %p89 = scmp.ne.s32.totalorder %s75, %s76
      %p90 = scmp.eq.s32.totalorder %s28, 1
      %p91 = por %p89, %p90
      %p93 = scmp.ne.s32.totalorder %s76, %s92
      %p94 = scmp.eq.s32.totalorder %s28, 0
      %p95 = por %p93, %p94
      %s96 = ssub.s32 %s29, %s41
      %s97 = ssub.s32 %s30, %s37
      %s98 = sor.u32 %s96, %s97
      %p99 = scmp.eq.s32.totalorder %s98, 0
      %s101 = sadd.s32 %s100, 1
      %s102 = scalar_select %p99, %s100, %s101
      %p105 = pneg %p99
      %p106 = scmp.eq.s32.totalorder %s22, 1
      %p107 = por %p105, %p106
      %p108 = scmp.ne.s32.totalorder %s100, %s103
      %p109 = scmp.eq.s32.totalorder %s22, 0
      %p110 = por %p108, %p109
      %p111 = scmp.ne.s32.totalorder %s100, %s103
      %p112 = scmp.eq.s32.totalorder %s27, 1
      %p113 = por %p111, %p112
      %p114 = scmp.ne.s32.totalorder %s103, %s104
      %p115 = scmp.eq.s32.totalorder %s27, 0
      %p116 = por %p114, %p115
      %p117 = scmp.ne.s32.totalorder %s103, %s104
      %p118 = scmp.eq.s32.totalorder %s28, 1
      %p119 = por %p117, %p118
      %p121 = scmp.ne.s32.totalorder %s104, %s120
      %p122 = scmp.eq.s32.totalorder %s28, 0
      %p123 = por %p121, %p122
      %s125 = sadd.s32 %s124, 1
      %p128 = scmp.eq.s32.totalorder %s22, 1
      %p129 = scmp.ne.s32.totalorder %s124, %s126
      %p130 = scmp.eq.s32.totalorder %s22, 0
      %p131 = por %p129, %p130
      %p132 = scmp.ne.s32.totalorder %s124, %s126
      %p133 = scmp.eq.s32.totalorder %s27, 1
      %p134 = por %p132, %p133
      %p135 = scmp.ne.s32.totalorder %s126, %s127
      %p136 = scmp.eq.s32.totalorder %s27, 0
      %p137 = por %p135, %p136
      %p138 = scmp.ne.s32.totalorder %s126, %s127
      %p139 = scmp.eq.s32.totalorder %s28, 1
      %p140 = por %p138, %p139
      %p142 = scmp.ne.s32.totalorder %s127, %s141
      %p143 = scmp.eq.s32.totalorder %s28, 0
      %p144 = por %p142, %p143
      %s146 = sadd.s32 %s145, 1
      %p149 = scmp.eq.s32.totalorder %s22, 1
      %p150 = scmp.ne.s32.totalorder %s145, %s147
      %p151 = scmp.eq.s32.totalorder %s22, 0
      %p152 = por %p150, %p151
      %p153 = scmp.ne.s32.totalorder %s145, %s147
      %p154 = scmp.eq.s32.totalorder %s27, 1
      %p155 = por %p153, %p154
      %p156 = scmp.ne.s32.totalorder %s147, %s148
      %p157 = scmp.eq.s32.totalorder %s27, 0
      %p158 = por %p156, %p157
      %p159 = scmp.ne.s32.totalorder %s147, %s148
      %p160 = scmp.eq.s32.totalorder %s28, 1
      %p161 = por %p159, %p160
      %p163 = scmp.ne.s32.totalorder %s148, %s162
      %p164 = scmp.eq.s32.totalorder %s28, 0
      %p165 = por %p163, %p164
      %s167 = sadd.s32 %s166, 1
      %p170 = scmp.eq.s32.totalorder %s22, 1
      %p171 = scmp.ne.s32.totalorder %s166, %s168
      %p172 = scmp.eq.s32.totalorder %s22, 0
      %p173 = por %p171, %p172
      %p174 = scmp.ne.s32.totalorder %s166, %s168
      %p175 = scmp.eq.s32.totalorder %s27, 1
      %p176 = por %p174, %p175
      %p177 = scmp.ne.s32.totalorder %s168, %s169
      %p178 = scmp.eq.s32.totalorder %s27, 0
      %p179 = por %p177, %p178
      %p180 = scmp.ne.s32.totalorder %s168, %s169
      %p181 = scmp.eq.s32.totalorder %s28, 1
      %p182 = por %p180, %p181
      %p184 = scmp.ne.s32.totalorder %s169, %s183
      %p185 = scmp.eq.s32.totalorder %s28, 0
      %p186 = por %p184, %p185
      %s188 = sadd.s32 %s187, 1
      %p191 = scmp.eq.s32.totalorder %s22, 1
      %p192 = scmp.ne.s32.totalorder %s187, %s189
      %p193 = scmp.eq.s32.totalorder %s22, 0
      %p194 = por %p192, %p193
      %p195 = scmp.ne.s32.totalorder %s187, %s189
      %p196 = scmp.eq.s32.totalorder %s27, 1
      %p197 = por %p195, %p196
      %p198 = scmp.ne.s32.totalorder %s189, %s190
      %p199 = scmp.eq.s32.totalorder %s27, 0
      %p200 = por %p198, %p199
      %p201 = scmp.ne.s32.totalorder %s189, %s190
      %p202 = scmp.eq.s32.totalorder %s28, 1
      %p203 = por %p201, %p202
      %p205 = scmp.ne.s32.totalorder %s190, %s204
      %p206 = scmp.eq.s32.totalorder %s28, 0
      %p207 = por %p205, %p206
      %s209 = sadd.s32 %s208, 1
      %p212 = scmp.eq.s32.totalorder %s22, 1
      %p213 = scmp.ne.s32.totalorder %s208, %s210
      %p214 = scmp.eq.s32.totalorder %s22, 0
      %p215 = por %p213, %p214
      %p216 = scmp.ne.s32.totalorder %s208, %s210
      %p217 = scmp.eq.s32.totalorder %s27, 1
      %p218 = por %p216, %p217
      %p219 = scmp.ne.s32.totalorder %s210, %s211
      %p220 = scmp.eq.s32.totalorder %s27, 0
      %p221 = por %p219, %p220
      %p222 = scmp.ne.s32.totalorder %s210, %s211
      %p223 = scmp.eq.s32.totalorder %s28, 1
      %p224 = por %p222, %p223
      %p226 = scmp.ne.s32.totalorder %s211, %s225
      %p227 = scmp.eq.s32.totalorder %s28, 0
      %p228 = por %p226, %p227
      %s230 = sadd.s32 %s229, 1
      %p233 = scmp.eq.s32.totalorder %s22, 1
      %p234 = scmp.ne.s32.totalorder %s229, %s231
      %p235 = scmp.eq.s32.totalorder %s22, 0
      %p236 = por %p234, %p235
      %p237 = scmp.ne.s32.totalorder %s229, %s231
      %p238 = scmp.eq.s32.totalorder %s27, 1
      %p239 = por %p237, %p238
      %p240 = scmp.ne.s32.totalorder %s231, %s232
      %p241 = scmp.eq.s32.totalorder %s27, 0
      %p242 = por %p240, %p241
      %p243 = scmp.ne.s32.totalorder %s231, %s232
      %p244 = scmp.eq.s32.totalorder %s28, 1
      %p245 = por %p243, %p244
      %p247 = scmp.ne.s32.totalorder %s232, %s246
      %p248 = scmp.eq.s32.totalorder %s28, 0
      %p249 = por %p247, %p248
      %s251 = sadd.s32 %s250, 1
      %p254 = scmp.eq.s32.totalorder %s22, 1
      %p255 = scmp.ne.s32.totalorder %s250, %s252
      %p256 = scmp.eq.s32.totalorder %s22, 0
      %p257 = por %p255, %p256
      %p258 = scmp.ne.s32.totalorder %s250, %s252
      %p259 = scmp.eq.s32.totalorder %s27, 1
      %p260 = por %p258, %p259
      %p261 = scmp.ne.s32.totalorder %s252, %s253
      %p262 = scmp.eq.s32.totalorder %s27, 0
      %p263 = por %p261, %p262
      %p264 = scmp.ne.s32.totalorder %s252, %s253
      %p265 = scmp.eq.s32.totalorder %s28, 1
      %p266 = por %p264, %p265
      %p268 = scmp.ne.s32.totalorder %s253, %s267
      %p269 = scmp.eq.s32.totalorder %s28, 0
      %p270 = por %p268, %p269
      %s272 = sadd.s32 %s271, 1
      %p275 = scmp.eq.s32.totalorder %s22, 1
      %p276 = scmp.ne.s32.totalorder %s271, %s273
      %p277 = scmp.eq.s32.totalorder %s22, 0
      %p278 = por %p276, %p277
      %p279 = scmp.ne.s32.totalorder %s271, %s273
      %p280 = scmp.eq.s32.totalorder %s27, 1
      %p281 = por %p279, %p280
      %p282 = scmp.ne.s32.totalorder %s273, %s274
      %p283 = scmp.eq.s32.totalorder %s27, 0
      %p284 = por %p282, %p283
      %p285 = scmp.ne.s32.totalorder %s273, %s274
      %p286 = scmp.eq.s32.totalorder %s28, 1
      %p287 = por %p285, %p286
      %p289 = scmp.ne.s32.totalorder %s274, %s288
      %p290 = scmp.eq.s32.totalorder %s28, 0
      %p291 = por %p289, %p290
      %s293 = sadd.s32 %s292, 1
      %p296 = scmp.eq.s32.totalorder %s22, 1
      %p297 = scmp.ne.s32.totalorder %s292, %s294
      %p298 = scmp.eq.s32.totalorder %s22, 0
      %p299 = por %p297, %p298
      %p300 = scmp.ne.s32.totalorder %s292, %s294
      %p301 = scmp.eq.s32.totalorder %s27, 1
      %p302 = por %p300, %p301
      %p303 = scmp.ne.s32.totalorder %s294, %s295
      %p304 = scmp.eq.s32.totalorder %s27, 0
      %p305 = por %p303, %p304
      %p306 = scmp.ne.s32.totalorder %s294, %s295
      %p307 = scmp.eq.s32.totalorder %s28, 1
      %p308 = por %p306, %p307
      %p310 = scmp.ne.s32.totalorder %s295, %s309
      %p311 = scmp.eq.s32.totalorder %s28, 0
      %p312 = por %p310, %p311
      %s314 = sadd.s32 %s313, 1
      %p317 = scmp.eq.s32.totalorder %s22, 1
      %p318 = scmp.ne.s32.totalorder %s313, %s315
      %p319 = scmp.eq.s32.totalorder %s22, 0
      %p320 = por %p318, %p319
      %p321 = scmp.ne.s32.totalorder %s313, %s315
      %p322 = scmp.eq.s32.totalorder %s27, 1
      %p323 = por %p321, %p322
      %p324 = scmp.ne.s32.totalorder %s315, %s316
      %p325 = scmp.eq.s32.totalorder %s27, 0
      %p326 = por %p324, %p325
      %p327 = scmp.ne.s32.totalorder %s315, %s316
      %p328 = scmp.eq.s32.totalorder %s28, 1
      %p329 = por %p327, %p328
      %p331 = scmp.ne.s32.totalorder %s316, %s330
      %p332 = scmp.eq.s32.totalorder %s28, 0
      %p333 = por %p331, %p332
      %s334 = ssub.s32 %s29, %s41
      %s335 = ssub.s32 %s30, %s37
      %s336 = sor.u32 %s334, %s335
      %p337 = scmp.eq.s32.totalorder %s336, 0
      %s339 = sadd.s32 %s338, 1
      %s340 = scalar_select %p337, %s338, %s339
      %p343 = pneg %p337
      %p344 = scmp.eq.s32.totalorder %s22, 1
      %p345 = por %p343, %p344
      %p346 = scmp.ne.s32.totalorder %s338, %s341
      %p347 = scmp.eq.s32.totalorder %s22, 0
      %p348 = por %p346, %p347
      %p349 = scmp.ne.s32.totalorder %s338, %s341
      %p350 = scmp.eq.s32.totalorder %s27, 1
      %p351 = por %p349, %p350
      %p352 = scmp.ne.s32.totalorder %s341, %s342
      %p353 = scmp.eq.s32.totalorder %s27, 0
      %p354 = por %p352, %p353
      %p355 = scmp.ne.s32.totalorder %s341, %s342
      %p356 = scmp.eq.s32.totalorder %s28, 1
      %p357 = por %p355, %p356
      %p359 = scmp.ne.s32.totalorder %s342, %s358
      %p360 = scmp.eq.s32.totalorder %s28, 0
      %p361 = por %p359, %p360
      %p362 = scmp.le.s32.totalorder 1, %s22
      %p363 = scmp.lt.s32.totalorder %s22, 3
      %p364 = pnand %p362, %p363
      %p365 = pneg %p364
      // Predicated region
      $region9: #{tpu_custom_call.1} parent=5 // pred_check
        _
      $region10: #{tpu_custom_call.1} parent=5 // pred_check_branch
        %367 = sbr.rel (%p364) target = $region12
      $region11: #{tpu_custom_call.1} parent=5 // pred_region
        %s368 = ssub.s32 %s22, 1
        // Predicated region
        $region13: #{tpu_custom_call.1} parent=11 // pred_check
          %p369 = pneg %p137
        $region14: #{tpu_custom_call.1} parent=11 // pred_check_branch
          %371 = sbr.rel (%p369) target = $region16
        $region15: #{tpu_custom_call.1} parent=11 // pred_region
          _
        $region16: #{tpu_custom_call.1} parent=11 // pred_fallthru
          _
        // Predicated region
        $region17: #{tpu_custom_call.1} parent=11 // pred_check
          %p372 = pneg %p158
        $region18: #{tpu_custom_call.1} parent=11 // pred_check_branch
          %374 = sbr.rel (%p372) target = $region20
        $region19: #{tpu_custom_call.1} parent=11 // pred_region
          _
        $region20: #{tpu_custom_call.1} parent=11 // pred_fallthru
          _
        // Predicated region
        $region21: #{tpu_custom_call.1} parent=11 // pred_check
          %p375 = pneg %p179
        $region22: #{tpu_custom_call.1} parent=11 // pred_check_branch
          %377 = sbr.rel (%p375) target = $region24
        $region23: #{tpu_custom_call.1} parent=11 // pred_region
          _
        $region24: #{tpu_custom_call.1} parent=11 // pred_fallthru
          _
        // Predicated region
        $region25: #{tpu_custom_call.1} parent=11 // pred_check
          %p378 = pneg %p200
        $region26: #{tpu_custom_call.1} parent=11 // pred_check_branch
          %380 = sbr.rel (%p378) target = $region28
        $region27: #{tpu_custom_call.1} parent=11 // pred_region
          _
        $region28: #{tpu_custom_call.1} parent=11 // pred_fallthru
          _
        // Predicated region
        $region29: #{tpu_custom_call.1} parent=11 // pred_check
          %p381 = pneg %p221
        $region30: #{tpu_custom_call.1} parent=11 // pred_check_branch
          %383 = sbr.rel (%p381) target = $region32
        $region31: #{tpu_custom_call.1} parent=11 // pred_region
          _
        $region32: #{tpu_custom_call.1} parent=11 // pred_fallthru
          _
        // Predicated region
        $region33: #{tpu_custom_call.1} parent=11 // pred_check
          %p384 = pneg %p242
        $region34: #{tpu_custom_call.1} parent=11 // pred_check_branch
          %386 = sbr.rel (%p384) target = $region36
        $region35: #{tpu_custom_call.1} parent=11 // pred_region
          _
        $region36: #{tpu_custom_call.1} parent=11 // pred_fallthru
          _
        // Predicated region
        $region37: #{tpu_custom_call.1} parent=11 // pred_check
          %p387 = pneg %p263
        $region38: #{tpu_custom_call.1} parent=11 // pred_check_branch
          %389 = sbr.rel (%p387) target = $region40
        $region39: #{tpu_custom_call.1} parent=11 // pred_region
          _
        $region40: #{tpu_custom_call.1} parent=11 // pred_fallthru
          _
        // Predicated region
        $region41: #{tpu_custom_call.1} parent=11 // pred_check
          %p390 = pneg %p284
        $region42: #{tpu_custom_call.1} parent=11 // pred_check_branch
          %392 = sbr.rel (%p390) target = $region44
        $region43: #{tpu_custom_call.1} parent=11 // pred_region
          _
        $region44: #{tpu_custom_call.1} parent=11 // pred_fallthru
          _
        // Predicated region
        $region45: #{tpu_custom_call.1} parent=11 // pred_check
          %p393 = pneg %p305
        $region46: #{tpu_custom_call.1} parent=11 // pred_check_branch
          %395 = sbr.rel (%p393) target = $region48
        $region47: #{tpu_custom_call.1} parent=11 // pred_region
          _
        $region48: #{tpu_custom_call.1} parent=11 // pred_fallthru
          _
        // Predicated region
        $region49: #{tpu_custom_call.1} parent=11 // pred_check
          %p396 = pneg %p326
        $region50: #{tpu_custom_call.1} parent=11 // pred_check_branch
          %398 = sbr.rel (%p396) target = $region52
        $region51: #{tpu_custom_call.1} parent=11 // pred_region
          _
        $region52: #{tpu_custom_call.1} parent=11 // pred_fallthru
          _
      $region12: #{tpu_custom_call.1} parent=5 // pred_fallthru
        _
      %p399 = scmp.lt.s32.totalorder %s22, 2
      // Predicated region
      $region53: #{tpu_custom_call.1} parent=5 // pred_check
        %p400 = pneg %p399
      $region54: #{tpu_custom_call.1} parent=5 // pred_check_branch
        %402 = sbr.rel (%p400) target = $region56
      $region55: #{tpu_custom_call.1} parent=5 // pred_region
        // Predicated region
        $region57: #{tpu_custom_call.1} parent=55 // pred_check
          %p403 = pneg %p54
        $region58: #{tpu_custom_call.1} parent=55 // pred_check_branch
          %405 = sbr.rel (%p403) target = $region60
        $region59: #{tpu_custom_call.1} parent=55 // pred_region
          %p406 = scmp.lt.s32.totalorder %s29, 1
          %s407 = scalar_select %p406, %s29, 1
          %s408 = smul.addr %s407, 4
          %s409 = smul.addr %s408, 8
          %s410 = scalar_lea.vmem %s0, %s409
        $region60: #{tpu_custom_call.1} parent=55 // pred_fallthru
          _
        // Predicated region
        $region61: #{tpu_custom_call.1} parent=55 // pred_check
          %p411 = pneg %p82
        $region62: #{tpu_custom_call.1} parent=55 // pred_check_branch
          %413 = sbr.rel (%p411) target = $region64
        $region63: #{tpu_custom_call.1} parent=55 // pred_region
          %p414 = scmp.lt.s32.totalorder %s29, 1
          %s415 = scalar_select %p414, %s29, 1
          %p416 = scmp.lt.s32.totalorder %s30, 0
          %s417 = scalar_select %p416, %s30, 0
          %s418 = smul.addr %s415, 4
          %s419 = sadd.s32 %s417, %s418
          %s420 = smul.addr %s419, 8
          %s421 = scalar_lea.vmem %s1, %s420
        $region64: #{tpu_custom_call.1} parent=55 // pred_fallthru
          _
        // Predicated region
        $region65: #{tpu_custom_call.1} parent=55 // pred_check
          %p422 = pneg %p110
        $region66: #{tpu_custom_call.1} parent=55 // pred_check_branch
          %424 = sbr.rel (%p422) target = $region68
        $region67: #{tpu_custom_call.1} parent=55 // pred_region
          %p425 = scmp.lt.s32.totalorder %s29, 1
          %s426 = scalar_select %p425, %s29, 1
          %p427 = scmp.lt.s32.totalorder %s30, 0
          %s428 = scalar_select %p427, %s30, 0
          %s429 = sadd.s32 %s428, %s426
          %s430 = smul.addr %s429, 2
          %s431 = scalar_lea.vmem %s2, %s430
        $region68: #{tpu_custom_call.1} parent=55 // pred_fallthru
          _
      $region56: #{tpu_custom_call.1} parent=5 // pred_fallthru
        _
      %p432 = scmp.le.s32.totalorder 1, %s22
      %p433 = scmp.lt.s32.totalorder %s22, 3
      %p434 = pnand %p432, %p433
      %p435 = pneg %p434
      // Predicated region
      $region69: #{tpu_custom_call.1} parent=5 // pred_check
        _
      $region70: #{tpu_custom_call.1} parent=5 // pred_check_branch
        %437 = sbr.rel (%p434) target = $region72
      $region71: #{tpu_custom_call.1} parent=5 // pred_region
        %s438 = ssub.s32 %s22, 1
        %p439 = scmp.lt.s32.totalorder %s31, 1
        %s440 = scalar_select %p439, %s31, 1
        %s441 = smul.addr %s440, 4
        %s442 = smul.addr %s441, 8
        %s443 = scalar_lea.vmem %s0, %s442
        %p444 = pneg %p60
        %p445 = pneg %p57
        %p446 = scmp.lt.s32.totalorder %s31, 1
        %s447 = scalar_select %p446, %s31, 1
        %p448 = scmp.lt.s32.totalorder %s32, 0
        %s449 = scalar_select %p448, %s32, 0
        %s450 = smul.addr %s447, 4
        %s451 = sadd.s32 %s449, %s450
        %s452 = smul.addr %s451, 8
        %s453 = scalar_lea.vmem %s1, %s452
        %p454 = pneg %p88
        %p455 = pneg %p85
        %p456 = scmp.lt.s32.totalorder %s31, 1
        %s457 = scalar_select %p456, %s31, 1
        %p458 = scmp.lt.s32.totalorder %s32, 0
        %s459 = scalar_select %p458, %s32, 0
        %s460 = sadd.s32 %s459, %s457
        %s461 = smul.addr %s460, 2
        %s462 = scalar_lea.vmem %s2, %s461
        %p463 = pneg %p116
        %p464 = pneg %p113
        %p465 = pneg %p137
        %p466 = pneg %p134
        %p467 = pneg %p158
        %p468 = pneg %p155
        %p469 = pneg %p179
        %p470 = pneg %p176
        %p471 = pneg %p200
        %p472 = pneg %p197
        %p473 = pneg %p221
        %p474 = pneg %p218
        %p475 = pneg %p242
        %p476 = pneg %p239
        %p477 = pneg %p263
        %p478 = pneg %p260
        %p479 = pneg %p284
        %p480 = pneg %p281
        %p481 = pneg %p305
        %p482 = pneg %p302
        %p483 = pneg %p326
        %p484 = pneg %p323
        %p485 = pneg %p354
        %p486 = pneg %p351
        %s487 = sand.u32 %s341, 1
        %s488 = scalar_lea.sflag [#allocation7], %s487
        %s489 = sand.u32 %s341, 1
        %s490 = smul.addr %s489, 8
        %s491 = scalar_lea.vmem [#allocation6], %s490
        %p492 = scmp.lt.s32.totalorder %s31, 1
        %s493 = scalar_select %p492, %s31, 1
        %s494 = smul.addr %s493, 4
        %s495 = smul.addr %s494, 8
        %s496 = scalar_lea.vmem %s0, %s495
        %p497 = scmp.lt.s32.totalorder %s31, 1
        %s498 = scalar_select %p497, %s31, 1
        %p499 = scmp.lt.s32.totalorder %s32, 0
        %s500 = scalar_select %p499, %s32, 0
        %s501 = smul.addr %s498, 4
        %s502 = sadd.s32 %s500, %s501
        %s503 = smul.addr %s502, 8
        %s504 = scalar_lea.vmem %s1, %s503
        %p505 = scmp.lt.s32.totalorder %s31, 1
        %s506 = scalar_select %p505, %s31, 1
        %p507 = scmp.lt.s32.totalorder %s32, 0
        %s508 = scalar_select %p507, %s32, 0
        %s509 = sadd.s32 %s508, %s506
        %s510 = smul.addr %s509, 2
        %s511 = scalar_lea.vmem %s2, %s510
        %p514 = scmp.eq.s32.totalorder %s32, 0
        // Predicated region
        $region73: #{tpu_custom_call.1} parent=71 // pred_check
          %p515 = pneg %p514
        $region74: #{tpu_custom_call.1} parent=71 // pred_check_branch
          %517 = sbr.rel (%p515) target = $region76
        $region75: #{tpu_custom_call.1} parent=71 // pred_region
          %v518 = vld [vmem:[%s496] sm:$0xff]
          %v519 = vld [vmem:[%s496 + $0x8] sm:$0xff]
          %v520 = vld [vmem:[%s496 + $0x10] sm:$0xff]
          %v521 = vld [vmem:[%s496 + $0x18] sm:$0xff]
          %v522 = vld [vmem:[%s5] sm:$0xff]
          %v523 = vld [vmem:[%s5 + $0x8] sm:$0xff]
          %v524 = vld [vmem:[%s5 + $0x10] sm:$0xff]
          %v525 = vld [vmem:[%s5 + $0x18] sm:$0xff]
          %v526 = vld [vmem:[%s5 + $0x20] sm:$0xff]
          %v527 = vld [vmem:[%s5 + $0x28] sm:$0xff]
          %v528 = vld [vmem:[%s5 + $0x30] sm:$0xff]
          %v529 = vld [vmem:[%s5 + $0x38] sm:$0xff]
          %v530 = vld [vmem:[%s6] sm:$0xff]
          %v531 = vld [vmem:[%s6 + $0x8] sm:$0xff]
          %v532 = vld [vmem:[%s6 + $0x10] sm:$0xff]
          %v533 = vld [vmem:[%s6 + $0x18] sm:$0xff]
          %v534 = vld [vmem:[%s6 + $0x20] sm:$0xff]
          %v535 = vld [vmem:[%s6 + $0x28] sm:$0xff]
          %v536 = vld [vmem:[%s6 + $0x30] sm:$0xff]
          %v537 = vld [vmem:[%s6 + $0x38] sm:$0xff]
          %539 = vset.pattern.permute.xlu0 0
          %540 = vperm.xlu0 %539, %v530
          %v541 = vpop.permute.xlu0 %540
          %544 = vset.pattern.permute.xlu0 0
          %545 = vperm.xlu0 %544, %v531
          %v546 = vpop.permute.xlu0 %545
          %549 = vset.pattern.permute.xlu0 0
          %550 = vperm.xlu0 %549, %v532
          %v551 = vpop.permute.xlu0 %550
          %554 = vset.pattern.permute.xlu0 0
          %555 = vperm.xlu0 %554, %v533
          %v556 = vpop.permute.xlu0 %555
          %559 = vset.pattern.permute.xlu0 0
          %560 = vperm.xlu0 %559, %v534
          %v561 = vpop.permute.xlu0 %560
          %564 = vset.pattern.permute.xlu0 0
          %565 = vperm.xlu0 %564, %v535
          %v566 = vpop.permute.xlu0 %565
          %569 = vset.pattern.permute.xlu0 0
          %570 = vperm.xlu0 %569, %v536
          %v571 = vpop.permute.xlu0 %570
          %574 = vset.pattern.permute.xlu0 0
          %575 = vperm.xlu0 %574, %v537
          %v576 = vpop.permute.xlu0 %575
          %vm578 = vcmask 261120
          %v580 = vsel %vm578, %v522, 0
          %v583 = vsel %vm578, %v523, 0
          %v586 = vsel %vm578, %v524, 0
          %v589 = vsel %vm578, %v525, 0
          %v592 = vsel %vm578, %v526, 0
          %v595 = vsel %vm578, %v527, 0
          %v598 = vsel %vm578, %v528, 0
          %v601 = vsel %vm578, %v529, 0
          %603 = vmatprep.subr.mxu0 0.0
          %604 = vmatpush1.msra.mxu0 0.0
          %605 = vmatprep.subr.mxu0 0.0
          %606 = vmatpush1.msra.mxu0 0.0
          %607 = vmatprep.subr.mxu0 0.0
          %608 = vmatpush1.msra.mxu0 0.0
          %609 = vmatprep.subr.mxu0 0.0
          %610 = vmatpush1.msra.mxu0 0.0
          %611 = vmatprep.subr.mxu0 0.0
          %612 = vmatpush1.msra.mxu0 0.0
          %613 = vmatprep.subr.mxu0 0.0
          %614 = vmatpush1.msra.mxu0 0.0
          %615 = vmatprep.subr.mxu0 0.0
          %616 = vmatpush1.msra.mxu0 0.0
          %617 = vmatprep.subr.mxu0 0.0
          %618 = vmatpush1.msra.mxu0 0.0
          %619 = vmatprep.subr.mxu0 0.0
          %620 = vmatpush1.msra.mxu0 0.0
          %621 = vmatprep.subr.mxu0 0.0
          %622 = vmatpush1.msra.mxu0 0.0
          %623 = vmatprep.subr.mxu0 0.0
          %624 = vmatpush1.msra.mxu0 0.0
          %625 = vmatprep.subr.mxu0 0.0
          %626 = vmatpush1.msra.mxu0 0.0
          %627 = vmatprep.subr.mxu0 0.0
          %628 = vmatpush1.msra.mxu0 %v521
          %629 = vmatprep.subr.mxu0 0.0
          %630 = vmatpush1.msra.mxu0 %v520
          %631 = vmatprep.subr.mxu0 0.0
          %632 = vmatpush1.msra.mxu0 %v519
          %633 = vmatprep.subr.mxu0 0.0
          %634 = vmatpush1.msra.mxu0 %v518
          %635 = vmatprep.subr.mxu0 0.0
          %636 = vmatpush2.msra.mxu0 0.0
          %637 = vmatprep.subr.mxu0 0.0
          %638 = vmatpush2.msra.mxu0 0.0
          %639 = vmatprep.subr.mxu0 0.0
          %640 = vmatpush2.msra.mxu0 0.0
          %641 = vmatprep.subr.mxu0 0.0
          %642 = vmatpush2.msra.mxu0 0.0
          %643 = vmatprep.subr.mxu0 0.0
          %644 = vmatpush2.msra.mxu0 0.0
          %645 = vmatprep.subr.mxu0 0.0
          %646 = vmatpush2.msra.mxu0 0.0
          %647 = vmatprep.subr.mxu0 0.0
          %648 = vmatpush2.msra.mxu0 0.0
          %649 = vmatprep.subr.mxu0 0.0
          %650 = vmatpush2.msra.mxu0 0.0
          %651 = vmatprep.subr.mxu0 0.0
          %652 = vmatpush2.msra.mxu0 0.0
          %653 = vmatprep.subr.mxu0 0.0
          %654 = vmatpush2.msra.mxu0 0.0
          %655 = vmatprep.subr.mxu0 0.0
          %656 = vmatpush2.msra.mxu0 0.0
          %657 = vmatprep.subr.mxu0 0.0
          %658 = vmatpush2.msra.mxu0 0.0
          %659 = vmatprep.subr.mxu0 0.0
          %660 = vmatpush2.msra.mxu0 0.0
          %661 = vmatprep.subr.mxu0 0.0
          %662 = vmatpush2.msra.mxu0 0.0
          %663 = vmatprep.subr.mxu0 0.0
          %664 = vmatpush2.msra.mxu0 0.0
          %665 = vmatprep.subr.mxu0 0.0
          %666 = vmatpush2.msra.mxu0 0.0
          %667 = vmatprep.mubr.f32.mxu0 0.0
          %668 = vmatmul.mubr.f32.gmra.mxu0 %v580
          %v669 = vpop.f32.mrf.mxu0
          %v670 = vadd.f32 %v541, %v669
          %v671 = vpop.f32.mrf.mxu0
          %672 = vmatprep.mubr.f32.mxu0 0.0
          %673 = vmatmul.mubr.f32.gmra.mxu0 %v583
          %v674 = vpop.f32.mrf.mxu0
          %v675 = vadd.f32 %v546, %v674
          %v676 = vpop.f32.mrf.mxu0
          %677 = vmatprep.mubr.f32.mxu0 0.0
          %678 = vmatmul.mubr.f32.gmra.mxu0 %v586
          %v679 = vpop.f32.mrf.mxu0
          %v680 = vadd.f32 %v551, %v679
          %v681 = vpop.f32.mrf.mxu0
          %682 = vmatprep.mubr.f32.mxu0 0.0
          %683 = vmatmul.mubr.f32.gmra.mxu0 %v589
          %v684 = vpop.f32.mrf.mxu0
          %v685 = vadd.f32 %v556, %v684
          %v686 = vpop.f32.mrf.mxu0
          %687 = vmatprep.mubr.f32.mxu0 0.0
          %688 = vmatmul.mubr.f32.gmra.mxu0 %v592
          %v689 = vpop.f32.mrf.mxu0
          %v690 = vadd.f32 %v561, %v689
          %v691 = vpop.f32.mrf.mxu0
          %692 = vmatprep.mubr.f32.mxu0 0.0
          %693 = vmatmul.mubr.f32.gmra.mxu0 %v595
          %v694 = vpop.f32.mrf.mxu0
          %v695 = vadd.f32 %v566, %v694
          %v696 = vpop.f32.mrf.mxu0
          %697 = vmatprep.mubr.f32.mxu0 0.0
          %698 = vmatmul.mubr.f32.gmra.mxu0 %v598
          %v699 = vpop.f32.mrf.mxu0
          %v700 = vadd.f32 %v571, %v699
          %v701 = vpop.f32.mrf.mxu0
          %702 = vmatprep.mubr.f32.mxu0 0.0
          %703 = vmatmul.mubr.f32.gmra.mxu0 %v601
          %v704 = vpop.f32.mrf.mxu0
          %v705 = vadd.f32 %v576, %v704
          %v706 = vpop.f32.mrf.mxu0
          %707 = vdwg.mxu0
          %v708 = vld [vmem:[%s7] sm:$0xff]
          %v709 = vld [vmem:[%s7 + $0x8] sm:$0xff]
          %v710 = vld [vmem:[%s7 + $0x10] sm:$0xff]
          %v711 = vld [vmem:[%s7 + $0x18] sm:$0xff]
          %v712 = vld [vmem:[%s7 + $0x20] sm:$0xff]
          %v713 = vld [vmem:[%s7 + $0x28] sm:$0xff]
          %v714 = vld [vmem:[%s7 + $0x30] sm:$0xff]
          %v715 = vld [vmem:[%s7 + $0x38] sm:$0xff]
          %v716 = vld [vmem:[%s8] sm:$0xff]
          %v717 = vld [vmem:[%s8 + $0x8] sm:$0xff]
          %v718 = vld [vmem:[%s8 + $0x10] sm:$0xff]
          %v719 = vld [vmem:[%s8 + $0x18] sm:$0xff]
          %v720 = vld [vmem:[%s8 + $0x20] sm:$0xff]
          %v721 = vld [vmem:[%s8 + $0x28] sm:$0xff]
          %v722 = vld [vmem:[%s8 + $0x30] sm:$0xff]
          %v723 = vld [vmem:[%s8 + $0x38] sm:$0xff]
          %725 = vset.pattern.permute.xlu0 0
          %726 = vperm.xlu0 %725, %v716
          %v727 = vpop.permute.xlu0 %726
          %730 = vset.pattern.permute.xlu0 0
          %731 = vperm.xlu0 %730, %v717
          %v732 = vpop.permute.xlu0 %731
          %735 = vset.pattern.permute.xlu0 0
          %736 = vperm.xlu0 %735, %v718
          %v737 = vpop.permute.xlu0 %736
          %740 = vset.pattern.permute.xlu0 0
          %741 = vperm.xlu0 %740, %v719
          %v742 = vpop.permute.xlu0 %741
          %745 = vset.pattern.permute.xlu0 0
          %746 = vperm.xlu0 %745, %v720
          %v747 = vpop.permute.xlu0 %746
          %750 = vset.pattern.permute.xlu0 0
          %751 = vperm.xlu0 %750, %v721
          %v752 = vpop.permute.xlu0 %751
          %755 = vset.pattern.permute.xlu0 0
          %756 = vperm.xlu0 %755, %v722
          %v757 = vpop.permute.xlu0 %756
          %760 = vset.pattern.permute.xlu0 0
          %761 = vperm.xlu0 %760, %v723
          %v762 = vpop.permute.xlu0 %761
          %v765 = vsel %vm578, %v708, 0
          %v768 = vsel %vm578, %v709, 0
          %v771 = vsel %vm578, %v710, 0
          %v774 = vsel %vm578, %v711, 0
          %v777 = vsel %vm578, %v712, 0
          %v780 = vsel %vm578, %v713, 0
          %v783 = vsel %vm578, %v714, 0
          %v786 = vsel %vm578, %v715, 0
          %788 = vmatprep.subr.mxu0 0.0
          %789 = vmatpush1.msra.mxu0 0.0
          %790 = vmatprep.subr.mxu0 0.0
          %791 = vmatpush1.msra.mxu0 0.0
          %792 = vmatprep.subr.mxu0 0.0
          %793 = vmatpush1.msra.mxu0 0.0
          %794 = vmatprep.subr.mxu0 0.0
          %795 = vmatpush1.msra.mxu0 0.0
          %796 = vmatprep.subr.mxu0 0.0
          %797 = vmatpush1.msra.mxu0 0.0
          %798 = vmatprep.subr.mxu0 0.0
          %799 = vmatpush1.msra.mxu0 0.0
          %800 = vmatprep.subr.mxu0 0.0
          %801 = vmatpush1.msra.mxu0 0.0
          %802 = vmatprep.subr.mxu0 0.0
          %803 = vmatpush1.msra.mxu0 0.0
          %804 = vmatprep.subr.mxu0 0.0
          %805 = vmatpush1.msra.mxu0 0.0
          %806 = vmatprep.subr.mxu0 0.0
          %807 = vmatpush1.msra.mxu0 0.0
          %808 = vmatprep.subr.mxu0 0.0
          %809 = vmatpush1.msra.mxu0 0.0
          %810 = vmatprep.subr.mxu0 0.0
          %811 = vmatpush1.msra.mxu0 0.0
          %812 = vmatprep.subr.mxu0 0.0
          %813 = vmatpush1.msra.mxu0 %v521
          %814 = vmatprep.subr.mxu0 0.0
          %815 = vmatpush1.msra.mxu0 %v520
          %816 = vmatprep.subr.mxu0 0.0
          %817 = vmatpush1.msra.mxu0 %v519
          %818 = vmatprep.subr.mxu0 0.0
          %819 = vmatpush1.msra.mxu0 %v518
          %820 = vmatprep.subr.mxu0 0.0
          %821 = vmatpush2.msra.mxu0 0.0
          %822 = vmatprep.subr.mxu0 0.0
          %823 = vmatpush2.msra.mxu0 0.0
          %824 = vmatprep.subr.mxu0 0.0
          %825 = vmatpush2.msra.mxu0 0.0
          %826 = vmatprep.subr.mxu0 0.0
          %827 = vmatpush2.msra.mxu0 0.0
          %828 = vmatprep.subr.mxu0 0.0
          %829 = vmatpush2.msra.mxu0 0.0
          %830 = vmatprep.subr.mxu0 0.0
          %831 = vmatpush2.msra.mxu0 0.0
          %832 = vmatprep.subr.mxu0 0.0
          %833 = vmatpush2.msra.mxu0 0.0
          %834 = vmatprep.subr.mxu0 0.0
          %835 = vmatpush2.msra.mxu0 0.0
          %836 = vmatprep.subr.mxu0 0.0
          %837 = vmatpush2.msra.mxu0 0.0
          %838 = vmatprep.subr.mxu0 0.0
          %839 = vmatpush2.msra.mxu0 0.0
          %840 = vmatprep.subr.mxu0 0.0
          %841 = vmatpush2.msra.mxu0 0.0
          %842 = vmatprep.subr.mxu0 0.0
          %843 = vmatpush2.msra.mxu0 0.0
          %844 = vmatprep.subr.mxu0 0.0
          %845 = vmatpush2.msra.mxu0 0.0
          %846 = vmatprep.subr.mxu0 0.0
          %847 = vmatpush2.msra.mxu0 0.0
          %848 = vmatprep.subr.mxu0 0.0
          %849 = vmatpush2.msra.mxu0 0.0
          %850 = vmatprep.subr.mxu0 0.0
          %851 = vmatpush2.msra.mxu0 0.0
          %852 = vmatprep.mubr.f32.mxu0 0.0
          %853 = vmatmul.mubr.f32.gmra.mxu0 %v765
          %v854 = vpop.f32.mrf.mxu0
          %v855 = vadd.f32 %v727, %v854
          %v856 = vpop.f32.mrf.mxu0
          %857 = vmatprep.mubr.f32.mxu0 0.0
          %858 = vmatmul.mubr.f32.gmra.mxu0 %v768
          %v859 = vpop.f32.mrf.mxu0
          %v860 = vadd.f32 %v732, %v859
          %v861 = vpop.f32.mrf.mxu0
          %862 = vmatprep.mubr.f32.mxu0 0.0
          %863 = vmatmul.mubr.f32.gmra.mxu0 %v771
          %v864 = vpop.f32.mrf.mxu0
          %v865 = vadd.f32 %v737, %v864
          %v866 = vpop.f32.mrf.mxu0
          %867 = vmatprep.mubr.f32.mxu0 0.0
          %868 = vmatmul.mubr.f32.gmra.mxu0 %v774
          %v869 = vpop.f32.mrf.mxu0
          %v870 = vadd.f32 %v742, %v869
          %v871 = vpop.f32.mrf.mxu0
          %872 = vmatprep.mubr.f32.mxu0 0.0
          %873 = vmatmul.mubr.f32.gmra.mxu0 %v777
          %v874 = vpop.f32.mrf.mxu0
          %v875 = vadd.f32 %v747, %v874
          %v876 = vpop.f32.mrf.mxu0
          %877 = vmatprep.mubr.f32.mxu0 0.0
          %878 = vmatmul.mubr.f32.gmra.mxu0 %v780
          %v879 = vpop.f32.mrf.mxu0
          %v880 = vadd.f32 %v752, %v879
          %v881 = vpop.f32.mrf.mxu0
          %882 = vmatprep.mubr.f32.mxu0 0.0
          %883 = vmatmul.mubr.f32.gmra.mxu0 %v783
          %v884 = vpop.f32.mrf.mxu0
          %v885 = vadd.f32 %v757, %v884
          %v886 = vpop.f32.mrf.mxu0
          %887 = vmatprep.mubr.f32.mxu0 0.0
          %888 = vmatmul.mubr.f32.gmra.mxu0 %v786
          %v889 = vpop.f32.mrf.mxu0
          %v890 = vadd.f32 %v762, %v889
          %v891 = vpop.f32.mrf.mxu0
          %892 = vdwg.mxu0
          %vm893 = vcmask 64512
          %894 = vst.msk [vmem:[#allocation2] sm:$0xff] %vm893, %v670
          %895 = vst.msk [vmem:[#allocation2 + $0x8] sm:$0xff] %vm893, %v675
          %896 = vst.msk [vmem:[#allocation2 + $0x10] sm:$0xff] %vm893, %v680
          %897 = vst.msk [vmem:[#allocation2 + $0x18] sm:$0xff] %vm893, %v685
          %898 = vst.msk [vmem:[#allocation2 + $0x20] sm:$0xff] %vm893, %v690
          %899 = vst.msk [vmem:[#allocation2 + $0x28] sm:$0xff] %vm893, %v695
          %900 = vst.msk [vmem:[#allocation2 + $0x30] sm:$0xff] %vm893, %v700
          %901 = vst.msk [vmem:[#allocation2 + $0x38] sm:$0xff] %vm893, %v705
          %902 = vst.msk [vmem:[#allocation3] sm:$0xff] %vm893, %v855
          %903 = vst.msk [vmem:[#allocation3 + $0x8] sm:$0xff] %vm893, %v860
          %904 = vst.msk [vmem:[#allocation3 + $0x10] sm:$0xff] %vm893, %v865
          %905 = vst.msk [vmem:[#allocation3 + $0x18] sm:$0xff] %vm893, %v870
          %906 = vst.msk [vmem:[#allocation3 + $0x20] sm:$0xff] %vm893, %v875
          %907 = vst.msk [vmem:[#allocation3 + $0x28] sm:$0xff] %vm893, %v880
          %908 = vst.msk [vmem:[#allocation3 + $0x30] sm:$0xff] %vm893, %v885
          %909 = vst.msk [vmem:[#allocation3 + $0x38] sm:$0xff] %vm893, %v890
        $region76: #{tpu_custom_call.1} parent=71 // pred_fallthru
          _
        %v910 = vld [vmem:[%s504] sm:$0xff]
        %v911 = vld [vmem:[%s504 + $0x8] sm:$0xff]
        %v912 = vld [vmem:[%s504 + $0x10] sm:$0xff]
        %v913 = vld [vmem:[%s504 + $0x18] sm:$0xff]
        %v914 = vld [vmem:[%s3] sm:$0xff]
        %v915 = vld [vmem:[%s3 + $0x8] sm:$0xff]
        %v916 = vld [vmem:[%s3 + $0x10] sm:$0xff]
        %v917 = vld [vmem:[%s3 + $0x18] sm:$0xff]
        %v918 = vld [vmem:[%s3 + $0x20] sm:$0xff]
        %v919 = vld [vmem:[%s3 + $0x28] sm:$0xff]
        %v920 = vld [vmem:[%s3 + $0x30] sm:$0xff]
        %v921 = vld [vmem:[%s3 + $0x38] sm:$0xff]
        %v922 = vld [vmem:[%s4] sm:$0xff]
        %v923 = vld [vmem:[%s4 + $0x8] sm:$0xff]
        %v924 = vld [vmem:[%s4 + $0x10] sm:$0xff]
        %v925 = vld [vmem:[%s4 + $0x18] sm:$0xff]
        %v926 = vld [vmem:[%s4 + $0x20] sm:$0xff]
        %v927 = vld [vmem:[%s4 + $0x28] sm:$0xff]
        %v928 = vld [vmem:[%s4 + $0x30] sm:$0xff]
        %v929 = vld [vmem:[%s4 + $0x38] sm:$0xff]
        %931 = vset.pattern.permute.xlu0 0
        %932 = vperm.xlu0 %931, %v922
        %v933 = vpop.permute.xlu0 %932
        %936 = vset.pattern.permute.xlu0 0
        %937 = vperm.xlu0 %936, %v923
        %v938 = vpop.permute.xlu0 %937
        %941 = vset.pattern.permute.xlu0 0
        %942 = vperm.xlu0 %941, %v924
        %v943 = vpop.permute.xlu0 %942
        %946 = vset.pattern.permute.xlu0 0
        %947 = vperm.xlu0 %946, %v925
        %v948 = vpop.permute.xlu0 %947
        %951 = vset.pattern.permute.xlu0 0
        %952 = vperm.xlu0 %951, %v926
        %v953 = vpop.permute.xlu0 %952
        %956 = vset.pattern.permute.xlu0 0
        %957 = vperm.xlu0 %956, %v927
        %v958 = vpop.permute.xlu0 %957
        %961 = vset.pattern.permute.xlu0 0
        %962 = vperm.xlu0 %961, %v928
        %v963 = vpop.permute.xlu0 %962
        %966 = vset.pattern.permute.xlu0 0
        %967 = vperm.xlu0 %966, %v929
        %v968 = vpop.permute.xlu0 %967
        %vm970 = vcmask 261120
        %v972 = vsel %vm970, %v914, 0
        %v975 = vsel %vm970, %v915, 0
        %v978 = vsel %vm970, %v916, 0
        %v981 = vsel %vm970, %v917, 0
        %v984 = vsel %vm970, %v918, 0
        %v987 = vsel %vm970, %v919, 0
        %v990 = vsel %vm970, %v920, 0
        %v993 = vsel %vm970, %v921, 0
        %995 = vmatprep.subr.mxu0 0.0
        %996 = vmatpush1.msra.mxu0 0.0
        %997 = vmatprep.subr.mxu0 0.0
        %998 = vmatpush1.msra.mxu0 0.0
        %999 = vmatprep.subr.mxu0 0.0
        %1000 = vmatpush1.msra.mxu0 0.0
        %1001 = vmatprep.subr.mxu0 0.0
        %1002 = vmatpush1.msra.mxu0 0.0
        %1003 = vmatprep.subr.mxu0 0.0
        %1004 = vmatpush1.msra.mxu0 0.0
        %1005 = vmatprep.subr.mxu0 0.0
        %1006 = vmatpush1.msra.mxu0 0.0
        %1007 = vmatprep.subr.mxu0 0.0
        %1008 = vmatpush1.msra.mxu0 0.0
        %1009 = vmatprep.subr.mxu0 0.0
        %1010 = vmatpush1.msra.mxu0 0.0
        %1011 = vmatprep.subr.mxu0 0.0
        %1012 = vmatpush1.msra.mxu0 0.0
        %1013 = vmatprep.subr.mxu0 0.0
        %1014 = vmatpush1.msra.mxu0 0.0
        %1015 = vmatprep.subr.mxu0 0.0
        %1016 = vmatpush1.msra.mxu0 0.0
        %1017 = vmatprep.subr.mxu0 0.0
        %1018 = vmatpush1.msra.mxu0 0.0
        %1019 = vmatprep.subr.mxu0 0.0
        %1020 = vmatpush1.msra.mxu0 %v913
        %1021 = vmatprep.subr.mxu0 0.0
        %1022 = vmatpush1.msra.mxu0 %v912
        %1023 = vmatprep.subr.mxu0 0.0
        %1024 = vmatpush1.msra.mxu0 %v911
        %1025 = vmatprep.subr.mxu0 0.0
        %1026 = vmatpush1.msra.mxu0 %v910
        %1027 = vmatprep.subr.mxu0 0.0
        %1028 = vmatpush2.msra.mxu0 0.0
        %1029 = vmatprep.subr.mxu0 0.0
        %1030 = vmatpush2.msra.mxu0 0.0
        %1031 = vmatprep.subr.mxu0 0.0
        %1032 = vmatpush2.msra.mxu0 0.0
        %1033 = vmatprep.subr.mxu0 0.0
        %1034 = vmatpush2.msra.mxu0 0.0
        %1035 = vmatprep.subr.mxu0 0.0
        %1036 = vmatpush2.msra.mxu0 0.0
        %1037 = vmatprep.subr.mxu0 0.0
        %1038 = vmatpush2.msra.mxu0 0.0
        %1039 = vmatprep.subr.mxu0 0.0
        %1040 = vmatpush2.msra.mxu0 0.0
        %1041 = vmatprep.subr.mxu0 0.0
        %1042 = vmatpush2.msra.mxu0 0.0
        %1043 = vmatprep.subr.mxu0 0.0
        %1044 = vmatpush2.msra.mxu0 0.0
        %1045 = vmatprep.subr.mxu0 0.0
        %1046 = vmatpush2.msra.mxu0 0.0
        %1047 = vmatprep.subr.mxu0 0.0
        %1048 = vmatpush2.msra.mxu0 0.0
        %1049 = vmatprep.subr.mxu0 0.0
        %1050 = vmatpush2.msra.mxu0 0.0
        %1051 = vmatprep.subr.mxu0 0.0
        %1052 = vmatpush2.msra.mxu0 0.0
        %1053 = vmatprep.subr.mxu0 0.0
        %1054 = vmatpush2.msra.mxu0 0.0
        %1055 = vmatprep.subr.mxu0 0.0
        %1056 = vmatpush2.msra.mxu0 0.0
        %1057 = vmatprep.subr.mxu0 0.0
        %1058 = vmatpush2.msra.mxu0 0.0
        %1059 = vmatprep.mubr.f32.mxu0 0.0
        %1060 = vmatmul.mubr.f32.gmra.mxu0 %v972
        %v1061 = vpop.f32.mrf.mxu0
        %v1062 = vadd.f32 %v933, %v1061
        %v1063 = vpop.f32.mrf.mxu0
        %1064 = vmatprep.mubr.f32.mxu0 0.0
        %1065 = vmatmul.mubr.f32.gmra.mxu0 %v975
        %v1066 = vpop.f32.mrf.mxu0
        %v1067 = vadd.f32 %v938, %v1066
        %v1068 = vpop.f32.mrf.mxu0
        %1069 = vmatprep.mubr.f32.mxu0 0.0
        %1070 = vmatmul.mubr.f32.gmra.mxu0 %v978
        %v1071 = vpop.f32.mrf.mxu0
        %v1072 = vadd.f32 %v943, %v1071
        %v1073 = vpop.f32.mrf.mxu0
        %1074 = vmatprep.mubr.f32.mxu0 0.0
        %1075 = vmatmul.mubr.f32.gmra.mxu0 %v981
        %v1076 = vpop.f32.mrf.mxu0
        %v1077 = vadd.f32 %v948, %v1076
        %v1078 = vpop.f32.mrf.mxu0
        %1079 = vmatprep.mubr.f32.mxu0 0.0
        %1080 = vmatmul.mubr.f32.gmra.mxu0 %v984
        %v1081 = vpop.f32.mrf.mxu0
        %v1082 = vadd.f32 %v953, %v1081
        %v1083 = vpop.f32.mrf.mxu0
        %1084 = vmatprep.mubr.f32.mxu0 0.0
        %1085 = vmatmul.mubr.f32.gmra.mxu0 %v987
        %v1086 = vpop.f32.mrf.mxu0
        %v1087 = vadd.f32 %v958, %v1086
        %v1088 = vpop.f32.mrf.mxu0
        %1089 = vmatprep.mubr.f32.mxu0 0.0
        %1090 = vmatmul.mubr.f32.gmra.mxu0 %v990
        %v1091 = vpop.f32.mrf.mxu0
        %v1092 = vadd.f32 %v963, %v1091
        %v1093 = vpop.f32.mrf.mxu0
        %1094 = vmatprep.mubr.f32.mxu0 0.0
        %1095 = vmatmul.mubr.f32.gmra.mxu0 %v993
        %v1096 = vpop.f32.mrf.mxu0
        %v1097 = vadd.f32 %v968, %v1096
        %v1098 = vpop.f32.mrf.mxu0
        %1099 = vdwg.mxu0
        %v1100 = vmul.f32 %v1062, 0.35355338
        %v1101 = vmul.f32 %v1067, 0.35355338
        %v1102 = vmul.f32 %v1072, 0.35355338
        %v1103 = vmul.f32 %v1077, 0.35355338
        %v1104 = vmul.f32 %v1082, 0.35355338
        %v1105 = vmul.f32 %v1087, 0.35355338
        %v1106 = vmul.f32 %v1092, 0.35355338
        %v1107 = vmul.f32 %v1097, 0.35355338
        %vm1108 = vcmask 64512
        %1109 = vst.msk [vmem:[#allocation4] sm:$0xff] %vm1108, %v1100
        %1110 = vst.msk [vmem:[#allocation4 + $0x8] sm:$0xff] %vm1108, %v1101
        %1111 = vst.msk [vmem:[#allocation4 + $0x10] sm:$0xff] %vm1108, %v1102
        %1112 = vst.msk [vmem:[#allocation4 + $0x18] sm:$0xff] %vm1108, %v1103
        %1113 = vst.msk [vmem:[#allocation4 + $0x20] sm:$0xff] %vm1108, %v1104
        %1114 = vst.msk [vmem:[#allocation4 + $0x28] sm:$0xff] %vm1108, %v1105
        %1115 = vst.msk [vmem:[#allocation4 + $0x30] sm:$0xff] %vm1108, %v1106
        %1116 = vst.msk [vmem:[#allocation4 + $0x38] sm:$0xff] %vm1108, %v1107
        %v1117 = vld [vmem:[#allocation4] sm:$0xff]
        %v1118 = vld [vmem:[#allocation4 + $0x8] sm:$0xff]
        %v1119 = vld [vmem:[#allocation2] sm:$0xff]
        %v1120 = vld [vmem:[#allocation2 + $0x8] sm:$0xff]
        %v1121 = vld [vmem:[#allocation3] sm:$0xff]
        %v1122 = vld [vmem:[#allocation3 + $0x8] sm:$0xff]
        %1123 = vxpose.xlu0.b32.start [1/16] %v1117, 128
        %1124 = vxpose.xlu0.b32.cont [2/16] %v1118, 128
        %1125 = vxpose.xlu0.b32.cont [3/16] 0.0, 128
        %1126 = vxpose.xlu0.b32.cont [4/16] 0.0, 128
        %1127 = vxpose.xlu0.b32.cont [5/16] 0.0, 128
        %1128 = vxpose.xlu0.b32.cont [6/16] 0.0, 128
        %1129 = vxpose.xlu0.b32.cont [7/16] 0.0, 128
        %1130 = vxpose.xlu0.b32.cont [8/16] 0.0, 128
        %1131 = vxpose.xlu0.b32.cont [9/16] 0.0, 128
        %1132 = vxpose.xlu0.b32.cont [10/16] 0.0, 128
        %1133 = vxpose.xlu0.b32.cont [11/16] 0.0, 128
        %1134 = vxpose.xlu0.b32.cont [12/16] 0.0, 128
        %1135 = vxpose.xlu0.b32.cont [13/16] 0.0, 128
        %1136 = vxpose.xlu0.b32.cont [14/16] 0.0, 128
        %1137 = vxpose.xlu0.b32.cont [15/16] 0.0, 128
        %1138 = vxpose.xlu0.b32.end [16/16] 0.0, 128
        %v1139 = vpop.trf.xlu0
        %v1140 = vpop.trf.xlu0
        %v1141 = vpop.trf.xlu0
        %v1142 = vpop.trf.xlu0
        %v1143 = vpop.trf.xlu0
        %v1144 = vpop.trf.xlu0
        %v1145 = vpop.trf.xlu0
        %v1146 = vpop.trf.xlu0
        %v1147 = vpop.trf.xlu0
        %v1148 = vpop.trf.xlu0
        %v1149 = vpop.trf.xlu0
        %v1150 = vpop.trf.xlu0
        %v1151 = vpop.trf.xlu0
        %v1152 = vpop.trf.xlu0
        %v1153 = vpop.trf.xlu0
        %v1154 = vpop.trf.xlu0
        %vm1155 = vcmask 130048
        %v1157 = vsel %vm1155, %v1139, 0
        %1159 = vmatprep.subr.mxu0 0.0
        %1160 = vmatpush1.msra.mxu0 0.0
        %1161 = vmatprep.subr.mxu0 0.0
        %1162 = vmatpush1.msra.mxu0 0.0
        %1163 = vmatprep.subr.mxu0 0.0
        %1164 = vmatpush1.msra.mxu0 0.0
        %1165 = vmatprep.subr.mxu0 0.0
        %1166 = vmatpush1.msra.mxu0 0.0
        %1167 = vmatprep.subr.mxu0 0.0
        %1168 = vmatpush1.msra.mxu0 0.0
        %1169 = vmatprep.subr.mxu0 0.0
        %1170 = vmatpush1.msra.mxu0 0.0
        %1171 = vmatprep.subr.mxu0 0.0
        %1172 = vmatpush1.msra.mxu0 0.0
        %1173 = vmatprep.subr.mxu0 0.0
        %1174 = vmatpush1.msra.mxu0 0.0
        %1175 = vmatprep.subr.mxu0 0.0
        %1176 = vmatpush1.msra.mxu0 0.0
        %1177 = vmatprep.subr.mxu0 0.0
        %1178 = vmatpush1.msra.mxu0 0.0
        %1179 = vmatprep.subr.mxu0 0.0
        %1180 = vmatpush1.msra.mxu0 0.0
        %1181 = vmatprep.subr.mxu0 0.0
        %1182 = vmatpush1.msra.mxu0 0.0
        %1183 = vmatprep.subr.mxu0 0.0
        %1184 = vmatpush1.msra.mxu0 0.0
        %1185 = vmatprep.subr.mxu0 0.0
        %1186 = vmatpush1.msra.mxu0 0.0
        %1187 = vmatprep.subr.mxu0 0.0
        %1188 = vmatpush1.msra.mxu0 %v1120
        %1189 = vmatprep.subr.mxu0 0.0
        %1190 = vmatpush1.msra.mxu0 %v1119
        %1191 = vmatprep.subr.mxu0 0.0
        %1192 = vmatpush2.msra.mxu0 0.0
        %1193 = vmatprep.subr.mxu0 0.0
        %1194 = vmatpush2.msra.mxu0 0.0
        %1195 = vmatprep.subr.mxu0 0.0
        %1196 = vmatpush2.msra.mxu0 0.0
        %1197 = vmatprep.subr.mxu0 0.0
        %1198 = vmatpush2.msra.mxu0 0.0
        %1199 = vmatprep.subr.mxu0 0.0
        %1200 = vmatpush2.msra.mxu0 0.0
        %1201 = vmatprep.subr.mxu0 0.0
        %1202 = vmatpush2.msra.mxu0 0.0
        %1203 = vmatprep.subr.mxu0 0.0
        %1204 = vmatpush2.msra.mxu0 0.0
        %1205 = vmatprep.subr.mxu0 0.0
        %1206 = vmatpush2.msra.mxu0 0.0
        %1207 = vmatprep.subr.mxu0 0.0
        %1208 = vmatpush2.msra.mxu0 0.0
        %1209 = vmatprep.subr.mxu0 0.0
        %1210 = vmatpush2.msra.mxu0 0.0
        %1211 = vmatprep.subr.mxu0 0.0
        %1212 = vmatpush2.msra.mxu0 0.0
        %1213 = vmatprep.subr.mxu0 0.0
        %1214 = vmatpush2.msra.mxu0 0.0
        %1215 = vmatprep.subr.mxu0 0.0
        %1216 = vmatpush2.msra.mxu0 0.0
        %1217 = vmatprep.subr.mxu0 0.0
        %1218 = vmatpush2.msra.mxu0 0.0
        %1219 = vmatprep.subr.mxu0 0.0
        %1220 = vmatpush2.msra.mxu0 0.0
        %1221 = vmatprep.subr.mxu0 0.0
        %1222 = vmatpush2.msra.mxu0 0.0
        %1223 = vmatprep.mubr.f32.mxu0 0.0
        %1224 = vmatmul.mubr.f32.gmra.mxu0 %v1157
        %v1225 = vpop.f32.mrf.mxu0
        %v1226 = vadd.f32 0.0, %v1225
        %v1227 = vpop.f32.mrf.mxu0
        %1228 = vdwg.mxu0
        %v1229 = vld [vmem:[%s511] sm:$0x3]
        %vm1230 = vnez %v1229
        %v1231 = vsel %vm1230, 16843009, 0
        %v1232 = vunpack.c.0.s8 %v1231
        %vm1233 = vcmp.ne.s32.totalorder %v1232, 0
        %v1234 = vsel %vm1233, -1e+09, %v1226
        %v1235 = vsel %vm1108, %v1234, -inf
        %1236 = vmax.xlane.f32.xlu0 %v1235
        %v1237 = vpop.xlane.xlu0 %1236
        %v1238 = vsub.f32 %v1234, %v1237
        %v1239 = vmul.f32 %v1238, 1.442695
        %v1240 = vpow.pop %v1239
        %v1241 = vsel %vm1108, %v1240, 0.0
        %1242 = vadd.xlane.f32.xlu0 %v1241
        %v1243 = vpop.xlane.xlu0 %1242
        %v1244 = vrcp.pop %v1243
        %v1245 = vmul.f32 %v1240, %v1244
        %v1247 = vsel %vm1108, %v1121, 0
        %v1250 = vsel %vm1108, %v1122, 0
        %v1253 = vsel %vm1108, %v1245, 0
        %1255 = vmatprep.subr.mxu0 0.0
        %1256 = vmatpush1.xpose.msra.mxu0 0.0
        %1257 = vmatprep.subr.mxu0 0.0
        %1258 = vmatpush1.xpose.msra.mxu0 0.0
        %1259 = vmatprep.subr.mxu0 0.0
        %1260 = vmatpush1.xpose.msra.mxu0 0.0
        %1261 = vmatprep.subr.mxu0 0.0
        %1262 = vmatpush1.xpose.msra.mxu0 0.0
        %1263 = vmatprep.subr.mxu0 0.0
        %1264 = vmatpush1.xpose.msra.mxu0 0.0
        %1265 = vmatprep.subr.mxu0 0.0
        %1266 = vmatpush1.xpose.msra.mxu0 0.0
        %1267 = vmatprep.subr.mxu0 0.0
        %1268 = vmatpush1.xpose.msra.mxu0 0.0
        %1269 = vmatprep.subr.mxu0 0.0
        %1270 = vmatpush1.xpose.msra.mxu0 0.0
        %1271 = vmatprep.subr.mxu0 0.0
        %1272 = vmatpush1.xpose.msra.mxu0 0.0
        %1273 = vmatprep.subr.mxu0 0.0
        %1274 = vmatpush1.xpose.msra.mxu0 0.0
        %1275 = vmatprep.subr.mxu0 0.0
        %1276 = vmatpush1.xpose.msra.mxu0 0.0
        %1277 = vmatprep.subr.mxu0 0.0
        %1278 = vmatpush1.xpose.msra.mxu0 0.0
        %1279 = vmatprep.subr.mxu0 0.0
        %1280 = vmatpush1.xpose.msra.mxu0 0.0
        %1281 = vmatprep.subr.mxu0 0.0
        %1282 = vmatpush1.xpose.msra.mxu0 0.0
        %1283 = vmatprep.subr.mxu0 0.0
        %1284 = vmatpush1.xpose.msra.mxu0 0.0
        %1285 = vmatprep.subr.mxu0 0.0
        %1286 = vmatpush1.xpose.msra.mxu0 %v1253
        %1287 = vmatprep.subr.mxu0 0.0
        %1288 = vmatpush2.xpose.msra.mxu0 0.0
        %1289 = vmatprep.subr.mxu0 0.0
        %1290 = vmatpush2.xpose.msra.mxu0 0.0
        %1291 = vmatprep.subr.mxu0 0.0
        %1292 = vmatpush2.xpose.msra.mxu0 0.0
        %1293 = vmatprep.subr.mxu0 0.0
        %1294 = vmatpush2.xpose.msra.mxu0 0.0
        %1295 = vmatprep.subr.mxu0 0.0
        %1296 = vmatpush2.xpose.msra.mxu0 0.0
        %1297 = vmatprep.subr.mxu0 0.0
        %1298 = vmatpush2.xpose.msra.mxu0 0.0
        %1299 = vmatprep.subr.mxu0 0.0
        %1300 = vmatpush2.xpose.msra.mxu0 0.0
        %1301 = vmatprep.subr.mxu0 0.0
        %1302 = vmatpush2.xpose.msra.mxu0 0.0
        %1303 = vmatprep.subr.mxu0 0.0
        %1304 = vmatpush2.xpose.msra.mxu0 0.0
        %1305 = vmatprep.subr.mxu0 0.0
        %1306 = vmatpush2.xpose.msra.mxu0 0.0
        %1307 = vmatprep.subr.mxu0 0.0
        %1308 = vmatpush2.xpose.msra.mxu0 0.0
        %1309 = vmatprep.subr.mxu0 0.0
        %1310 = vmatpush2.xpose.msra.mxu0 0.0
        %1311 = vmatprep.subr.mxu0 0.0
        %1312 = vmatpush2.xpose.msra.mxu0 0.0
        %1313 = vmatprep.subr.mxu0 0.0
        %1314 = vmatpush2.xpose.msra.mxu0 0.0
        %1315 = vmatprep.subr.mxu0 0.0
        %1316 = vmatpush2.xpose.msra.mxu0 0.0
        %1317 = vmatprep.subr.mxu0 0.0
        %1318 = vmatpush2.xpose.msra.mxu0 0.0
        %1319 = vmatprep.mubr.f32.mxu0 0.0
        %1320 = vmatmul.mubr.f32.gmra.mxu0 %v1247
        %v1321 = vpop.f32.mrf.mxu0
        %v1322 = vadd.f32 0.0, %v1321
        %v1323 = vpop.f32.mrf.mxu0
        %1324 = vmatprep.mubr.f32.mxu0 0.0
        %1325 = vmatmul.mubr.f32.gmra.mxu0 %v1250
        %v1326 = vpop.f32.mrf.mxu0
        %v1327 = vadd.f32 0.0, %v1326
        %v1328 = vpop.f32.mrf.mxu0
        %1329 = vdwg.mxu0
        %1330 = vst.msk [vmem:[#allocation5] sm:$0xff] %vm1108, %v1322
        %1331 = vst.msk [vmem:[#allocation5 + $0x8] sm:$0xff] %vm1108, %v1327
        %v1332 = vld [vmem:[#allocation4 + $0x10] sm:$0xff]
        %v1333 = vld [vmem:[#allocation4 + $0x18] sm:$0xff]
        %v1334 = vld [vmem:[#allocation2 + $0x10] sm:$0xff]
        %v1335 = vld [vmem:[#allocation2 + $0x18] sm:$0xff]
        %v1336 = vld [vmem:[#allocation3 + $0x10] sm:$0xff]
        %v1337 = vld [vmem:[#allocation3 + $0x18] sm:$0xff]
        %1338 = vxpose.xlu0.b32.start [1/16] %v1332, 128
        %1339 = vxpose.xlu0.b32.cont [2/16] %v1333, 128
        %1340 = vxpose.xlu0.b32.cont [3/16] 0.0, 128
        %1341 = vxpose.xlu0.b32.cont [4/16] 0.0, 128
        %1342 = vxpose.xlu0.b32.cont [5/16] 0.0, 128
        %1343 = vxpose.xlu0.b32.cont [6/16] 0.0, 128
        %1344 = vxpose.xlu0.b32.cont [7/16] 0.0, 128
        %1345 = vxpose.xlu0.b32.cont [8/16] 0.0, 128
        %1346 = vxpose.xlu0.b32.cont [9/16] 0.0, 128
        %1347 = vxpose.xlu0.b32.cont [10/16] 0.0, 128
        %1348 = vxpose.xlu0.b32.cont [11/16] 0.0, 128
        %1349 = vxpose.xlu0.b32.cont [12/16] 0.0, 128
        %1350 = vxpose.xlu0.b32.cont [13/16] 0.0, 128
        %1351 = vxpose.xlu0.b32.cont [14/16] 0.0, 128
        %1352 = vxpose.xlu0.b32.cont [15/16] 0.0, 128
        %1353 = vxpose.xlu0.b32.end [16/16] 0.0, 128
        %v1354 = vpop.trf.xlu0
        %v1355 = vpop.trf.xlu0
        %v1356 = vpop.trf.xlu0
        %v1357 = vpop.trf.xlu0
        %v1358 = vpop.trf.xlu0
        %v1359 = vpop.trf.xlu0
        %v1360 = vpop.trf.xlu0
        %v1361 = vpop.trf.xlu0
        %v1362 = vpop.trf.xlu0
        %v1363 = vpop.trf.xlu0
        %v1364 = vpop.trf.xlu0
        %v1365 = vpop.trf.xlu0
        %v1366 = vpop.trf.xlu0
        %v1367 = vpop.trf.xlu0
        %v1368 = vpop.trf.xlu0
        %v1369 = vpop.trf.xlu0
        %v1371 = vsel %vm1155, %v1354, 0
        %1373 = vmatprep.subr.mxu0 0.0
        %1374 = vmatpush1.msra.mxu0 0.0
        %1375 = vmatprep.subr.mxu0 0.0
        %1376 = vmatpush1.msra.mxu0 0.0
        %1377 = vmatprep.subr.mxu0 0.0
        %1378 = vmatpush1.msra.mxu0 0.0
        %1379 = vmatprep.subr.mxu0 0.0
        %1380 = vmatpush1.msra.mxu0 0.0
        %1381 = vmatprep.subr.mxu0 0.0
        %1382 = vmatpush1.msra.mxu0 0.0
        %1383 = vmatprep.subr.mxu0 0.0
        %1384 = vmatpush1.msra.mxu0 0.0
        %1385 = vmatprep.subr.mxu0 0.0
        %1386 = vmatpush1.msra.mxu0 0.0
        %1387 = vmatprep.subr.mxu0 0.0
        %1388 = vmatpush1.msra.mxu0 0.0
        %1389 = vmatprep.subr.mxu0 0.0
        %1390 = vmatpush1.msra.mxu0 0.0
        %1391 = vmatprep.subr.mxu0 0.0
        %1392 = vmatpush1.msra.mxu0 0.0
        %1393 = vmatprep.subr.mxu0 0.0
        %1394 = vmatpush1.msra.mxu0 0.0
        %1395 = vmatprep.subr.mxu0 0.0
        %1396 = vmatpush1.msra.mxu0 0.0
        %1397 = vmatprep.subr.mxu0 0.0
        %1398 = vmatpush1.msra.mxu0 0.0
        %1399 = vmatprep.subr.mxu0 0.0
        %1400 = vmatpush1.msra.mxu0 0.0
        %1401 = vmatprep.subr.mxu0 0.0
        %1402 = vmatpush1.msra.mxu0 %v1335
        %1403 = vmatprep.subr.mxu0 0.0
        %1404 = vmatpush1.msra.mxu0 %v1334
        %1405 = vmatprep.subr.mxu0 0.0
        %1406 = vmatpush2.msra.mxu0 0.0
        %1407 = vmatprep.subr.mxu0 0.0
        %1408 = vmatpush2.msra.mxu0 0.0
        %1409 = vmatprep.subr.mxu0 0.0
        %1410 = vmatpush2.msra.mxu0 0.0
        %1411 = vmatprep.subr.mxu0 0.0
        %1412 = vmatpush2.msra.mxu0 0.0
        %1413 = vmatprep.subr.mxu0 0.0
        %1414 = vmatpush2.msra.mxu0 0.0
        %1415 = vmatprep.subr.mxu0 0.0
        %1416 = vmatpush2.msra.mxu0 0.0
        %1417 = vmatprep.subr.mxu0 0.0
        %1418 = vmatpush2.msra.mxu0 0.0
        %1419 = vmatprep.subr.mxu0 0.0
        %1420 = vmatpush2.msra.mxu0 0.0
        %1421 = vmatprep.subr.mxu0 0.0
        %1422 = vmatpush2.msra.mxu0 0.0
        %1423 = vmatprep.subr.mxu0 0.0
        %1424 = vmatpush2.msra.mxu0 0.0
        %1425 = vmatprep.subr.mxu0 0.0
        %1426 = vmatpush2.msra.mxu0 0.0
        %1427 = vmatprep.subr.mxu0 0.0
        %1428 = vmatpush2.msra.mxu0 0.0
        %1429 = vmatprep.subr.mxu0 0.0
        %1430 = vmatpush2.msra.mxu0 0.0
        %1431 = vmatprep.subr.mxu0 0.0
        %1432 = vmatpush2.msra.mxu0 0.0
        %1433 = vmatprep.subr.mxu0 0.0
        %1434 = vmatpush2.msra.mxu0 0.0
        %1435 = vmatprep.subr.mxu0 0.0
        %1436 = vmatpush2.msra.mxu0 0.0
        %1437 = vmatprep.mubr.f32.mxu0 0.0
        %1438 = vmatmul.mubr.f32.gmra.mxu0 %v1371
        %v1439 = vpop.f32.mrf.mxu0
        %v1440 = vadd.f32 0.0, %v1439
        %v1441 = vpop.f32.mrf.mxu0
        %1442 = vdwg.mxu0
        %v1443 = vld [vmem:[%s511] sm:$0x3]
        %vm1444 = vnez %v1443
        %v1445 = vsel %vm1444, 16843009, 0
        %v1446 = vunpack.c.0.s8 %v1445
        %vm1447 = vcmp.ne.s32.totalorder %v1446, 0
        %v1448 = vsel %vm1447, -1e+09, %v1440
        %v1449 = vsel %vm1108, %v1448, -inf
        %1450 = vmax.xlane.f32.xlu0 %v1449
        %v1451 = vpop.xlane.xlu0 %1450
        %v1452 = vsub.f32 %v1448, %v1451
        %v1453 = vmul.f32 %v1452, 1.442695
        %v1454 = vpow.pop %v1453
        %v1455 = vsel %vm1108, %v1454, 0.0
        %1456 = vadd.xlane.f32.xlu0 %v1455
        %v1457 = vpop.xlane.xlu0 %1456
        %v1458 = vrcp.pop %v1457
        %v1459 = vmul.f32 %v1454, %v1458
        %v1461 = vsel %vm1108, %v1336, 0
        %v1464 = vsel %vm1108, %v1337, 0
        %v1467 = vsel %vm1108, %v1459, 0
        %1469 = vmatprep.subr.mxu0 0.0
        %1470 = vmatpush1.xpose.msra.mxu0 0.0
        %1471 = vmatprep.subr.mxu0 0.0
        %1472 = vmatpush1.xpose.msra.mxu0 0.0
        %1473 = vmatprep.subr.mxu0 0.0
        %1474 = vmatpush1.xpose.msra.mxu0 0.0
        %1475 = vmatprep.subr.mxu0 0.0
        %1476 = vmatpush1.xpose.msra.mxu0 0.0
        %1477 = vmatprep.subr.mxu0 0.0
        %1478 = vmatpush1.xpose.msra.mxu0 0.0
        %1479 = vmatprep.subr.mxu0 0.0
        %1480 = vmatpush1.xpose.msra.mxu0 0.0
        %1481 = vmatprep.subr.mxu0 0.0
        %1482 = vmatpush1.xpose.msra.mxu0 0.0
        %1483 = vmatprep.subr.mxu0 0.0
        %1484 = vmatpush1.xpose.msra.mxu0 0.0
        %1485 = vmatprep.subr.mxu0 0.0
        %1486 = vmatpush1.xpose.msra.mxu0 0.0
        %1487 = vmatprep.subr.mxu0 0.0
        %1488 = vmatpush1.xpose.msra.mxu0 0.0
        %1489 = vmatprep.subr.mxu0 0.0
        %1490 = vmatpush1.xpose.msra.mxu0 0.0
        %1491 = vmatprep.subr.mxu0 0.0
        %1492 = vmatpush1.xpose.msra.mxu0 0.0
        %1493 = vmatprep.subr.mxu0 0.0
        %1494 = vmatpush1.xpose.msra.mxu0 0.0
        %1495 = vmatprep.subr.mxu0 0.0
        %1496 = vmatpush1.xpose.msra.mxu0 0.0
        %1497 = vmatprep.subr.mxu0 0.0
        %1498 = vmatpush1.xpose.msra.mxu0 0.0
        %1499 = vmatprep.subr.mxu0 0.0
        %1500 = vmatpush1.xpose.msra.mxu0 %v1467
        %1501 = vmatprep.subr.mxu0 0.0
        %1502 = vmatpush2.xpose.msra.mxu0 0.0
        %1503 = vmatprep.subr.mxu0 0.0
        %1504 = vmatpush2.xpose.msra.mxu0 0.0
        %1505 = vmatprep.subr.mxu0 0.0
        %1506 = vmatpush2.xpose.msra.mxu0 0.0
        %1507 = vmatprep.subr.mxu0 0.0
        %1508 = vmatpush2.xpose.msra.mxu0 0.0
        %1509 = vmatprep.subr.mxu0 0.0
        %1510 = vmatpush2.xpose.msra.mxu0 0.0
        %1511 = vmatprep.subr.mxu0 0.0
        %1512 = vmatpush2.xpose.msra.mxu0 0.0
        %1513 = vmatprep.subr.mxu0 0.0
        %1514 = vmatpush2.xpose.msra.mxu0 0.0
        %1515 = vmatprep.subr.mxu0 0.0
        %1516 = vmatpush2.xpose.msra.mxu0 0.0
        %1517 = vmatprep.subr.mxu0 0.0
        %1518 = vmatpush2.xpose.msra.mxu0 0.0
        %1519 = vmatprep.subr.mxu0 0.0
        %1520 = vmatpush2.xpose.msra.mxu0 0.0
        %1521 = vmatprep.subr.mxu0 0.0
        %1522 = vmatpush2.xpose.msra.mxu0 0.0
        %1523 = vmatprep.subr.mxu0 0.0
        %1524 = vmatpush2.xpose.msra.mxu0 0.0
        %1525 = vmatprep.subr.mxu0 0.0
        %1526 = vmatpush2.xpose.msra.mxu0 0.0
        %1527 = vmatprep.subr.mxu0 0.0
        %1528 = vmatpush2.xpose.msra.mxu0 0.0
        %1529 = vmatprep.subr.mxu0 0.0
        %1530 = vmatpush2.xpose.msra.mxu0 0.0
        %1531 = vmatprep.subr.mxu0 0.0
        %1532 = vmatpush2.xpose.msra.mxu0 0.0
        %1533 = vmatprep.mubr.f32.mxu0 0.0
        %1534 = vmatmul.mubr.f32.gmra.mxu0 %v1461
        %v1535 = vpop.f32.mrf.mxu0
        %v1536 = vadd.f32 0.0, %v1535
        %v1537 = vpop.f32.mrf.mxu0
        %1538 = vmatprep.mubr.f32.mxu0 0.0
        %1539 = vmatmul.mubr.f32.gmra.mxu0 %v1464
        %v1540 = vpop.f32.mrf.mxu0
        %v1541 = vadd.f32 0.0, %v1540
        %v1542 = vpop.f32.mrf.mxu0
        %1543 = vdwg.mxu0
        %1544 = vst.msk [vmem:[#allocation5 + $0x10] sm:$0xff] %vm1108, %v1536
        %1545 = vst.msk [vmem:[#allocation5 + $0x18] sm:$0xff] %vm1108, %v1541
        %v1546 = vld [vmem:[#allocation4 + $0x20] sm:$0xff]
        %v1547 = vld [vmem:[#allocation4 + $0x28] sm:$0xff]
        %v1548 = vld [vmem:[#allocation2 + $0x20] sm:$0xff]
        %v1549 = vld [vmem:[#allocation2 + $0x28] sm:$0xff]
        %v1550 = vld [vmem:[#allocation3 + $0x20] sm:$0xff]
        %v1551 = vld [vmem:[#allocation3 + $0x28] sm:$0xff]
        %1552 = vxpose.xlu0.b32.start [1/16] %v1546, 128
        %1553 = vxpose.xlu0.b32.cont [2/16] %v1547, 128
        %1554 = vxpose.xlu0.b32.cont [3/16] 0.0, 128
        %1555 = vxpose.xlu0.b32.cont [4/16] 0.0, 128
        %1556 = vxpose.xlu0.b32.cont [5/16] 0.0, 128
        %1557 = vxpose.xlu0.b32.cont [6/16] 0.0, 128
        %1558 = vxpose.xlu0.b32.cont [7/16] 0.0, 128
        %1559 = vxpose.xlu0.b32.cont [8/16] 0.0, 128
        %1560 = vxpose.xlu0.b32.cont [9/16] 0.0, 128
        %1561 = vxpose.xlu0.b32.cont [10/16] 0.0, 128
        %1562 = vxpose.xlu0.b32.cont [11/16] 0.0, 128
        %1563 = vxpose.xlu0.b32.cont [12/16] 0.0, 128
        %1564 = vxpose.xlu0.b32.cont [13/16] 0.0, 128
        %1565 = vxpose.xlu0.b32.cont [14/16] 0.0, 128
        %1566 = vxpose.xlu0.b32.cont [15/16] 0.0, 128
        %1567 = vxpose.xlu0.b32.end [16/16] 0.0, 128
        %v1568 = vpop.trf.xlu0
        %v1569 = vpop.trf.xlu0
        %v1570 = vpop.trf.xlu0
        %v1571 = vpop.trf.xlu0
        %v1572 = vpop.trf.xlu0
        %v1573 = vpop.trf.xlu0
        %v1574 = vpop.trf.xlu0
        %v1575 = vpop.trf.xlu0
        %v1576 = vpop.trf.xlu0
        %v1577 = vpop.trf.xlu0
        %v1578 = vpop.trf.xlu0
        %v1579 = vpop.trf.xlu0
        %v1580 = vpop.trf.xlu0
        %v1581 = vpop.trf.xlu0
        %v1582 = vpop.trf.xlu0
        %v1583 = vpop.trf.xlu0
        %v1585 = vsel %vm1155, %v1568, 0
        %1587 = vmatprep.subr.mxu0 0.0
        %1588 = vmatpush1.msra.mxu0 0.0
        %1589 = vmatprep.subr.mxu0 0.0
        %1590 = vmatpush1.msra.mxu0 0.0
        %1591 = vmatprep.subr.mxu0 0.0
        %1592 = vmatpush1.msra.mxu0 0.0
        %1593 = vmatprep.subr.mxu0 0.0
        %1594 = vmatpush1.msra.mxu0 0.0
        %1595 = vmatprep.subr.mxu0 0.0
        %1596 = vmatpush1.msra.mxu0 0.0
        %1597 = vmatprep.subr.mxu0 0.0
        %1598 = vmatpush1.msra.mxu0 0.0
        %1599 = vmatprep.subr.mxu0 0.0
        %1600 = vmatpush1.msra.mxu0 0.0
        %1601 = vmatprep.subr.mxu0 0.0
        %1602 = vmatpush1.msra.mxu0 0.0
        %1603 = vmatprep.subr.mxu0 0.0
        %1604 = vmatpush1.msra.mxu0 0.0
        %1605 = vmatprep.subr.mxu0 0.0
        %1606 = vmatpush1.msra.mxu0 0.0
        %1607 = vmatprep.subr.mxu0 0.0
        %1608 = vmatpush1.msra.mxu0 0.0
        %1609 = vmatprep.subr.mxu0 0.0
        %1610 = vmatpush1.msra.mxu0 0.0
        %1611 = vmatprep.subr.mxu0 0.0
        %1612 = vmatpush1.msra.mxu0 0.0
        %1613 = vmatprep.subr.mxu0 0.0
        %1614 = vmatpush1.msra.mxu0 0.0
        %1615 = vmatprep.subr.mxu0 0.0
        %1616 = vmatpush1.msra.mxu0 %v1549
        %1617 = vmatprep.subr.mxu0 0.0
        %1618 = vmatpush1.msra.mxu0 %v1548
        %1619 = vmatprep.subr.mxu0 0.0
        %1620 = vmatpush2.msra.mxu0 0.0
        %1621 = vmatprep.subr.mxu0 0.0
        %1622 = vmatpush2.msra.mxu0 0.0
        %1623 = vmatprep.subr.mxu0 0.0
        %1624 = vmatpush2.msra.mxu0 0.0
        %1625 = vmatprep.subr.mxu0 0.0
        %1626 = vmatpush2.msra.mxu0 0.0
        %1627 = vmatprep.subr.mxu0 0.0
        %1628 = vmatpush2.msra.mxu0 0.0
        %1629 = vmatprep.subr.mxu0 0.0
        %1630 = vmatpush2.msra.mxu0 0.0
        %1631 = vmatprep.subr.mxu0 0.0
        %1632 = vmatpush2.msra.mxu0 0.0
        %1633 = vmatprep.subr.mxu0 0.0
        %1634 = vmatpush2.msra.mxu0 0.0
        %1635 = vmatprep.subr.mxu0 0.0
        %1636 = vmatpush2.msra.mxu0 0.0
        %1637 = vmatprep.subr.mxu0 0.0
        %1638 = vmatpush2.msra.mxu0 0.0
        %1639 = vmatprep.subr.mxu0 0.0
        %1640 = vmatpush2.msra.mxu0 0.0
        %1641 = vmatprep.subr.mxu0 0.0
        %1642 = vmatpush2.msra.mxu0 0.0
        %1643 = vmatprep.subr.mxu0 0.0
        %1644 = vmatpush2.msra.mxu0 0.0
        %1645 = vmatprep.subr.mxu0 0.0
        %1646 = vmatpush2.msra.mxu0 0.0
        %1647 = vmatprep.subr.mxu0 0.0
        %1648 = vmatpush2.msra.mxu0 0.0
        %1649 = vmatprep.subr.mxu0 0.0
        %1650 = vmatpush2.msra.mxu0 0.0
        %1651 = vmatprep.mubr.f32.mxu0 0.0
        %1652 = vmatmul.mubr.f32.gmra.mxu0 %v1585
        %v1653 = vpop.f32.mrf.mxu0
        %v1654 = vadd.f32 0.0, %v1653
        %v1655 = vpop.f32.mrf.mxu0
        %1656 = vdwg.mxu0
        %v1657 = vld [vmem:[%s511] sm:$0x3]
        %vm1658 = vnez %v1657
        %v1659 = vsel %vm1658, 16843009, 0
        %v1660 = vunpack.c.0.s8 %v1659
        %vm1661 = vcmp.ne.s32.totalorder %v1660, 0
        %v1662 = vsel %vm1661, -1e+09, %v1654
        %v1663 = vsel %vm1108, %v1662, -inf
        %1664 = vmax.xlane.f32.xlu0 %v1663
        %v1665 = vpop.xlane.xlu0 %1664
        %v1666 = vsub.f32 %v1662, %v1665
        %v1667 = vmul.f32 %v1666, 1.442695
        %v1668 = vpow.pop %v1667
        %v1669 = vsel %vm1108, %v1668, 0.0
        %1670 = vadd.xlane.f32.xlu0 %v1669
        %v1671 = vpop.xlane.xlu0 %1670
        %v1672 = vrcp.pop %v1671
        %v1673 = vmul.f32 %v1668, %v1672
        %v1675 = vsel %vm1108, %v1550, 0
        %v1678 = vsel %vm1108, %v1551, 0
        %v1681 = vsel %vm1108, %v1673, 0
        %1683 = vmatprep.subr.mxu0 0.0
        %1684 = vmatpush1.xpose.msra.mxu0 0.0
        %1685 = vmatprep.subr.mxu0 0.0
        %1686 = vmatpush1.xpose.msra.mxu0 0.0
        %1687 = vmatprep.subr.mxu0 0.0
        %1688 = vmatpush1.xpose.msra.mxu0 0.0
        %1689 = vmatprep.subr.mxu0 0.0
        %1690 = vmatpush1.xpose.msra.mxu0 0.0
        %1691 = vmatprep.subr.mxu0 0.0
        %1692 = vmatpush1.xpose.msra.mxu0 0.0
        %1693 = vmatprep.subr.mxu0 0.0
        %1694 = vmatpush1.xpose.msra.mxu0 0.0
        %1695 = vmatprep.subr.mxu0 0.0
        %1696 = vmatpush1.xpose.msra.mxu0 0.0
        %1697 = vmatprep.subr.mxu0 0.0
        %1698 = vmatpush1.xpose.msra.mxu0 0.0
        %1699 = vmatprep.subr.mxu0 0.0
        %1700 = vmatpush1.xpose.msra.mxu0 0.0
        %1701 = vmatprep.subr.mxu0 0.0
        %1702 = vmatpush1.xpose.msra.mxu0 0.0
        %1703 = vmatprep.subr.mxu0 0.0
        %1704 = vmatpush1.xpose.msra.mxu0 0.0
        %1705 = vmatprep.subr.mxu0 0.0
        %1706 = vmatpush1.xpose.msra.mxu0 0.0
        %1707 = vmatprep.subr.mxu0 0.0
        %1708 = vmatpush1.xpose.msra.mxu0 0.0
        %1709 = vmatprep.subr.mxu0 0.0
        %1710 = vmatpush1.xpose.msra.mxu0 0.0
        %1711 = vmatprep.subr.mxu0 0.0
        %1712 = vmatpush1.xpose.msra.mxu0 0.0
        %1713 = vmatprep.subr.mxu0 0.0
        %1714 = vmatpush1.xpose.msra.mxu0 %v1681
        %1715 = vmatprep.subr.mxu0 0.0
        %1716 = vmatpush2.xpose.msra.mxu0 0.0
        %1717 = vmatprep.subr.mxu0 0.0
        %1718 = vmatpush2.xpose.msra.mxu0 0.0
        %1719 = vmatprep.subr.mxu0 0.0
        %1720 = vmatpush2.xpose.msra.mxu0 0.0
        %1721 = vmatprep.subr.mxu0 0.0
        %1722 = vmatpush2.xpose.msra.mxu0 0.0
        %1723 = vmatprep.subr.mxu0 0.0
        %1724 = vmatpush2.xpose.msra.mxu0 0.0
        %1725 = vmatprep.subr.mxu0 0.0
        %1726 = vmatpush2.xpose.msra.mxu0 0.0
        %1727 = vmatprep.subr.mxu0 0.0
        %1728 = vmatpush2.xpose.msra.mxu0 0.0
        %1729 = vmatprep.subr.mxu0 0.0
        %1730 = vmatpush2.xpose.msra.mxu0 0.0
        %1731 = vmatprep.subr.mxu0 0.0
        %1732 = vmatpush2.xpose.msra.mxu0 0.0
        %1733 = vmatprep.subr.mxu0 0.0
        %1734 = vmatpush2.xpose.msra.mxu0 0.0
        %1735 = vmatprep.subr.mxu0 0.0
        %1736 = vmatpush2.xpose.msra.mxu0 0.0
        %1737 = vmatprep.subr.mxu0 0.0
        %1738 = vmatpush2.xpose.msra.mxu0 0.0
        %1739 = vmatprep.subr.mxu0 0.0
        %1740 = vmatpush2.xpose.msra.mxu0 0.0
        %1741 = vmatprep.subr.mxu0 0.0
        %1742 = vmatpush2.xpose.msra.mxu0 0.0
        %1743 = vmatprep.subr.mxu0 0.0
        %1744 = vmatpush2.xpose.msra.mxu0 0.0
        %1745 = vmatprep.subr.mxu0 0.0
        %1746 = vmatpush2.xpose.msra.mxu0 0.0
        %1747 = vmatprep.mubr.f32.mxu0 0.0
        %1748 = vmatmul.mubr.f32.gmra.mxu0 %v1675
        %v1749 = vpop.f32.mrf.mxu0
        %v1750 = vadd.f32 0.0, %v1749
        %v1751 = vpop.f32.mrf.mxu0
        %1752 = vmatprep.mubr.f32.mxu0 0.0
        %1753 = vmatmul.mubr.f32.gmra.mxu0 %v1678
        %v1754 = vpop.f32.mrf.mxu0
        %v1755 = vadd.f32 0.0, %v1754
        %v1756 = vpop.f32.mrf.mxu0
        %1757 = vdwg.mxu0
        %1758 = vst.msk [vmem:[#allocation5 + $0x20] sm:$0xff] %vm1108, %v1750
        %1759 = vst.msk [vmem:[#allocation5 + $0x28] sm:$0xff] %vm1108, %v1755
        %v1760 = vld [vmem:[#allocation4 + $0x30] sm:$0xff]
        %v1761 = vld [vmem:[#allocation4 + $0x38] sm:$0xff]
        %v1762 = vld [vmem:[#allocation2 + $0x30] sm:$0xff]
        %v1763 = vld [vmem:[#allocation2 + $0x38] sm:$0xff]
        %v1764 = vld [vmem:[#allocation3 + $0x30] sm:$0xff]
        %v1765 = vld [vmem:[#allocation3 + $0x38] sm:$0xff]
        %1766 = vxpose.xlu0.b32.start [1/16] %v1760, 128
        %1767 = vxpose.xlu0.b32.cont [2/16] %v1761, 128
        %1768 = vxpose.xlu0.b32.cont [3/16] 0.0, 128
        %1769 = vxpose.xlu0.b32.cont [4/16] 0.0, 128
        %1770 = vxpose.xlu0.b32.cont [5/16] 0.0, 128
        %1771 = vxpose.xlu0.b32.cont [6/16] 0.0, 128
        %1772 = vxpose.xlu0.b32.cont [7/16] 0.0, 128
        %1773 = vxpose.xlu0.b32.cont [8/16] 0.0, 128
        %1774 = vxpose.xlu0.b32.cont [9/16] 0.0, 128
        %1775 = vxpose.xlu0.b32.cont [10/16] 0.0, 128
        %1776 = vxpose.xlu0.b32.cont [11/16] 0.0, 128
        %1777 = vxpose.xlu0.b32.cont [12/16] 0.0, 128
        %1778 = vxpose.xlu0.b32.cont [13/16] 0.0, 128
        %1779 = vxpose.xlu0.b32.cont [14/16] 0.0, 128
        %1780 = vxpose.xlu0.b32.cont [15/16] 0.0, 128
        %1781 = vxpose.xlu0.b32.end [16/16] 0.0, 128
        %v1782 = vpop.trf.xlu0
        %v1783 = vpop.trf.xlu0
        %v1784 = vpop.trf.xlu0
        %v1785 = vpop.trf.xlu0
        %v1786 = vpop.trf.xlu0
        %v1787 = vpop.trf.xlu0
        %v1788 = vpop.trf.xlu0
        %v1789 = vpop.trf.xlu0
        %v1790 = vpop.trf.xlu0
        %v1791 = vpop.trf.xlu0
        %v1792 = vpop.trf.xlu0
        %v1793 = vpop.trf.xlu0
        %v1794 = vpop.trf.xlu0
        %v1795 = vpop.trf.xlu0
        %v1796 = vpop.trf.xlu0
        %v1797 = vpop.trf.xlu0
        %v1799 = vsel %vm1155, %v1782, 0
        %1801 = vmatprep.subr.mxu0 0.0
        %1802 = vmatpush1.msra.mxu0 0.0
        %1803 = vmatprep.subr.mxu0 0.0
        %1804 = vmatpush1.msra.mxu0 0.0
        %1805 = vmatprep.subr.mxu0 0.0
        %1806 = vmatpush1.msra.mxu0 0.0
        %1807 = vmatprep.subr.mxu0 0.0
        %1808 = vmatpush1.msra.mxu0 0.0
        %1809 = vmatprep.subr.mxu0 0.0
        %1810 = vmatpush1.msra.mxu0 0.0
        %1811 = vmatprep.subr.mxu0 0.0
        %1812 = vmatpush1.msra.mxu0 0.0
        %1813 = vmatprep.subr.mxu0 0.0
        %1814 = vmatpush1.msra.mxu0 0.0
        %1815 = vmatprep.subr.mxu0 0.0
        %1816 = vmatpush1.msra.mxu0 0.0
        %1817 = vmatprep.subr.mxu0 0.0
        %1818 = vmatpush1.msra.mxu0 0.0
        %1819 = vmatprep.subr.mxu0 0.0
        %1820 = vmatpush1.msra.mxu0 0.0
        %1821 = vmatprep.subr.mxu0 0.0
        %1822 = vmatpush1.msra.mxu0 0.0
        %1823 = vmatprep.subr.mxu0 0.0
        %1824 = vmatpush1.msra.mxu0 0.0
        %1825 = vmatprep.subr.mxu0 0.0
        %1826 = vmatpush1.msra.mxu0 0.0
        %1827 = vmatprep.subr.mxu0 0.0
        %1828 = vmatpush1.msra.mxu0 0.0
        %1829 = vmatprep.subr.mxu0 0.0
        %1830 = vmatpush1.msra.mxu0 %v1763
        %1831 = vmatprep.subr.mxu0 0.0
        %1832 = vmatpush1.msra.mxu0 %v1762
        %1833 = vmatprep.subr.mxu0 0.0
        %1834 = vmatpush2.msra.mxu0 0.0
        %1835 = vmatprep.subr.mxu0 0.0
        %1836 = vmatpush2.msra.mxu0 0.0
        %1837 = vmatprep.subr.mxu0 0.0
        %1838 = vmatpush2.msra.mxu0 0.0
        %1839 = vmatprep.subr.mxu0 0.0
        %1840 = vmatpush2.msra.mxu0 0.0
        %1841 = vmatprep.subr.mxu0 0.0
        %1842 = vmatpush2.msra.mxu0 0.0
        %1843 = vmatprep.subr.mxu0 0.0
        %1844 = vmatpush2.msra.mxu0 0.0
        %1845 = vmatprep.subr.mxu0 0.0
        %1846 = vmatpush2.msra.mxu0 0.0
        %1847 = vmatprep.subr.mxu0 0.0
        %1848 = vmatpush2.msra.mxu0 0.0
        %1849 = vmatprep.subr.mxu0 0.0
        %1850 = vmatpush2.msra.mxu0 0.0
        %1851 = vmatprep.subr.mxu0 0.0
        %1852 = vmatpush2.msra.mxu0 0.0
        %1853 = vmatprep.subr.mxu0 0.0
        %1854 = vmatpush2.msra.mxu0 0.0
        %1855 = vmatprep.subr.mxu0 0.0
        %1856 = vmatpush2.msra.mxu0 0.0
        %1857 = vmatprep.subr.mxu0 0.0
        %1858 = vmatpush2.msra.mxu0 0.0
        %1859 = vmatprep.subr.mxu0 0.0
        %1860 = vmatpush2.msra.mxu0 0.0
        %1861 = vmatprep.subr.mxu0 0.0
        %1862 = vmatpush2.msra.mxu0 0.0
        %1863 = vmatprep.subr.mxu0 0.0
        %1864 = vmatpush2.msra.mxu0 0.0
        %1865 = vmatprep.mubr.f32.mxu0 0.0
        %1866 = vmatmul.mubr.f32.gmra.mxu0 %v1799
        %v1867 = vpop.f32.mrf.mxu0
        %v1868 = vadd.f32 0.0, %v1867
        %v1869 = vpop.f32.mrf.mxu0
        %1870 = vdwg.mxu0
        %v1871 = vld [vmem:[%s511] sm:$0x3]
        %vm1872 = vnez %v1871
        %v1873 = vsel %vm1872, 16843009, 0
        %v1874 = vunpack.c.0.s8 %v1873
        %vm1875 = vcmp.ne.s32.totalorder %v1874, 0
        %v1876 = vsel %vm1875, -1e+09, %v1868
        %v1877 = vsel %vm1108, %v1876, -inf
        %1878 = vmax.xlane.f32.xlu0 %v1877
        %v1879 = vpop.xlane.xlu0 %1878
        %v1880 = vsub.f32 %v1876, %v1879
        %v1881 = vmul.f32 %v1880, 1.442695
        %v1882 = vpow.pop %v1881
        %v1883 = vsel %vm1108, %v1882, 0.0
        %1884 = vadd.xlane.f32.xlu0 %v1883
        %v1885 = vpop.xlane.xlu0 %1884
        %v1886 = vrcp.pop %v1885
        %v1887 = vmul.f32 %v1882, %v1886
        %v1889 = vsel %vm1108, %v1764, 0
        %v1892 = vsel %vm1108, %v1765, 0
        %v1895 = vsel %vm1108, %v1887, 0
        %1897 = vmatprep.subr.mxu0 0.0
        %1898 = vmatpush1.xpose.msra.mxu0 0.0
        %1899 = vmatprep.subr.mxu0 0.0
        %1900 = vmatpush1.xpose.msra.mxu0 0.0
        %1901 = vmatprep.subr.mxu0 0.0
        %1902 = vmatpush1.xpose.msra.mxu0 0.0
        %1903 = vmatprep.subr.mxu0 0.0
        %1904 = vmatpush1.xpose.msra.mxu0 0.0
        %1905 = vmatprep.subr.mxu0 0.0
        %1906 = vmatpush1.xpose.msra.mxu0 0.0
        %1907 = vmatprep.subr.mxu0 0.0
        %1908 = vmatpush1.xpose.msra.mxu0 0.0
        %1909 = vmatprep.subr.mxu0 0.0
        %1910 = vmatpush1.xpose.msra.mxu0 0.0
        %1911 = vmatprep.subr.mxu0 0.0
        %1912 = vmatpush1.xpose.msra.mxu0 0.0
        %1913 = vmatprep.subr.mxu0 0.0
        %1914 = vmatpush1.xpose.msra.mxu0 0.0
        %1915 = vmatprep.subr.mxu0 0.0
        %1916 = vmatpush1.xpose.msra.mxu0 0.0
        %1917 = vmatprep.subr.mxu0 0.0
        %1918 = vmatpush1.xpose.msra.mxu0 0.0
        %1919 = vmatprep.subr.mxu0 0.0
        %1920 = vmatpush1.xpose.msra.mxu0 0.0
        %1921 = vmatprep.subr.mxu0 0.0
        %1922 = vmatpush1.xpose.msra.mxu0 0.0
        %1923 = vmatprep.subr.mxu0 0.0
        %1924 = vmatpush1.xpose.msra.mxu0 0.0
        %1925 = vmatprep.subr.mxu0 0.0
        %1926 = vmatpush1.xpose.msra.mxu0 0.0
        %1927 = vmatprep.subr.mxu0 0.0
        %1928 = vmatpush1.xpose.msra.mxu0 %v1895
        %1929 = vmatprep.subr.mxu0 0.0
        %1930 = vmatpush2.xpose.msra.mxu0 0.0
        %1931 = vmatprep.subr.mxu0 0.0
        %1932 = vmatpush2.xpose.msra.mxu0 0.0
        %1933 = vmatprep.subr.mxu0 0.0
        %1934 = vmatpush2.xpose.msra.mxu0 0.0
        %1935 = vmatprep.subr.mxu0 0.0
        %1936 = vmatpush2.xpose.msra.mxu0 0.0
        %1937 = vmatprep.subr.mxu0 0.0
        %1938 = vmatpush2.xpose.msra.mxu0 0.0
        %1939 = vmatprep.subr.mxu0 0.0
        %1940 = vmatpush2.xpose.msra.mxu0 0.0
        %1941 = vmatprep.subr.mxu0 0.0
        %1942 = vmatpush2.xpose.msra.mxu0 0.0
        %1943 = vmatprep.subr.mxu0 0.0
        %1944 = vmatpush2.xpose.msra.mxu0 0.0
        %1945 = vmatprep.subr.mxu0 0.0
        %1946 = vmatpush2.xpose.msra.mxu0 0.0
        %1947 = vmatprep.subr.mxu0 0.0
        %1948 = vmatpush2.xpose.msra.mxu0 0.0
        %1949 = vmatprep.subr.mxu0 0.0
        %1950 = vmatpush2.xpose.msra.mxu0 0.0
        %1951 = vmatprep.subr.mxu0 0.0
        %1952 = vmatpush2.xpose.msra.mxu0 0.0
        %1953 = vmatprep.subr.mxu0 0.0
        %1954 = vmatpush2.xpose.msra.mxu0 0.0
        %1955 = vmatprep.subr.mxu0 0.0
        %1956 = vmatpush2.xpose.msra.mxu0 0.0
        %1957 = vmatprep.subr.mxu0 0.0
        %1958 = vmatpush2.xpose.msra.mxu0 0.0
        %1959 = vmatprep.subr.mxu0 0.0
        %1960 = vmatpush2.xpose.msra.mxu0 0.0
        %1961 = vmatprep.mubr.f32.mxu0 0.0
        %1962 = vmatmul.mubr.f32.gmra.mxu0 %v1889
        %v1963 = vpop.f32.mrf.mxu0
        %v1964 = vadd.f32 0.0, %v1963
        %v1965 = vpop.f32.mrf.mxu0
        %1966 = vmatprep.mubr.f32.mxu0 0.0
        %1967 = vmatmul.mubr.f32.gmra.mxu0 %v1892
        %v1968 = vpop.f32.mrf.mxu0
        %v1969 = vadd.f32 0.0, %v1968
        %v1970 = vpop.f32.mrf.mxu0
        %1971 = vdwg.mxu0
        %1972 = vst.msk [vmem:[#allocation5 + $0x30] sm:$0xff] %vm1108, %v1964
        %1973 = vst.msk [vmem:[#allocation5 + $0x38] sm:$0xff] %vm1108, %v1969
        %v1974 = vld [vmem:[#allocation5] sm:$0xff]
        %v1975 = vld [vmem:[#allocation5 + $0x8] sm:$0xff]
        %v1976 = vld [vmem:[#allocation5 + $0x10] sm:$0xff]
        %v1977 = vld [vmem:[#allocation5 + $0x18] sm:$0xff]
        %v1978 = vld [vmem:[#allocation5 + $0x20] sm:$0xff]
        %v1979 = vld [vmem:[#allocation5 + $0x28] sm:$0xff]
        %v1980 = vld [vmem:[#allocation5 + $0x30] sm:$0xff]
        %v1981 = vld [vmem:[#allocation5 + $0x38] sm:$0xff]
        %v1982 = vld [vmem:[%s9] sm:$0xff]
        %v1983 = vld [vmem:[%s9 + $0x8] sm:$0xff]
        %v1984 = vld [vmem:[%s9 + $0x10] sm:$0xff]
        %v1985 = vld [vmem:[%s9 + $0x18] sm:$0xff]
        %v1986 = vld [vmem:[%s9 + $0x20] sm:$0xff]
        %v1987 = vld [vmem:[%s9 + $0x28] sm:$0xff]
        %v1988 = vld [vmem:[%s9 + $0x30] sm:$0xff]
        %v1989 = vld [vmem:[%s9 + $0x38] sm:$0xff]
        %v1990 = vld [vmem:[%s10] sm:$0x1]
        %v1992 = vlaneseq
        %v1993 = vshrl.u32 %v1992, 7
        %v1994 = vsub.s32 0, %v1993
        %v1995 = vrot.slane %v1990, %v1994
        %1997 = vxpose.xlu0.b32.start [1/16] %v1974, 128
        %1998 = vxpose.xlu0.b32.cont [2/16] %v1975, 128
        %1999 = vxpose.xlu0.b32.cont [3/16] %v1976, 128
        %2000 = vxpose.xlu0.b32.cont [4/16] %v1977, 128
        %2001 = vxpose.xlu0.b32.cont [5/16] %v1978, 128
        %2002 = vxpose.xlu0.b32.cont [6/16] %v1979, 128
        %2003 = vxpose.xlu0.b32.cont [7/16] %v1980, 128
        %2004 = vxpose.xlu0.b32.cont [8/16] %v1981, 128
        %2005 = vxpose.xlu0.b32.cont [9/16] 0.0, 128
        %2006 = vxpose.xlu0.b32.cont [10/16] 0.0, 128
        %2007 = vxpose.xlu0.b32.cont [11/16] 0.0, 128
        %2008 = vxpose.xlu0.b32.cont [12/16] 0.0, 128
        %2009 = vxpose.xlu0.b32.cont [13/16] 0.0, 128
        %2010 = vxpose.xlu0.b32.cont [14/16] 0.0, 128
        %2011 = vxpose.xlu0.b32.cont [15/16] 0.0, 128
        %2012 = vxpose.xlu0.b32.end [16/16] 0.0, 128
        %v2013 = vpop.trf.xlu0
        %v2014 = vpop.trf.xlu0
        %v2015 = vpop.trf.xlu0
        %v2016 = vpop.trf.xlu0
        %v2017 = vpop.trf.xlu0
        %v2018 = vpop.trf.xlu0
        %v2019 = vpop.trf.xlu0
        %v2020 = vpop.trf.xlu0
        %v2021 = vpop.trf.xlu0
        %v2022 = vpop.trf.xlu0
        %v2023 = vpop.trf.xlu0
        %v2024 = vpop.trf.xlu0
        %v2025 = vpop.trf.xlu0
        %v2026 = vpop.trf.xlu0
        %v2027 = vpop.trf.xlu0
        %v2028 = vpop.trf.xlu0
        %vm2029 = vcmask 523264
        %v2031 = vsel %vm2029, %v2013, 0
        %2033 = vmatprep.subr.mxu0 0.0
        %2034 = vmatpush1.msra.mxu0 0.0
        %2035 = vmatprep.subr.mxu0 0.0
        %2036 = vmatpush1.msra.mxu0 0.0
        %2037 = vmatprep.subr.mxu0 0.0
        %2038 = vmatpush1.msra.mxu0 0.0
        %2039 = vmatprep.subr.mxu0 0.0
        %2040 = vmatpush1.msra.mxu0 0.0
        %2041 = vmatprep.subr.mxu0 0.0
        %2042 = vmatpush1.msra.mxu0 0.0
        %2043 = vmatprep.subr.mxu0 0.0
        %2044 = vmatpush1.msra.mxu0 0.0
        %2045 = vmatprep.subr.mxu0 0.0
        %2046 = vmatpush1.msra.mxu0 0.0
        %2047 = vmatprep.subr.mxu0 0.0
        %2048 = vmatpush1.msra.mxu0 0.0
        %2049 = vmatprep.subr.mxu0 0.0
        %2050 = vmatpush1.msra.mxu0 %v1989
        %2051 = vmatprep.subr.mxu0 0.0
        %2052 = vmatpush1.msra.mxu0 %v1988
        %2053 = vmatprep.subr.mxu0 0.0
        %2054 = vmatpush1.msra.mxu0 %v1987
        %2055 = vmatprep.subr.mxu0 0.0
        %2056 = vmatpush1.msra.mxu0 %v1986
        %2057 = vmatprep.subr.mxu0 0.0
        %2058 = vmatpush1.msra.mxu0 %v1985
        %2059 = vmatprep.subr.mxu0 0.0
        %2060 = vmatpush1.msra.mxu0 %v1984
        %2061 = vmatprep.subr.mxu0 0.0
        %2062 = vmatpush1.msra.mxu0 %v1983
        %2063 = vmatprep.subr.mxu0 0.0
        %2064 = vmatpush1.msra.mxu0 %v1982
        %2065 = vmatprep.subr.mxu0 0.0
        %2066 = vmatpush2.msra.mxu0 0.0
        %2067 = vmatprep.subr.mxu0 0.0
        %2068 = vmatpush2.msra.mxu0 0.0
        %2069 = vmatprep.subr.mxu0 0.0
        %2070 = vmatpush2.msra.mxu0 0.0
        %2071 = vmatprep.subr.mxu0 0.0
        %2072 = vmatpush2.msra.mxu0 0.0
        %2073 = vmatprep.subr.mxu0 0.0
        %2074 = vmatpush2.msra.mxu0 0.0
        %2075 = vmatprep.subr.mxu0 0.0
        %2076 = vmatpush2.msra.mxu0 0.0
        %2077 = vmatprep.subr.mxu0 0.0
        %2078 = vmatpush2.msra.mxu0 0.0
        %2079 = vmatprep.subr.mxu0 0.0
        %2080 = vmatpush2.msra.mxu0 0.0
        %2081 = vmatprep.subr.mxu0 0.0
        %2082 = vmatpush2.msra.mxu0 0.0
        %2083 = vmatprep.subr.mxu0 0.0
        %2084 = vmatpush2.msra.mxu0 0.0
        %2085 = vmatprep.subr.mxu0 0.0
        %2086 = vmatpush2.msra.mxu0 0.0
        %2087 = vmatprep.subr.mxu0 0.0
        %2088 = vmatpush2.msra.mxu0 0.0
        %2089 = vmatprep.subr.mxu0 0.0
        %2090 = vmatpush2.msra.mxu0 0.0
        %2091 = vmatprep.subr.mxu0 0.0
        %2092 = vmatpush2.msra.mxu0 0.0
        %2093 = vmatprep.subr.mxu0 0.0
        %2094 = vmatpush2.msra.mxu0 0.0
        %2095 = vmatprep.subr.mxu0 0.0
        %2096 = vmatpush2.msra.mxu0 0.0
        %2097 = vmatprep.mubr.f32.mxu0 0.0
        %2098 = vmatmul.mubr.f32.gmra.mxu0 %v2031
        %v2099 = vpop.f32.mrf.mxu0
        %v2100 = vadd.f32 %v1995, %v2099
        %v2101 = vpop.f32.mrf.mxu0
        %2102 = vdwg.mxu0
        %v2103 = vsel %vm970, %v2100, 0.0
        %2104 = vadd.xlane.f32.xlu0 %v2103
        %v2105 = vpop.xlane.xlu0 %2104
        %v2106 = vrcp.pop 32.0
        %v2107 = vmul.f32 %v2105, %v2106
        %v2108 = vsub.f32 %v2100, %v2107
        %v2109 = vmul.f32 %v2108, %v2108
        %v2110 = vsel %vm970, %v2109, 0.0
        %2111 = vadd.xlane.f32.xlu0 %v2110
        %v2112 = vpop.xlane.xlu0 %2111
        %v2113 = vmul.f32 %v2112, %v2106
        %v2114 = vadd.f32 %v2113, 1e-05
        %v2115 = vrsqrt.pop %v2114
        %v2116 = vmul.f32 %v2108, %v2115
        %v2117 = vld [vmem:[%s11] sm:$0x1]
        %v2119 = vlaneseq
        %v2120 = vshrl.u32 %v2119, 7
        %v2121 = vsub.s32 0, %v2120
        %v2122 = vrot.slane %v2117, %v2121
        %v2124 = vmul.f32 %v2116, %v2122
        %v2125 = vld [vmem:[%s12] sm:$0x1]
        %v2127 = vlaneseq
        %v2128 = vshrl.u32 %v2127, 7
        %v2129 = vsub.s32 0, %v2128
        %v2130 = vrot.slane %v2125, %v2129
        %v2132 = vadd.f32 %v2124, %v2130
        %2133 = vst.msk [vmem:[%s491] sm:$0xff] %vm970, %v2132
        %s2134 = sand.u32 %s341, 1
        %s2135 = scalar_lea.sflag [#allocation7], %s2134
        %s2136 = sand.u32 %s341, 1
        %s2137 = smul.addr %s2136, 8
        %s2138 = scalar_lea.vmem [#allocation6], %s2137
        // Predicated region
        $region77: #{tpu_custom_call.1} parent=71 // pred_check
          %p2139 = pneg %p351
        $region78: #{tpu_custom_call.1} parent=71 // pred_check_branch
          %2141 = sbr.rel (%p2139) target = $region80
        $region79: #{tpu_custom_call.1} parent=71 // pred_region
          %s2143 = ssub.s32 128, 128
          %2144 = vsyncadd %s2135, %s2143
          %s2145 = sadd.s32 %s32, %s31
          %s2146 = smul.addr %s2145, 128
          %s2147 = scalar_lea.hbm %s13, %s2146
          %s2149 = sshll.u32 %s2138, 4
          %s2150 = int_to_ptr.vmem [resolvable:$true] %s2149
          %2152 = dma.vmem_to_hbm [thread:$0]  %s2150, 128, %s2147, %s2135
        $region80: #{tpu_custom_call.1} parent=71 // pred_fallthru
          _
      $region72: #{tpu_custom_call.1} parent=5 // pred_fallthru
        _
      %p2153 = scmp.le.s32.totalorder 2, %s22
      // Predicated region
      $region81: #{tpu_custom_call.1} parent=5 // pred_check
        %p2154 = pneg %p2153
      $region82: #{tpu_custom_call.1} parent=5 // pred_check_branch
        %2156 = sbr.rel (%p2154) target = $region84
      $region83: #{tpu_custom_call.1} parent=5 // pred_region
        %s2157 = ssub.s32 %s22, 2
        // Predicated region
        $region85: #{tpu_custom_call.1} parent=83 // pred_check
          %p2158 = pneg %p357
        $region86: #{tpu_custom_call.1} parent=83 // pred_check_branch
          %2160 = sbr.rel (%p2158) target = $region88
        $region87: #{tpu_custom_call.1} parent=83 // pred_region
          %s2161 = sand.u32 %s342, 1
          %s2162 = scalar_lea.sflag [#allocation7], %s2161
          %s2163 = sand.u32 %s342, 1
          %s2164 = smul.addr %s2163, 8
          %s2165 = scalar_lea.vmem [#allocation6], %s2164
          %2166 = dma.done %s2162, 128
        $region88: #{tpu_custom_call.1} parent=83 // pred_fallthru
          _
      $region84: #{tpu_custom_call.1} parent=5 // pred_fallthru
        _
    $region6: #{tpu_custom_call.1} parent=1 // loop_footer
      %s26 = sadd.s32 1, %s22
    $region7: #{tpu_custom_call.1} parent=1 // loop_footer_branch
      %21 = sbr.rel target = $region3
    $region8: #{tpu_custom_call.1} parent=1 // loop_exit
      _
    %2167 = vsyncpa [#allocation7], 1
    %s2168 = scalar_lea.sflag [#allocation7], 1
    %2169 = vsyncpa %s2168, 1

</llo_original>
